<compile_context>
chip_gen: v6e
topology: v6e:2x2x1
jax: 0.10.0
libtpu: 0.0.40
codegen_flags: <defaults>
</compile_context>

<pallas_src>
import functools
import math

import jax
import jax.numpy as jnp
import numpy as np
from jax import lax
from jax.experimental import pallas as pl
from jax.experimental.pallas import tpu as pltpu


# -----------------------------------------------------------------------------
# Small helpers: hardware queries, tiling heuristics, spec builders
# -----------------------------------------------------------------------------
def _round_up(x, m):
    return ((x + m - 1) // m) * m


_TPU_VMEM_CAP = None


def _vmem_capacity_bytes():
    """Physical VMEM capacity (defensive: falls back to 64 MiB)."""
    global _TPU_VMEM_CAP
    if _TPU_VMEM_CAP is None:
        cap = 64 << 20
        try:
            info = pltpu.get_tpu_info()
            c = int(getattr(info, "vmem_capacity_bytes"))
            if c > 0:
                cap = c
        except Exception:
            pass
        _TPU_VMEM_CAP = cap
    return _TPU_VMEM_CAP


def _vmem_limit_bytes():
    return int(_vmem_capacity_bytes() * 0.85)


_SINGLE_BUF = ("unprobed",)


def _single_buffer_mode():
    """Return pl.Buffered(1) if this JAX supports pipeline_mode, else None."""
    global _SINGLE_BUF
    if _SINGLE_BUF != ("unprobed",):
        return _SINGLE_BUF
    mode = None
    buffered = getattr(pl, "Buffered", None)
    if buffered is not None:
        try:
            def _probe(x_ref, o_ref):
                o_ref[...] = x_ref[...] * 2.0

            y = pl.pallas_call(
                _probe,
                out_shape=jax.ShapeDtypeStruct((16, 128), jnp.float32),
                grid=(2,),
                in_specs=[pl.BlockSpec((8, 128), lambda i: (0, 0),
                                       pipeline_mode=buffered(1))],
                out_specs=pl.BlockSpec((8, 128), lambda i: (i, 0)),
            )(jnp.ones((8, 128), jnp.float32))
            jax.block_until_ready(y)
            mode = buffered(1)
        except Exception:
            mode = None
    _SINGLE_BUF = mode
    return mode


def _const_spec(shape, pmode):
    """BlockSpec for a grid-invariant operand (optionally single-buffered)."""
    ndim = len(shape)
    imap = lambda *_: (0,) * ndim
    if pmode is None:
        return pl.BlockSpec(shape, imap)
    return pl.BlockSpec(shape, imap, pipeline_mode=pmode)


def _pick_time_chunk(T, Bp, Ep, weight_buffers):
    """Largest time chunk tc | T whose full VMEM footprint fits the budget."""
    budget = int(_vmem_capacity_bytes() * 0.55)
    # weights: wih_f + wih_b (E x 4E each) + block-diag whh (2E x 8E)
    const_b = 4 * weight_buffers * (2 * Ep * 4 * Ep + 2 * Ep * 8 * Ep)
    const_b += 4 * weight_buffers * (2 * 4 * Ep + 2 * 2 * Bp * Ep)  # biases, h0, c0
    const_b += 4 * (2 * 2 * Bp * Ep + 2 * Bp * 2 * Ep)              # hT/cT, h/c scratch
    # per timestep: xf/xb/yf/yb blocks (double-buffered) + xg scratch (both dirs)
    per_step = 4 * Bp * Ep * (4 * 2) + 4 * Bp * 4 * Ep * 2
    best = 1
    for tc in range(1, T + 1):
        if T % tc == 0 and const_b + tc * per_step <= budget:
            best = tc
    return best


def _pick_row_tile(R, Ep, max_rows=1024):
    """Largest row tile (<= max_rows) dividing R, %8-aligned, within budget."""
    budget = _vmem_capacity_bytes() // 3
    divisors = [d for d in range(1, R + 1)
                if R % d == 0 and (d % 8 == 0 or d == R)]
    fitting = [d for d in divisors if d * Ep * 4 * 12 <= budget]
    if not fitting:
        return min(divisors)
    capped = [d for d in fitting if d <= max_rows]
    return max(capped) if capped else min(fitting)


# -----------------------------------------------------------------------------
# Kernel 1: fused bidirectional LSTM, grid over time chunks.
# Activations are time-major flattened rows: row index = t * Bp + b.
# -----------------------------------------------------------------------------
def _bilstm_chunk_kernel(xf_ref, xb_ref,
                         wih_f_ref, wih_b_ref, whh_bd_ref,
                         bias_f_ref, bias_b_ref,
                         h0_ref, c0_ref,
                         yf_ref, yb_ref, hT_ref, cT_ref,
                         xgf_sc, xgb_sc, h_sc, c_sc,
                         *, tc, batch, unroll):
    c_idx = pl.program_id(0)
    nc = pl.num_programs(0)
    B = batch
    E = h0_ref.shape[-1]

    @pl.when(c_idx == 0)
    def _():
        # carried state layout: (B, 2E) = [fwd | bwd]
        h_sc[:, :E] = h0_ref[0]
        h_sc[:, E:] = h0_ref[1]
        c_sc[:, :E] = c0_ref[0]
        c_sc[:, E:] = c0_ref[1]

    # ---- Stage 1: chunk-wide input projections (h-independent, large-M).
    # Weights / bias are pre-scaled (0.5 on i/f/o gate columns) so one tanh
    # per direction yields all four gates below.
    xgf_sc[...] = (jnp.dot(xf_ref[...], wih_f_ref[...],
                           preferred_element_type=jnp.float32)
                   + bias_f_ref[...])
    xgb_sc[...] = (jnp.dot(xb_ref[...], wih_b_ref[...],
                           preferred_element_type=jnp.float32)
                   + bias_b_ref[...])

    # Block-diagonal recurrent weight: one MXU dot per step covers both dirs.
    # TODO(synk): could keep this resident in MXU staging registers via
    #             pltpu.matmul_push_rhs/acc_lhs for the whole chunk.
    whh_bd = whh_bd_ref[...]                  # (2E, 8E)

    h_cat0 = h_sc[...]                        # (B, 2E)
    c_f0 = c_sc[:, :E]
    c_b0 = c_sc[:, E:]

    def step(s, carry):
        h_cat, c_f, c_b = carry
        row_f = pl.multiple_of(s * B, B)                # fwd walks chunk forward
        row_b = pl.multiple_of((tc - 1 - s) * B, B)     # bwd walks chunk reversed

        rec = jnp.dot(h_cat, whh_bd, preferred_element_type=jnp.float32)
        g_f = rec[:, :4 * E] + xgf_sc[pl.ds(row_f, B), :]
        g_b = rec[:, 4 * E:] + xgb_sc[pl.ds(row_b, B), :]

        t_f = jnp.tanh(g_f)          # single full-width EUP op per direction
        t_b = jnp.tanh(g_b)
        # sigmoid(z) == 0.5 * tanh(z / 2) + 0.5  (the /2 is folded into weights)
        i_f = t_f[:, 0 * E:1 * E] * 0.5 + 0.5
        f_f = t_f[:, 1 * E:2 * E] * 0.5 + 0.5
        gg_f = t_f[:, 2 * E:3 * E]
        o_f = t_f[:, 3 * E:4 * E] * 0.5 + 0.5
        i_b = t_b[:, 0 * E:1 * E] * 0.5 + 0.5
        f_b = t_b[:, 1 * E:2 * E] * 0.5 + 0.5
        gg_b = t_b[:, 2 * E:3 * E]
        o_b = t_b[:, 3 * E:4 * E] * 0.5 + 0.5

        c_f = f_f * c_f + i_f * gg_f
        c_b = f_b * c_b + i_b * gg_b
        h_f = o_f * jnp.tanh(c_f)
        h_b = o_b * jnp.tanh(c_b)

        yf_ref[pl.ds(row_f, B), :] = h_f
        yb_ref[pl.ds(row_b, B), :] = h_b
        return (jnp.concatenate([h_f, h_b], axis=-1), c_f, c_b)

    h_cat, c_f, c_b = lax.fori_loop(0, tc, step, (h_cat0, c_f0, c_b0),
                                    unroll=unroll)

    h_sc[...] = h_cat
    c_sc[:, :E] = c_f
    c_sc[:, E:] = c_b

    # Final states written exactly once (output block is grid-resident).
    @pl.when(c_idx == nc - 1)
    def _():
        hT_ref[0] = h_sc[:, :E]
        hT_ref[1] = h_sc[:, E:]
        cT_ref[0] = c_sc[:, :E]
        cT_ref[1] = c_sc[:, E:]


def bilstm_layer(x2d, lw, h0, c0, T, Bp, Ep):
    """x2d: (T*Bp, Ep) time-major flattened.  Returns yf, yb, hT, cT."""
    pmode = _single_buffer_mode()
    wbuf = 1 if pmode is not None else 2
    tc = _pick_time_chunk(T, Bp, Ep, wbuf)
    nc = T // tc
    rows = tc * Bp
    unroll = max(1, math.gcd(tc, 8))
    kernel = functools.partial(_bilstm_chunk_kernel, tc=tc, batch=Bp,
                               unroll=unroll)

    fwd_map = lambda c: (c, 0)
    bwd_map = lambda c: (nc - 1 - c, 0)      # time reversal via index_map

    yf, yb, hT, cT = pl.pallas_call(
        kernel,
        out_shape=(jax.ShapeDtypeStruct((T * Bp, Ep), jnp.float32),
                   jax.ShapeDtypeStruct((T * Bp, Ep), jnp.float32),
                   jax.ShapeDtypeStruct((2, Bp, Ep), jnp.float32),
                   jax.ShapeDtypeStruct((2, Bp, Ep), jnp.float32)),
        grid_spec=pltpu.PrefetchScalarGridSpec(
            num_scalar_prefetch=0,
            grid=(nc,),
            in_specs=[
                pl.BlockSpec((rows, Ep), fwd_map),          # x (forward chunks)
                pl.BlockSpec((rows, Ep), bwd_map),          # x (reversed chunks)
                _const_spec((Ep, 4 * Ep), pmode),           # W_ih^T fwd (prescaled)
                _const_spec((Ep, 4 * Ep), pmode),           # W_ih^T bwd (prescaled)
                _const_spec((2 * Ep, 8 * Ep), pmode),       # block-diag W_hh^T
                _const_spec((1, 4 * Ep), pmode),            # bias fwd
                _const_spec((1, 4 * Ep), pmode),            # bias bwd
                _const_spec((2, Bp, Ep), pmode),            # h0
                _const_spec((2, Bp, Ep), pmode),            # c0
            ],
            out_specs=[
                pl.BlockSpec((rows, Ep), fwd_map),          # y fwd
                pl.BlockSpec((rows, Ep), bwd_map),          # y bwd (forward-time order)
                _const_spec((2, Bp, Ep), None),             # hT
                _const_spec((2, Bp, Ep), None),             # cT
            ],
            scratch_shapes=[
                pltpu.VMEM((rows, 4 * Ep), jnp.float32),    # fwd x-gates
                pltpu.VMEM((rows, 4 * Ep), jnp.float32),    # bwd x-gates
                pltpu.VMEM((Bp, 2 * Ep), jnp.float32),      # h carry [fwd|bwd]
                pltpu.VMEM((Bp, 2 * Ep), jnp.float32),      # c carry [fwd|bwd]
            ]),
        compiler_params=pltpu.CompilerParams(
            dimension_semantics=("arbitrary",),
            vmem_limit_bytes=_vmem_limit_bytes()),
    )(x2d, x2d,
      lw['wih_f'], lw['wih_b'], lw['whh_bd'],
      lw['b_f'], lw['b_b'], h0, c0)
    return yf, yb, hT, cT


# -----------------------------------------------------------------------------
# Kernel 2: fused direction-average + residual + LayerNorm (tiled over rows)
# -----------------------------------------------------------------------------
def _combine_ln_kernel(yf_ref, yb_ref, res_ref, g_ref, b_ref, o_ref, *, e_real):
    z = (yf_ref[...] + yb_ref[...]) * 0.5 + res_ref[...]
    inv_n = 1.0 / e_real                       # mean/var over the REAL features
    mean = jnp.sum(z, axis=-1, keepdims=True) * inv_n
    var = jnp.maximum(jnp.sum(z * z, axis=-1, keepdims=True) * inv_n
                      - mean * mean, 0.0)
    o_ref[...] = (z - mean) * lax.rsqrt(var + 1e-5) * g_ref[...] + b_ref[...]


def combine_layernorm(yf, yb, res, gamma, beta, e_real):
    R, Ep = yf.shape
    rt = _pick_row_tile(R, Ep)
    spec = pl.BlockSpec((rt, Ep), lambda i: (i, 0))
    vspec = pl.BlockSpec((1, Ep), lambda i: (0, 0))
    kernel = functools.partial(_combine_ln_kernel, e_real=float(e_real))
    return pl.pallas_call(
        kernel,
        out_shape=jax.ShapeDtypeStruct((R, Ep), jnp.float32),
        grid_spec=pltpu.PrefetchScalarGridSpec(
            num_scalar_prefetch=0, grid=(R // rt,),
            in_specs=[spec, spec, spec, vspec, vspec],
            out_specs=spec),
        compiler_params=pltpu.CompilerParams(
            dimension_semantics=("parallel",),
            vmem_limit_bytes=_vmem_limit_bytes()),
    )(yf, yb, res, gamma, beta)


# -----------------------------------------------------------------------------
# Kernel 3: direction average only (final layer output), tiled over rows
# -----------------------------------------------------------------------------
def _combine_avg_kernel(yf_ref, yb_ref, o_ref):
    o_ref[...] = (yf_ref[...] + yb_ref[...]) * 0.5


def combine_avg(yf, yb):
    R, Ep = yf.shape
    rt = _pick_row_tile(R, Ep)
    spec = pl.BlockSpec((rt, Ep), lambda i: (i, 0))
    return pl.pallas_call(
        _combine_avg_kernel,
        out_shape=jax.ShapeDtypeStruct((R, Ep), jnp.float32),
        grid_spec=pltpu.PrefetchScalarGridSpec(
            num_scalar_prefetch=0, grid=(R // rt,),
            in_specs=[spec, spec], out_specs=spec),
        compiler_params=pltpu.CompilerParams(
            dimension_semantics=("parallel",),
            vmem_limit_bytes=_vmem_limit_bytes()),
    )(yf, yb)


# -----------------------------------------------------------------------------
# Kernel 4: fused mean-over-direction + pooler Linear + Tanh
# -----------------------------------------------------------------------------
def _pooler_kernel(h_ref, wT_ref, b_ref, hid_ref, pool_ref):
    hm = (h_ref[0] + h_ref[1]) * 0.5
    hid_ref[...] = hm
    pool_ref[...] = jnp.tanh(
        jnp.dot(hm, wT_ref[...], preferred_element_type=jnp.float32)
        + b_ref[...])


def pooler(hT, wT, b):
    Bp, Ep = hT.shape[1], hT.shape[2]
    return pl.pallas_call(
        _pooler_kernel,
        out_shape=(jax.ShapeDtypeStruct((Bp, Ep), jnp.float32),
                   jax.ShapeDtypeStruct((Bp, Ep), jnp.float32)),
    )(hT, wT, b)


# -----------------------------------------------------------------------------
# Parameter padding / preparation (pure XLA glue, once per forward call).
# Padding is exact-zero preserving: padded feature columns stay exactly zero
# through the whole stack, so slicing back is bit-exact w.r.t. the real dims.
# -----------------------------------------------------------------------------
def _pad_gate_cols(w, E, Ep):
    """Pad each of the 4 gate blocks of the last dim from E to Ep."""
    if Ep == E:
        return w
    lead = w.shape[:-1]
    w4 = w.reshape(lead + (4, E))
    pad = [(0, 0)] * (len(lead) + 1) + [(0, Ep - E)]
    return jnp.pad(w4, pad).reshape(lead + (4 * Ep,))


def _pad_in_rows(w, E, Ep):
    if Ep == E:
        return w
    return jnp.pad(w, ((0, Ep - E),) + ((0, 0),) * (w.ndim - 1))


def _prepare_params(params, E, Ep):
    # i/f/o gate columns pre-scaled by 0.5 so the kernel only needs tanh.
    scale = jnp.concatenate([jnp.full((2 * Ep,), 0.5, jnp.float32),
                             jnp.ones((Ep,), jnp.float32),
                             jnp.full((Ep,), 0.5, jnp.float32)])

    def prep_dir(d):
        wih = _pad_gate_cols(_pad_in_rows(d['wihT'], E, Ep), E, Ep) * scale
        whh = _pad_gate_cols(_pad_in_rows(d['whhT'], E, Ep), E, Ep) * scale
        b = _pad_gate_cols(d['b'], E, Ep) * scale
        return wih, whh, b

    layers = []
    for layer in params['lstm']:
        wih_f, whh_f, b_f = prep_dir(layer['fwd'])
        wih_b, whh_b, b_b = prep_dir(layer['bwd'])
        zeros = jnp.zeros((Ep, 4 * Ep), jnp.float32)
        whh_bd = jnp.concatenate(
            [jnp.concatenate([whh_f, zeros], axis=1),
             jnp.concatenate([zeros, whh_b], axis=1)], axis=0)   # (2Ep, 8Ep)
        layers.append({'wih_f': wih_f, 'wih_b': wih_b, 'whh_bd': whh_bd,
                       'b_f': b_f, 'b_b': b_b})

    pad_vec = lambda v: jnp.pad(v, ((0, 0), (0, Ep - E))) if Ep != E else v
    lns = [{'gamma': pad_vec(ln['gamma']), 'beta': pad_vec(ln['beta'])}
           for ln in params['ln']]
    pool_wT = params['pooler']['wT']
    if Ep != E:
        pool_wT = jnp.pad(pool_wT, ((0, Ep - E), (0, Ep - E)))
    pool = {'wT': pool_wT, 'b': pad_vec(params['pooler']['b'])}
    return layers, lns, pool


# -----------------------------------------------------------------------------
# Encoder forward (glue in plain JAX, hot paths in Pallas)
# -----------------------------------------------------------------------------
def encoder_forward(params, inputs, hidden=None, cell_state=None):
    B, T, E = inputs.shape
    Bp = _round_up(max(B, 8), 8)      # sublane-aligned batch
    Ep = _round_up(E, 128)            # lane-dense feature dim
    if hidden is None:
        hidden = jnp.zeros((2, B, E), jnp.float32)
    if cell_state is None:
        cell_state = jnp.zeros((2, B, E), jnp.float32)

    layers, lns, pool = _prepare_params(params, E, Ep)

    # Single layout change: batch-major -> time-major flattened rows, padded.
    x = jnp.transpose(inputs, (1, 0, 2))
    x = jnp.pad(x, ((0, 0), (0, Bp - B), (0, Ep - E)))
    cur = x.reshape(T * Bp, Ep)
    h = jnp.pad(hidden, ((0, 0), (0, Bp - B), (0, Ep - E)))
    c = jnp.pad(cell_state, ((0, 0), (0, Bp - B), (0, Ep - E)))

    yf = yb = None
    for i, lw in enumerate(layers):
        if i > 0:
            ln = lns[i - 1]
            # fused: LN((y_f + y_b)/2 + residual)
            cur = combine_layernorm(yf, yb, cur, ln['gamma'], ln['beta'], E)
        yf, yb, h, c = bilstm_layer(cur, lw, h, c, T, Bp, Ep)

    out2d = combine_avg(yf, yb)                              # (T*Bp, Ep)
    outputs = out2d.reshape(T, Bp, Ep)[:, :B, :E]
    outputs = jnp.transpose(outputs, (1, 0, 2))

    hidden_mean_p, pooler_out_p = pooler(h, pool['wT'], pool['b'])
    hidden_mean = hidden_mean_p[:B, :E]
    pooler_out = pooler_out_p[:B, :E]
    return {'outputs': outputs,
            'pooler_outputs': pooler_out,
            'hidden': hidden_mean[None]}


# -----------------------------------------------------------------------------
# Pure-JAX reference (for correctness check only)
# -----------------------------------------------------------------------------
def _lstm_direction_ref(x, wihT, whhT, b, h0, c0):
    def step(carry, x_t):
        h, c = carry
        gates = x_t @ wihT + h @ whhT + b[0]
        i, f, g, o = jnp.split(gates, 4, axis=-1)
        i, f, o = jax.nn.sigmoid(i), jax.nn.sigmoid(f), jax.nn.sigmoid(o)
        g = jnp.tanh(g)
        c = f * c + i * g
        h = o * jnp.tanh(c)
        return (h, c), h
    (hT, cT), ys = lax.scan(step, (h0, c0), jnp.transpose(x, (1, 0, 2)))
    return jnp.transpose(ys, (1, 0, 2)), hT, cT


def encoder_forward_ref(params, inputs, hidden=None, cell_state=None):
    B, T, E = inputs.shape
    if hidden is None:
        hidden = jnp.zeros((2, B, E), jnp.float32)
    if cell_state is None:
        cell_state = jnp.zeros((2, B, E), jnp.float32)
    prev_inputs = None
    outputs = inputs
    for i, layer in enumerate(params['lstm']):
        if i > 0:
            ln = params['ln'][i - 1]
            z = inputs + prev_inputs
            mean = jnp.mean(z, axis=-1, keepdims=True)
            var = jnp.mean((z - mean) ** 2, axis=-1, keepdims=True)
            inputs = (z - mean) * lax.rsqrt(var + 1e-5) * ln['gamma'] \
                + ln['beta']
        y_f, h_f, c_f = _lstm_direction_ref(inputs, layer['fwd']['wihT'],
                                            layer['fwd']['whhT'],
                                            layer['fwd']['b'],
                                            hidden[0], cell_state[0])
        x_rev = jnp.flip(inputs, axis=1)
        y_b_rev, h_b, c_b = _lstm_direction_ref(x_rev, layer['bwd']['wihT'],
                                                layer['bwd']['whhT'],
                                                layer['bwd']['b'],
                                                hidden[1], cell_state[1])
        y_b = jnp.flip(y_b_rev, axis=1)
        outputs = (y_f + y_b) / 2.0
        hidden = jnp.stack([h_f, h_b], axis=0)
        cell_state = jnp.stack([c_f, c_b], axis=0)
        prev_inputs, inputs = inputs, outputs
    hidden_mean = (hidden[0] + hidden[1]) / 2.0
    pooler_out = jnp.tanh(hidden_mean @ params['pooler']['wT']
                          + params['pooler']['b'])
    return {'outputs': outputs, 'pooler_outputs': pooler_out,
            'hidden': hidden_mean[None]}


# -----------------------------------------------------------------------------
# Deterministic parameter init (shapes follow the torch module's __init__)
# -----------------------------------------------------------------------------
def init_params(key, num_hidden_layers, embed_dim):
    E = embed_dim
    scale = 1.0 / np.sqrt(E)
    params = {'lstm': [], 'ln': [], 'pooler': {}}
    for _ in range(num_hidden_layers):
        layer = {}
        for d in ('fwd', 'bwd'):
            key, k1, k2, k3, k4 = jax.random.split(key, 5)
            wih = jax.random.uniform(k1, (4 * E, E), jnp.float32, -scale, scale)
            whh = jax.random.uniform(k2, (4 * E, E), jnp.float32, -scale, scale)
            b_ih = jax.random.uniform(k3, (4 * E,), jnp.float32, -scale, scale)
            b_hh = jax.random.uniform(k4, (4 * E,), jnp.float32, -scale, scale)
            layer[d] = {'wihT': wih.T, 'whhT': whh.T,
                        'b': (b_ih + b_hh)[None, :]}
        params['lstm'].append(layer)
    for _ in range(num_hidden_layers - 1):
        params['ln'].append({'gamma': jnp.ones((1, E), jnp.float32),
                             'beta': jnp.zeros((1, E), jnp.float32)})
    key, k1, k2 = jax.random.split(key, 3)
    w = jax.random.uniform(k1, (E, E), jnp.float32, -scale, scale)
    b = jax.random.uniform(k2, (E,), jnp.float32, -scale, scale)
    params['pooler'] = {'wT': w.T, 'b': b[None, :]}
    return params


if __name__ == "__main__":
    B, T, E = 2, 8, 32
    NUM_LAYERS = 4

    key = jax.random.PRNGKey(0)
    key, kx, kp = jax.random.split(key, 3)
    x = jax.random.normal(kx, (B, T, E), jnp.float32)
    params = init_params(kp, NUM_LAYERS, E)

    out = encoder_forward(params, x)
    out = jax.block_until_ready(out)

    ref = encoder_forward_ref(params, x)
    np.testing.assert_allclose(np.asarray(out['outputs']),
                               np.asarray(ref['outputs']),
                               rtol=1e-2, atol=1e-2)
    np.testing.assert_allclose(np.asarray(out['pooler_outputs']),
                               np.asarray(ref['pooler_outputs']),
                               rtol=1e-2, atol=1e-2)
    np.testing.assert_allclose(np.asarray(out['hidden']),
                               np.asarray(ref['hidden']),
                               rtol=1e-2, atol=1e-2)

    assert out['outputs'].shape == (B, T, E)
    assert out['pooler_outputs'].shape == (B, E)
    assert out['hidden'].shape == (1, B, E)
    print("KERNEL_OK")
</pallas_src>

<mosaic_0001>
module attributes {stable_mosaic.version = 11 : i64} {
  func.func @_probe(%arg0: i32, %arg1: memref<8x128xf32, #tpu.memory_space<vmem>>, %arg2: memref<8x128xf32, #tpu.memory_space<vmem>>) attributes {dimension_semantics = [#tpu.dimension_semantics<arbitrary>], iteration_bounds = array<i64: 2>, scalar_prefetch = 0 : i64, scratch_operands = 0 : i64, tpu.core_type = #tpu.core_type<tc>, window_params = [{pipeline_mode = #tpu.pipeline_mode<synchronous>, transform_indices = @transform_0, window_bounds = array<i64: 8, 128>}, {transform_indices = @transform_1, window_bounds = array<i64: 8, 128>}]} {
    %c0 = arith.constant 0 : index
    %c0_0 = arith.constant 0 : index
    %0 = vector.load %arg1[%c0, %c0_0] : memref<8x128xf32, #tpu.memory_space<vmem>>, vector<8x128xf32>
    %cst = arith.constant 2.000000e+00 : f32
    %1 = vector.broadcast %cst : f32 to vector<8x128xf32>
    %2 = arith.mulf %0, %1 : vector<8x128xf32>
    %c0_1 = arith.constant 0 : index
    %c0_2 = arith.constant 0 : index
    %3 = vector.load %arg2[%c0_1, %c0_2] : memref<8x128xf32, #tpu.memory_space<vmem>>, vector<8x128xf32>
    tpu.vector_store %arg2[%c0_1, %c0_2], %2 {strides = array<i32>} : memref<8x128xf32, #tpu.memory_space<vmem>>, vector<8x128xf32>,
    return
  }
  func.func @transform_0(%arg0: i32) -> (i32, i32) {
    %c0_i32 = arith.constant 0 : i32
    %c0_i32_0 = arith.constant 0 : i32
    %c0_i32_1 = arith.constant 0 : i32
    return %c0_i32, %c0_i32_0 : i32, i32
  }
  func.func @transform_1(%arg0: i32) -> (i32, i32) {
    %c0_i32 = arith.constant 0 : i32
    %c0_i32_0 = arith.constant 0 : i32
    return %arg0, %c0_i32 : i32, i32
  }
}

module attributes {stable_mosaic.version = 11 : i64} {
  func.func @_bilstm_chunk_kernel(%arg0: i32, %arg1: memref<64x128xf32, #tpu.memory_space<vmem>>, %arg2: memref<64x128xf32, #tpu.memory_space<vmem>>, %arg3: memref<128x512xf32, #tpu.memory_space<vmem>>, %arg4: memref<128x512xf32, #tpu.memory_space<vmem>>, %arg5: memref<256x1024xf32, #tpu.memory_space<vmem>>, %arg6: memref<1x512xf32, #tpu.memory_space<vmem>>, %arg7: memref<1x512xf32, #tpu.memory_space<vmem>>, %arg8: memref<2x8x128xf32, #tpu.memory_space<vmem>>, %arg9: memref<2x8x128xf32, #tpu.memory_space<vmem>>, %arg10: memref<64x128xf32, #tpu.memory_space<vmem>>, %arg11: memref<64x128xf32, #tpu.memory_space<vmem>>, %arg12: memref<2x8x128xf32, #tpu.memory_space<vmem>>, %arg13: memref<2x8x128xf32, #tpu.memory_space<vmem>>, %arg14: memref<64x512xf32, #tpu.memory_space<vmem>>, %arg15: memref<64x512xf32, #tpu.memory_space<vmem>>, %arg16: memref<8x256xf32, #tpu.memory_space<vmem>>, %arg17: memref<8x256xf32, #tpu.memory_space<vmem>>) attributes {dimension_semantics = [#tpu.dimension_semantics<arbitrary>], iteration_bounds = array<i64: 1>, scalar_prefetch = 0 : i64, scratch_operands = 4 : i64, tpu.core_type = #tpu.core_type<tc>, window_params = [{transform_indices = @transform_0, window_bounds = array<i64: 64, 128>}, {transform_indices = @transform_1, window_bounds = array<i64: 64, 128>}, {pipeline_mode = #tpu.pipeline_mode<synchronous>, transform_indices = @transform_2, window_bounds = array<i64: 128, 512>}, {pipeline_mode = #tpu.pipeline_mode<synchronous>, transform_indices = @transform_3, window_bounds = array<i64: 128, 512>}, {pipeline_mode = #tpu.pipeline_mode<synchronous>, transform_indices = @transform_4, window_bounds = array<i64: 256, 1024>}, {pipeline_mode = #tpu.pipeline_mode<synchronous>, transform_indices = @transform_5, window_bounds = array<i64: 1, 512>}, {pipeline_mode = #tpu.pipeline_mode<synchronous>, transform_indices = @transform_6, window_bounds = array<i64: 1, 512>}, {pipeline_mode = #tpu.pipeline_mode<synchronous>, transform_indices = @transform_7, window_bounds = array<i64: 2, 8, 128>}, {pipeline_mode = #tpu.pipeline_mode<synchronous>, transform_indices = @transform_8, window_bounds = array<i64: 2, 8, 128>}, {transform_indices = @transform_9, window_bounds = array<i64: 64, 128>}, {transform_indices = @transform_10, window_bounds = array<i64: 64, 128>}, {pipeline_mode = #tpu.pipeline_mode<synchronous>, transform_indices = @transform_11, window_bounds = array<i64: 2, 8, 128>}, {pipeline_mode = #tpu.pipeline_mode<synchronous>, transform_indices = @transform_12, window_bounds = array<i64: 2, 8, 128>}]} {
    %c0_i32 = arith.constant 0 : i32
    %0 = arith.cmpi eq, %arg0, %c0_i32 : i32
    %1 = arith.extui %0 : i1 to i32
    %c0_i32_0 = arith.constant 0 : i32
    %2 = arith.cmpi ne, %1, %c0_i32_0 : i32
    scf.if %2 {
      %c0_193 = arith.constant 0 : index
      %c0_194 = arith.constant 0 : index
      %c0_195 = arith.constant 0 : index
      %531 = vector.load %arg8[%c0_193, %c0_194, %c0_195] : memref<2x8x128xf32, #tpu.memory_space<vmem>>, vector<1x8x128xf32>
      %532 = vector.shape_cast %531 : vector<1x8x128xf32> to vector<8x128xf32>
      %c0_196 = arith.constant 0 : index
      %c0_197 = arith.constant 0 : index
      %533 = vector.load %arg16[%c0_196, %c0_197] : memref<8x256xf32, #tpu.memory_space<vmem>>, vector<8x128xf32>
      tpu.vector_store %arg16[%c0_196, %c0_197], %532 {strides = array<i32>} : memref<8x256xf32, #tpu.memory_space<vmem>>, vector<8x128xf32>,
      %c1 = arith.constant 1 : index
      %c0_198 = arith.constant 0 : index
      %c0_199 = arith.constant 0 : index
      %534 = vector.load %arg8[%c1, %c0_198, %c0_199] : memref<2x8x128xf32, #tpu.memory_space<vmem>>, vector<1x8x128xf32>
      %535 = vector.shape_cast %534 : vector<1x8x128xf32> to vector<8x128xf32>
      %c0_200 = arith.constant 0 : index
      %c128_201 = arith.constant 128 : index
      %536 = vector.load %arg16[%c0_200, %c128_201] : memref<8x256xf32, #tpu.memory_space<vmem>>, vector<8x128xf32>
      tpu.vector_store %arg16[%c0_200, %c128_201], %535 {strides = array<i32>} : memref<8x256xf32, #tpu.memory_space<vmem>>, vector<8x128xf32>,
      %c0_202 = arith.constant 0 : index
      %c0_203 = arith.constant 0 : index
      %c0_204 = arith.constant 0 : index
      %537 = vector.load %arg9[%c0_202, %c0_203, %c0_204] : memref<2x8x128xf32, #tpu.memory_space<vmem>>, vector<1x8x128xf32>
      %538 = vector.shape_cast %537 : vector<1x8x128xf32> to vector<8x128xf32>
      %c0_205 = arith.constant 0 : index
      %c0_206 = arith.constant 0 : index
      %539 = vector.load %arg17[%c0_205, %c0_206] : memref<8x256xf32, #tpu.memory_space<vmem>>, vector<8x128xf32>
      tpu.vector_store %arg17[%c0_205, %c0_206], %538 {strides = array<i32>} : memref<8x256xf32, #tpu.memory_space<vmem>>, vector<8x128xf32>,
      %c1_207 = arith.constant 1 : index
      %c0_208 = arith.constant 0 : index
      %c0_209 = arith.constant 0 : index
      %540 = vector.load %arg9[%c1_207, %c0_208, %c0_209] : memref<2x8x128xf32, #tpu.memory_space<vmem>>, vector<1x8x128xf32>
      %541 = vector.shape_cast %540 : vector<1x8x128xf32> to vector<8x128xf32>
      %c0_210 = arith.constant 0 : index
      %c128_211 = arith.constant 128 : index
      %542 = vector.load %arg17[%c0_210, %c128_211] : memref<8x256xf32, #tpu.memory_space<vmem>>, vector<8x128xf32>
      tpu.vector_store %arg17[%c0_210, %c128_211], %541 {strides = array<i32>} : memref<8x256xf32, #tpu.memory_space<vmem>>, vector<8x128xf32>,
    } else {
    }
    %c0 = arith.constant 0 : index
    %c0_1 = arith.constant 0 : index
    %3 = vector.load %arg1[%c0, %c0_1] : memref<64x128xf32, #tpu.memory_space<vmem>>, vector<64x128xf32>
    %c0_2 = arith.constant 0 : index
    %c0_3 = arith.constant 0 : index
    %4 = vector.load %arg3[%c0_2, %c0_3] : memref<128x512xf32, #tpu.memory_space<vmem>>, vector<128x512xf32>
    %cst = arith.constant dense<0.000000e+00> : vector<64x512xf32>
    %5 = tpu.matmul %3, %4, %cst {dimension_numbers = #tpu.dot_dimension_numbers<[1], [0], [0], [1], [0, 0, 1, 1], [], []>} : vector<64x128xf32>, vector<128x512xf32>, vector<64x512xf32> -> vector<64x512xf32>
    %c0_4 = arith.constant 0 : index
    %c0_5 = arith.constant 0 : index
    %6 = vector.load %arg6[%c0_4, %c0_5] : memref<1x512xf32, #tpu.memory_space<vmem>>, vector<1x512xf32>
    %7 = vector.broadcast %6 : vector<1x512xf32> to vector<64x512xf32>
    %8 = arith.addf %5, %7 : vector<64x512xf32>
    %c0_6 = arith.constant 0 : index
    %c0_7 = arith.constant 0 : index
    %9 = vector.load %arg14[%c0_6, %c0_7] : memref<64x512xf32, #tpu.memory_space<vmem>>, vector<64x512xf32>
    tpu.vector_store %arg14[%c0_6, %c0_7], %8 {strides = array<i32>} : memref<64x512xf32, #tpu.memory_space<vmem>>, vector<64x512xf32>,
    %c0_8 = arith.constant 0 : index
    %c0_9 = arith.constant 0 : index
    %10 = vector.load %arg2[%c0_8, %c0_9] : memref<64x128xf32, #tpu.memory_space<vmem>>, vector<64x128xf32>
    %c0_10 = arith.constant 0 : index
    %c0_11 = arith.constant 0 : index
    %11 = vector.load %arg4[%c0_10, %c0_11] : memref<128x512xf32, #tpu.memory_space<vmem>>, vector<128x512xf32>
    %cst_12 = arith.constant dense<0.000000e+00> : vector<64x512xf32>
    %12 = tpu.matmul %10, %11, %cst_12 {dimension_numbers = #tpu.dot_dimension_numbers<[1], [0], [0], [1], [0, 0, 1, 1], [], []>} : vector<64x128xf32>, vector<128x512xf32>, vector<64x512xf32> -> vector<64x512xf32>
    %c0_13 = arith.constant 0 : index
    %c0_14 = arith.constant 0 : index
    %13 = vector.load %arg7[%c0_13, %c0_14] : memref<1x512xf32, #tpu.memory_space<vmem>>, vector<1x512xf32>
    %14 = vector.broadcast %13 : vector<1x512xf32> to vector<64x512xf32>
    %15 = arith.addf %12, %14 : vector<64x512xf32>
    %c0_15 = arith.constant 0 : index
    %c0_16 = arith.constant 0 : index
    %16 = vector.load %arg15[%c0_15, %c0_16] : memref<64x512xf32, #tpu.memory_space<vmem>>, vector<64x512xf32>
    tpu.vector_store %arg15[%c0_15, %c0_16], %15 {strides = array<i32>} : memref<64x512xf32, #tpu.memory_space<vmem>>, vector<64x512xf32>,
    %c0_17 = arith.constant 0 : index
    %c0_18 = arith.constant 0 : index
    %17 = vector.load %arg5[%c0_17, %c0_18] : memref<256x1024xf32, #tpu.memory_space<vmem>>, vector<256x1024xf32>
    %c0_19 = arith.constant 0 : index
    %c0_20 = arith.constant 0 : index
    %18 = vector.load %arg16[%c0_19, %c0_20] : memref<8x256xf32, #tpu.memory_space<vmem>>, vector<8x256xf32>
    %c0_21 = arith.constant 0 : index
    %c0_22 = arith.constant 0 : index
    %19 = vector.load %arg17[%c0_21, %c0_22] : memref<8x256xf32, #tpu.memory_space<vmem>>, vector<8x128xf32>
    %c0_23 = arith.constant 0 : index
    %c128 = arith.constant 128 : index
    %20 = vector.load %arg17[%c0_23, %c128] : memref<8x256xf32, #tpu.memory_space<vmem>>, vector<8x128xf32>
    %c0_i32_24 = arith.constant 0 : i32
    %c8_i32 = arith.constant 8 : i32
    %21 = arith.muli %c0_i32_24, %c8_i32 : i32
    %22 = tpu.assume_multiple %21, 8 : i32
    %c7_i32 = arith.constant 7 : i32
    %23 = arith.subi %c7_i32, %c0_i32_24 : i32
    %c8_i32_25 = arith.constant 8 : i32
    %24 = arith.muli %23, %c8_i32_25 : i32
    %25 = tpu.assume_multiple %24, 8 : i32
    %cst_26 = arith.constant dense<0.000000e+00> : vector<8x1024xf32>
    %26 = tpu.matmul %18, %17, %cst_26 {dimension_numbers = #tpu.dot_dimension_numbers<[1], [0], [0], [1], [0, 0, 1, 1], [], []>} : vector<8x256xf32>, vector<256x1024xf32>, vector<8x1024xf32> -> vector<8x1024xf32>
    %27 = vector.extract_strided_slice %26 {offsets = [0, 0], sizes = [8, 512], strides = [1, 1]} : vector<8x1024xf32> to vector<8x512xf32>
    %28 = arith.index_cast %22 : i32 to index
    %c0_27 = arith.constant 0 : index
    %29 = vector.load %arg14[%28, %c0_27] : memref<64x512xf32, #tpu.memory_space<vmem>>, vector<8x512xf32>
    %30 = arith.addf %27, %29 : vector<8x512xf32>
    %31 = vector.extract_strided_slice %26 {offsets = [0, 512], sizes = [8, 512], strides = [1, 1]} : vector<8x1024xf32> to vector<8x512xf32>
    %32 = arith.index_cast %25 : i32 to index
    %c0_28 = arith.constant 0 : index
    %33 = vector.load %arg15[%32, %c0_28] : memref<64x512xf32, #tpu.memory_space<vmem>>, vector<8x512xf32>
    %34 = arith.addf %31, %33 : vector<8x512xf32>
    %35 = math.tanh %30 : vector<8x512xf32>
    %36 = math.tanh %34 : vector<8x512xf32>
    %37 = vector.extract_strided_slice %35 {offsets = [0, 0], sizes = [8, 128], strides = [1, 1]} : vector<8x512xf32> to vector<8x128xf32>
    %cst_29 = arith.constant 5.000000e-01 : f32
    %38 = vector.broadcast %cst_29 : f32 to vector<8x128xf32>
    %39 = arith.mulf %37, %38 : vector<8x128xf32>
    %cst_30 = arith.constant 5.000000e-01 : f32
    %40 = vector.broadcast %cst_30 : f32 to vector<8x128xf32>
    %41 = arith.addf %39, %40 : vector<8x128xf32>
    %42 = vector.extract_strided_slice %35 {offsets = [0, 128], sizes = [8, 128], strides = [1, 1]} : vector<8x512xf32> to vector<8x128xf32>
    %cst_31 = arith.constant 5.000000e-01 : f32
    %43 = vector.broadcast %cst_31 : f32 to vector<8x128xf32>
    %44 = arith.mulf %42, %43 : vector<8x128xf32>
    %cst_32 = arith.constant 5.000000e-01 : f32
    %45 = vector.broadcast %cst_32 : f32 to vector<8x128xf32>
    %46 = arith.addf %44, %45 : vector<8x128xf32>
    %47 = vector.extract_strided_slice %35 {offsets = [0, 256], sizes = [8, 128], strides = [1, 1]} : vector<8x512xf32> to vector<8x128xf32>
    %48 = vector.extract_strided_slice %35 {offsets = [0, 384], sizes = [8, 128], strides = [1, 1]} : vector<8x512xf32> to vector<8x128xf32>
    %cst_33 = arith.constant 5.000000e-01 : f32
    %49 = vector.broadcast %cst_33 : f32 to vector<8x128xf32>
    %50 = arith.mulf %48, %49 : vector<8x128xf32>
    %cst_34 = arith.constant 5.000000e-01 : f32
    %51 = vector.broadcast %cst_34 : f32 to vector<8x128xf32>
    %52 = arith.addf %50, %51 : vector<8x128xf32>
    %53 = vector.extract_strided_slice %36 {offsets = [0, 0], sizes = [8, 128], strides = [1, 1]} : vector<8x512xf32> to vector<8x128xf32>
    %cst_35 = arith.constant 5.000000e-01 : f32
    %54 = vector.broadcast %cst_35 : f32 to vector<8x128xf32>
    %55 = arith.mulf %53, %54 : vector<8x128xf32>
    %cst_36 = arith.constant 5.000000e-01 : f32
    %56 = vector.broadcast %cst_36 : f32 to vector<8x128xf32>
    %57 = arith.addf %55, %56 : vector<8x128xf32>
    %58 = vector.extract_strided_slice %36 {offsets = [0, 128], sizes = [8, 128], strides = [1, 1]} : vector<8x512xf32> to vector<8x128xf32>
    %cst_37 = arith.constant 5.000000e-01 : f32
    %59 = vector.broadcast %cst_37 : f32 to vector<8x128xf32>
    %60 = arith.mulf %58, %59 : vector<8x128xf32>
    %cst_38 = arith.constant 5.000000e-01 : f32
    %61 = vector.broadcast %cst_38 : f32 to vector<8x128xf32>
    %62 = arith.addf %60, %61 : vector<8x128xf32>
    %63 = vector.extract_strided_slice %36 {offsets = [0, 256], sizes = [8, 128], strides = [1, 1]} : vector<8x512xf32> to vector<8x128xf32>
    %64 = vector.extract_strided_slice %36 {offsets = [0, 384], sizes = [8, 128], strides = [1, 1]} : vector<8x512xf32> to vector<8x128xf32>
    %cst_39 = arith.constant 5.000000e-01 : f32
    %65 = vector.broadcast %cst_39 : f32 to vector<8x128xf32>
    %66 = arith.mulf %64, %65 : vector<8x128xf32>
    %cst_40 = arith.constant 5.000000e-01 : f32
    %67 = vector.broadcast %cst_40 : f32 to vector<8x128xf32>
    %68 = arith.addf %66, %67 : vector<8x128xf32>
    %69 = arith.mulf %46, %19 : vector<8x128xf32>
    %70 = arith.mulf %41, %47 : vector<8x128xf32>
    %71 = arith.addf %69, %70 : vector<8x128xf32>
    %72 = arith.mulf %62, %20 : vector<8x128xf32>
    %73 = arith.mulf %57, %63 : vector<8x128xf32>
    %74 = arith.addf %72, %73 : vector<8x128xf32>
    %75 = math.tanh %71 : vector<8x128xf32>
    %76 = arith.mulf %52, %75 : vector<8x128xf32>
    %77 = math.tanh %74 : vector<8x128xf32>
    %78 = arith.mulf %68, %77 : vector<8x128xf32>
    %79 = arith.index_cast %22 : i32 to index
    %c0_41 = arith.constant 0 : index
    %80 = vector.load %arg10[%79, %c0_41] : memref<64x128xf32, #tpu.memory_space<vmem>>, vector<8x128xf32>
    tpu.vector_store %arg10[%79, %c0_41], %76 {strides = array<i32>} : memref<64x128xf32, #tpu.memory_space<vmem>>, vector<8x128xf32>,
    %81 = arith.index_cast %25 : i32 to index
    %c0_42 = arith.constant 0 : index
    %82 = vector.load %arg11[%81, %c0_42] : memref<64x128xf32, #tpu.memory_space<vmem>>, vector<8x128xf32>
    tpu.vector_store %arg11[%81, %c0_42], %78 {strides = array<i32>} : memref<64x128xf32, #tpu.memory_space<vmem>>, vector<8x128xf32>,
    %83 = tpu.concatenate %76, %78 in 1 : vector<8x128xf32>, vector<8x128xf32> -> vector<8x256xf32>
    %c1_i32 = arith.constant 1 : i32
    %c8_i32_43 = arith.constant 8 : i32
    %84 = arith.muli %c1_i32, %c8_i32_43 : i32
    %85 = tpu.assume_multiple %84, 8 : i32
    %c7_i32_44 = arith.constant 7 : i32
    %86 = arith.subi %c7_i32_44, %c1_i32 : i32
    %c8_i32_45 = arith.constant 8 : i32
    %87 = arith.muli %86, %c8_i32_45 : i32
    %88 = tpu.assume_multiple %87, 8 : i32
    %cst_46 = arith.constant dense<0.000000e+00> : vector<8x1024xf32>
    %89 = tpu.matmul %83, %17, %cst_46 {dimension_numbers = #tpu.dot_dimension_numbers<[1], [0], [0], [1], [0, 0, 1, 1], [], []>} : vector<8x256xf32>, vector<256x1024xf32>, vector<8x1024xf32> -> vector<8x1024xf32>
    %90 = vector.extract_strided_slice %89 {offsets = [0, 0], sizes = [8, 512], strides = [1, 1]} : vector<8x1024xf32> to vector<8x512xf32>
    %91 = arith.index_cast %85 : i32 to index
    %c0_47 = arith.constant 0 : index
    %92 = vector.load %arg14[%91, %c0_47] : memref<64x512xf32, #tpu.memory_space<vmem>>, vector<8x512xf32>
    %93 = arith.addf %90, %92 : vector<8x512xf32>
    %94 = vector.extract_strided_slice %89 {offsets = [0, 512], sizes = [8, 512], strides = [1, 1]} : vector<8x1024xf32> to vector<8x512xf32>
    %95 = arith.index_cast %88 : i32 to index
    %c0_48 = arith.constant 0 : index
    %96 = vector.load %arg15[%95, %c0_48] : memref<64x512xf32, #tpu.memory_space<vmem>>, vector<8x512xf32>
    %97 = arith.addf %94, %96 : vector<8x512xf32>
    %98 = math.tanh %93 : vector<8x512xf32>
    %99 = math.tanh %97 : vector<8x512xf32>
    %100 = vector.extract_strided_slice %98 {offsets = [0, 0], sizes = [8, 128], strides = [1, 1]} : vector<8x512xf32> to vector<8x128xf32>
    %cst_49 = arith.constant 5.000000e-01 : f32
    %101 = vector.broadcast %cst_49 : f32 to vector<8x128xf32>
    %102 = arith.mulf %100, %101 : vector<8x128xf32>
    %cst_50 = arith.constant 5.000000e-01 : f32
    %103 = vector.broadcast %cst_50 : f32 to vector<8x128xf32>
    %104 = arith.addf %102, %103 : vector<8x128xf32>
    %105 = vector.extract_strided_slice %98 {offsets = [0, 128], sizes = [8, 128], strides = [1, 1]} : vector<8x512xf32> to vector<8x128xf32>
    %cst_51 = arith.constant 5.000000e-01 : f32
    %106 = vector.broadcast %cst_51 : f32 to vector<8x128xf32>
    %107 = arith.mulf %105, %106 : vector<8x128xf32>
    %cst_52 = arith.constant 5.000000e-01 : f32
    %108 = vector.broadcast %cst_52 : f32 to vector<8x128xf32>
    %109 = arith.addf %107, %108 : vector<8x128xf32>
    %110 = vector.extract_strided_slice %98 {offsets = [0, 256], sizes = [8, 128], strides = [1, 1]} : vector<8x512xf32> to vector<8x128xf32>
    %111 = vector.extract_strided_slice %98 {offsets = [0, 384], sizes = [8, 128], strides = [1, 1]} : vector<8x512xf32> to vector<8x128xf32>
    %cst_53 = arith.constant 5.000000e-01 : f32
    %112 = vector.broadcast %cst_53 : f32 to vector<8x128xf32>
    %113 = arith.mulf %111, %112 : vector<8x128xf32>
    %cst_54 = arith.constant 5.000000e-01 : f32
    %114 = vector.broadcast %cst_54 : f32 to vector<8x128xf32>
    %115 = arith.addf %113, %114 : vector<8x128xf32>
    %116 = vector.extract_strided_slice %99 {offsets = [0, 0], sizes = [8, 128], strides = [1, 1]} : vector<8x512xf32> to vector<8x128xf32>
    %cst_55 = arith.constant 5.000000e-01 : f32
    %117 = vector.broadcast %cst_55 : f32 to vector<8x128xf32>
    %118 = arith.mulf %116, %117 : vector<8x128xf32>
    %cst_56 = arith.constant 5.000000e-01 : f32
    %119 = vector.broadcast %cst_56 : f32 to vector<8x128xf32>
    %120 = arith.addf %118, %119 : vector<8x128xf32>
    %121 = vector.extract_strided_slice %99 {offsets = [0, 128], sizes = [8, 128], strides = [1, 1]} : vector<8x512xf32> to vector<8x128xf32>
    %cst_57 = arith.constant 5.000000e-01 : f32
    %122 = vector.broadcast %cst_57 : f32 to vector<8x128xf32>
    %123 = arith.mulf %121, %122 : vector<8x128xf32>
    %cst_58 = arith.constant 5.000000e-01 : f32
    %124 = vector.broadcast %cst_58 : f32 to vector<8x128xf32>
    %125 = arith.addf %123, %124 : vector<8x128xf32>
    %126 = vector.extract_strided_slice %99 {offsets = [0, 256], sizes = [8, 128], strides = [1, 1]} : vector<8x512xf32> to vector<8x128xf32>
    %127 = vector.extract_strided_slice %99 {offsets = [0, 384], sizes = [8, 128], strides = [1, 1]} : vector<8x512xf32> to vector<8x128xf32>
    %cst_59 = arith.constant 5.000000e-01 : f32
    %128 = vector.broadcast %cst_59 : f32 to vector<8x128xf32>
    %129 = arith.mulf %127, %128 : vector<8x128xf32>
    %cst_60 = arith.constant 5.000000e-01 : f32
    %130 = vector.broadcast %cst_60 : f32 to vector<8x128xf32>
    %131 = arith.addf %129, %130 : vector<8x128xf32>
    %132 = arith.mulf %109, %71 : vector<8x128xf32>
    %133 = arith.mulf %104, %110 : vector<8x128xf32>
    %134 = arith.addf %132, %133 : vector<8x128xf32>
    %135 = arith.mulf %125, %74 : vector<8x128xf32>
    %136 = arith.mulf %120, %126 : vector<8x128xf32>
    %137 = arith.addf %135, %136 : vector<8x128xf32>
    %138 = math.tanh %134 : vector<8x128xf32>
    %139 = arith.mulf %115, %138 : vector<8x128xf32>
    %140 = math.tanh %137 : vector<8x128xf32>
    %141 = arith.mulf %131, %140 : vector<8x128xf32>
    %142 = arith.index_cast %85 : i32 to index
    %c0_61 = arith.constant 0 : index
    %143 = vector.load %arg10[%142, %c0_61] : memref<64x128xf32, #tpu.memory_space<vmem>>, vector<8x128xf32>
    tpu.vector_store %arg10[%142, %c0_61], %139 {strides = array<i32>} : memref<64x128xf32, #tpu.memory_space<vmem>>, vector<8x128xf32>,
    %144 = arith.index_cast %88 : i32 to index
    %c0_62 = arith.constant 0 : index
    %145 = vector.load %arg11[%144, %c0_62] : memref<64x128xf32, #tpu.memory_space<vmem>>, vector<8x128xf32>
    tpu.vector_store %arg11[%144, %c0_62], %141 {strides = array<i32>} : memref<64x128xf32, #tpu.memory_space<vmem>>, vector<8x128xf32>,
    %146 = tpu.concatenate %139, %141 in 1 : vector<8x128xf32>, vector<8x128xf32> -> vector<8x256xf32>
    %c2_i32 = arith.constant 2 : i32
    %c8_i32_63 = arith.constant 8 : i32
    %147 = arith.muli %c2_i32, %c8_i32_63 : i32
    %148 = tpu.assume_multiple %147, 8 : i32
    %c7_i32_64 = arith.constant 7 : i32
    %149 = arith.subi %c7_i32_64, %c2_i32 : i32
    %c8_i32_65 = arith.constant 8 : i32
    %150 = arith.muli %149, %c8_i32_65 : i32
    %151 = tpu.assume_multiple %150, 8 : i32
    %cst_66 = arith.constant dense<0.000000e+00> : vector<8x1024xf32>
    %152 = tpu.matmul %146, %17, %cst_66 {dimension_numbers = #tpu.dot_dimension_numbers<[1], [0], [0], [1], [0, 0, 1, 1], [], []>} : vector<8x256xf32>, vector<256x1024xf32>, vector<8x1024xf32> -> vector<8x1024xf32>
    %153 = vector.extract_strided_slice %152 {offsets = [0, 0], sizes = [8, 512], strides = [1, 1]} : vector<8x1024xf32> to vector<8x512xf32>
    %154 = arith.index_cast %148 : i32 to index
    %c0_67 = arith.constant 0 : index
    %155 = vector.load %arg14[%154, %c0_67] : memref<64x512xf32, #tpu.memory_space<vmem>>, vector<8x512xf32>
    %156 = arith.addf %153, %155 : vector<8x512xf32>
    %157 = vector.extract_strided_slice %152 {offsets = [0, 512], sizes = [8, 512], strides = [1, 1]} : vector<8x1024xf32> to vector<8x512xf32>
    %158 = arith.index_cast %151 : i32 to index
    %c0_68 = arith.constant 0 : index
    %159 = vector.load %arg15[%158, %c0_68] : memref<64x512xf32, #tpu.memory_space<vmem>>, vector<8x512xf32>
    %160 = arith.addf %157, %159 : vector<8x512xf32>
    %161 = math.tanh %156 : vector<8x512xf32>
    %162 = math.tanh %160 : vector<8x512xf32>
    %163 = vector.extract_strided_slice %161 {offsets = [0, 0], sizes = [8, 128], strides = [1, 1]} : vector<8x512xf32> to vector<8x128xf32>
    %cst_69 = arith.constant 5.000000e-01 : f32
    %164 = vector.broadcast %cst_69 : f32 to vector<8x128xf32>
    %165 = arith.mulf %163, %164 : vector<8x128xf32>
    %cst_70 = arith.constant 5.000000e-01 : f32
    %166 = vector.broadcast %cst_70 : f32 to vector<8x128xf32>
    %167 = arith.addf %165, %166 : vector<8x128xf32>
    %168 = vector.extract_strided_slice %161 {offsets = [0, 128], sizes = [8, 128], strides = [1, 1]} : vector<8x512xf32> to vector<8x128xf32>
    %cst_71 = arith.constant 5.000000e-01 : f32
    %169 = vector.broadcast %cst_71 : f32 to vector<8x128xf32>
    %170 = arith.mulf %168, %169 : vector<8x128xf32>
    %cst_72 = arith.constant 5.000000e-01 : f32
    %171 = vector.broadcast %cst_72 : f32 to vector<8x128xf32>
    %172 = arith.addf %170, %171 : vector<8x128xf32>
    %173 = vector.extract_strided_slice %161 {offsets = [0, 256], sizes = [8, 128], strides = [1, 1]} : vector<8x512xf32> to vector<8x128xf32>
    %174 = vector.extract_strided_slice %161 {offsets = [0, 384], sizes = [8, 128], strides = [1, 1]} : vector<8x512xf32> to vector<8x128xf32>
    %cst_73 = arith.constant 5.000000e-01 : f32
    %175 = vector.broadcast %cst_73 : f32 to vector<8x128xf32>
    %176 = arith.mulf %174, %175 : vector<8x128xf32>
    %cst_74 = arith.constant 5.000000e-01 : f32
    %177 = vector.broadcast %cst_74 : f32 to vector<8x128xf32>
    %178 = arith.addf %176, %177 : vector<8x128xf32>
    %179 = vector.extract_strided_slice %162 {offsets = [0, 0], sizes = [8, 128], strides = [1, 1]} : vector<8x512xf32> to vector<8x128xf32>
    %cst_75 = arith.constant 5.000000e-01 : f32
    %180 = vector.broadcast %cst_75 : f32 to vector<8x128xf32>
    %181 = arith.mulf %179, %180 : vector<8x128xf32>
    %cst_76 = arith.constant 5.000000e-01 : f32
    %182 = vector.broadcast %cst_76 : f32 to vector<8x128xf32>
    %183 = arith.addf %181, %182 : vector<8x128xf32>
    %184 = vector.extract_strided_slice %162 {offsets = [0, 128], sizes = [8, 128], strides = [1, 1]} : vector<8x512xf32> to vector<8x128xf32>
    %cst_77 = arith.constant 5.000000e-01 : f32
    %185 = vector.broadcast %cst_77 : f32 to vector<8x128xf32>
    %186 = arith.mulf %184, %185 : vector<8x128xf32>
    %cst_78 = arith.constant 5.000000e-01 : f32
    %187 = vector.broadcast %cst_78 : f32 to vector<8x128xf32>
    %188 = arith.addf %186, %187 : vector<8x128xf32>
    %189 = vector.extract_strided_slice %162 {offsets = [0, 256], sizes = [8, 128], strides = [1, 1]} : vector<8x512xf32> to vector<8x128xf32>
    %190 = vector.extract_strided_slice %162 {offsets = [0, 384], sizes = [8, 128], strides = [1, 1]} : vector<8x512xf32> to vector<8x128xf32>
    %cst_79 = arith.constant 5.000000e-01 : f32
    %191 = vector.broadcast %cst_79 : f32 to vector<8x128xf32>
    %192 = arith.mulf %190, %191 : vector<8x128xf32>
    %cst_80 = arith.constant 5.000000e-01 : f32
    %193 = vector.broadcast %cst_80 : f32 to vector<8x128xf32>
    %194 = arith.addf %192, %193 : vector<8x128xf32>
    %195 = arith.mulf %172, %134 : vector<8x128xf32>
    %196 = arith.mulf %167, %173 : vector<8x128xf32>
    %197 = arith.addf %195, %196 : vector<8x128xf32>
    %198 = arith.mulf %188, %137 : vector<8x128xf32>
    %199 = arith.mulf %183, %189 : vector<8x128xf32>
    %200 = arith.addf %198, %199 : vector<8x128xf32>
    %201 = math.tanh %197 : vector<8x128xf32>
    %202 = arith.mulf %178, %201 : vector<8x128xf32>
    %203 = math.tanh %200 : vector<8x128xf32>
    %204 = arith.mulf %194, %203 : vector<8x128xf32>
    %205 = arith.index_cast %148 : i32 to index
    %c0_81 = arith.constant 0 : index
    %206 = vector.load %arg10[%205, %c0_81] : memref<64x128xf32, #tpu.memory_space<vmem>>, vector<8x128xf32>
    tpu.vector_store %arg10[%205, %c0_81], %202 {strides = array<i32>} : memref<64x128xf32, #tpu.memory_space<vmem>>, vector<8x128xf32>,
    %207 = arith.index_cast %151 : i32 to index
    %c0_82 = arith.constant 0 : index
    %208 = vector.load %arg11[%207, %c0_82] : memref<64x128xf32, #tpu.memory_space<vmem>>, vector<8x128xf32>
    tpu.vector_store %arg11[%207, %c0_82], %204 {strides = array<i32>} : memref<64x128xf32, #tpu.memory_space<vmem>>, vector<8x128xf32>,
    %209 = tpu.concatenate %202, %204 in 1 : vector<8x128xf32>, vector<8x128xf32> -> vector<8x256xf32>
    %c3_i32 = arith.constant 3 : i32
    %c8_i32_83 = arith.constant 8 : i32
    %210 = arith.muli %c3_i32, %c8_i32_83 : i32
    %211 = tpu.assume_multiple %210, 8 : i32
    %c7_i32_84 = arith.constant 7 : i32
    %212 = arith.subi %c7_i32_84, %c3_i32 : i32
    %c8_i32_85 = arith.constant 8 : i32
    %213 = arith.muli %212, %c8_i32_85 : i32
    %214 = tpu.assume_multiple %213, 8 : i32
    %cst_86 = arith.constant dense<0.000000e+00> : vector<8x1024xf32>
    %215 = tpu.matmul %209, %17, %cst_86 {dimension_numbers = #tpu.dot_dimension_numbers<[1], [0], [0], [1], [0, 0, 1, 1], [], []>} : vector<8x256xf32>, vector<256x1024xf32>, vector<8x1024xf32> -> vector<8x1024xf32>
    %216 = vector.extract_strided_slice %215 {offsets = [0, 0], sizes = [8, 512], strides = [1, 1]} : vector<8x1024xf32> to vector<8x512xf32>
    %217 = arith.index_cast %211 : i32 to index
    %c0_87 = arith.constant 0 : index
    %218 = vector.load %arg14[%217, %c0_87] : memref<64x512xf32, #tpu.memory_space<vmem>>, vector<8x512xf32>
    %219 = arith.addf %216, %218 : vector<8x512xf32>
    %220 = vector.extract_strided_slice %215 {offsets = [0, 512], sizes = [8, 512], strides = [1, 1]} : vector<8x1024xf32> to vector<8x512xf32>
    %221 = arith.index_cast %214 : i32 to index
    %c0_88 = arith.constant 0 : index
    %222 = vector.load %arg15[%221, %c0_88] : memref<64x512xf32, #tpu.memory_space<vmem>>, vector<8x512xf32>
    %223 = arith.addf %220, %222 : vector<8x512xf32>
    %224 = math.tanh %219 : vector<8x512xf32>
    %225 = math.tanh %223 : vector<8x512xf32>
    %226 = vector.extract_strided_slice %224 {offsets = [0, 0], sizes = [8, 128], strides = [1, 1]} : vector<8x512xf32> to vector<8x128xf32>
    %cst_89 = arith.constant 5.000000e-01 : f32
    %227 = vector.broadcast %cst_89 : f32 to vector<8x128xf32>
    %228 = arith.mulf %226, %227 : vector<8x128xf32>
    %cst_90 = arith.constant 5.000000e-01 : f32
    %229 = vector.broadcast %cst_90 : f32 to vector<8x128xf32>
    %230 = arith.addf %228, %229 : vector<8x128xf32>
    %231 = vector.extract_strided_slice %224 {offsets = [0, 128], sizes = [8, 128], strides = [1, 1]} : vector<8x512xf32> to vector<8x128xf32>
    %cst_91 = arith.constant 5.000000e-01 : f32
    %232 = vector.broadcast %cst_91 : f32 to vector<8x128xf32>
    %233 = arith.mulf %231, %232 : vector<8x128xf32>
    %cst_92 = arith.constant 5.000000e-01 : f32
    %234 = vector.broadcast %cst_92 : f32 to vector<8x128xf32>
    %235 = arith.addf %233, %234 : vector<8x128xf32>
    %236 = vector.extract_strided_slice %224 {offsets = [0, 256], sizes = [8, 128], strides = [1, 1]} : vector<8x512xf32> to vector<8x128xf32>
    %237 = vector.extract_strided_slice %224 {offsets = [0, 384], sizes = [8, 128], strides = [1, 1]} : vector<8x512xf32> to vector<8x128xf32>
    %cst_93 = arith.constant 5.000000e-01 : f32
    %238 = vector.broadcast %cst_93 : f32 to vector<8x128xf32>
    %239 = arith.mulf %237, %238 : vector<8x128xf32>
    %cst_94 = arith.constant 5.000000e-01 : f32
    %240 = vector.broadcast %cst_94 : f32 to vector<8x128xf32>
    %241 = arith.addf %239, %240 : vector<8x128xf32>
    %242 = vector.extract_strided_slice %225 {offsets = [0, 0], sizes = [8, 128], strides = [1, 1]} : vector<8x512xf32> to vector<8x128xf32>
    %cst_95 = arith.constant 5.000000e-01 : f32
    %243 = vector.broadcast %cst_95 : f32 to vector<8x128xf32>
    %244 = arith.mulf %242, %243 : vector<8x128xf32>
    %cst_96 = arith.constant 5.000000e-01 : f32
    %245 = vector.broadcast %cst_96 : f32 to vector<8x128xf32>
    %246 = arith.addf %244, %245 : vector<8x128xf32>
    %247 = vector.extract_strided_slice %225 {offsets = [0, 128], sizes = [8, 128], strides = [1, 1]} : vector<8x512xf32> to vector<8x128xf32>
    %cst_97 = arith.constant 5.000000e-01 : f32
    %248 = vector.broadcast %cst_97 : f32 to vector<8x128xf32>
    %249 = arith.mulf %247, %248 : vector<8x128xf32>
    %cst_98 = arith.constant 5.000000e-01 : f32
    %250 = vector.broadcast %cst_98 : f32 to vector<8x128xf32>
    %251 = arith.addf %249, %250 : vector<8x128xf32>
    %252 = vector.extract_strided_slice %225 {offsets = [0, 256], sizes = [8, 128], strides = [1, 1]} : vector<8x512xf32> to vector<8x128xf32>
    %253 = vector.extract_strided_slice %225 {offsets = [0, 384], sizes = [8, 128], strides = [1, 1]} : vector<8x512xf32> to vector<8x128xf32>
    %cst_99 = arith.constant 5.000000e-01 : f32
    %254 = vector.broadcast %cst_99 : f32 to vector<8x128xf32>
    %255 = arith.mulf %253, %254 : vector<8x128xf32>
    %cst_100 = arith.constant 5.000000e-01 : f32
    %256 = vector.broadcast %cst_100 : f32 to vector<8x128xf32>
    %257 = arith.addf %255, %256 : vector<8x128xf32>
    %258 = arith.mulf %235, %197 : vector<8x128xf32>
    %259 = arith.mulf %230, %236 : vector<8x128xf32>
    %260 = arith.addf %258, %259 : vector<8x128xf32>
    %261 = arith.mulf %251, %200 : vector<8x128xf32>
    %262 = arith.mulf %246, %252 : vector<8x128xf32>
    %263 = arith.addf %261, %262 : vector<8x128xf32>
    %264 = math.tanh %260 : vector<8x128xf32>
    %265 = arith.mulf %241, %264 : vector<8x128xf32>
    %266 = math.tanh %263 : vector<8x128xf32>
    %267 = arith.mulf %257, %266 : vector<8x128xf32>
    %268 = arith.index_cast %211 : i32 to index
    %c0_101 = arith.constant 0 : index
    %269 = vector.load %arg10[%268, %c0_101] : memref<64x128xf32, #tpu.memory_space<vmem>>, vector<8x128xf32>
    tpu.vector_store %arg10[%268, %c0_101], %265 {strides = array<i32>} : memref<64x128xf32, #tpu.memory_space<vmem>>, vector<8x128xf32>,
    %270 = arith.index_cast %214 : i32 to index
    %c0_102 = arith.constant 0 : index
    %271 = vector.load %arg11[%270, %c0_102] : memref<64x128xf32, #tpu.memory_space<vmem>>, vector<8x128xf32>
    tpu.vector_store %arg11[%270, %c0_102], %267 {strides = array<i32>} : memref<64x128xf32, #tpu.memory_space<vmem>>, vector<8x128xf32>,
    %272 = tpu.concatenate %265, %267 in 1 : vector<8x128xf32>, vector<8x128xf32> -> vector<8x256xf32>
    %c4_i32 = arith.constant 4 : i32
    %c8_i32_103 = arith.constant 8 : i32
    %273 = arith.muli %c4_i32, %c8_i32_103 : i32
    %274 = tpu.assume_multiple %273, 8 : i32
    %c7_i32_104 = arith.constant 7 : i32
    %275 = arith.subi %c7_i32_104, %c4_i32 : i32
    %c8_i32_105 = arith.constant 8 : i32
    %276 = arith.muli %275, %c8_i32_105 : i32
    %277 = tpu.assume_multiple %276, 8 : i32
    %cst_106 = arith.constant dense<0.000000e+00> : vector<8x1024xf32>
    %278 = tpu.matmul %272, %17, %cst_106 {dimension_numbers = #tpu.dot_dimension_numbers<[1], [0], [0], [1], [0, 0, 1, 1], [], []>} : vector<8x256xf32>, vector<256x1024xf32>, vector<8x1024xf32> -> vector<8x1024xf32>
    %279 = vector.extract_strided_slice %278 {offsets = [0, 0], sizes = [8, 512], strides = [1, 1]} : vector<8x1024xf32> to vector<8x512xf32>
    %280 = arith.index_cast %274 : i32 to index
    %c0_107 = arith.constant 0 : index
    %281 = vector.load %arg14[%280, %c0_107] : memref<64x512xf32, #tpu.memory_space<vmem>>, vector<8x512xf32>
    %282 = arith.addf %279, %281 : vector<8x512xf32>
    %283 = vector.extract_strided_slice %278 {offsets = [0, 512], sizes = [8, 512], strides = [1, 1]} : vector<8x1024xf32> to vector<8x512xf32>
    %284 = arith.index_cast %277 : i32 to index
    %c0_108 = arith.constant 0 : index
    %285 = vector.load %arg15[%284, %c0_108] : memref<64x512xf32, #tpu.memory_space<vmem>>, vector<8x512xf32>
    %286 = arith.addf %283, %285 : vector<8x512xf32>
    %287 = math.tanh %282 : vector<8x512xf32>
    %288 = math.tanh %286 : vector<8x512xf32>
    %289 = vector.extract_strided_slice %287 {offsets = [0, 0], sizes = [8, 128], strides = [1, 1]} : vector<8x512xf32> to vector<8x128xf32>
    %cst_109 = arith.constant 5.000000e-01 : f32
    %290 = vector.broadcast %cst_109 : f32 to vector<8x128xf32>
    %291 = arith.mulf %289, %290 : vector<8x128xf32>
    %cst_110 = arith.constant 5.000000e-01 : f32
    %292 = vector.broadcast %cst_110 : f32 to vector<8x128xf32>
    %293 = arith.addf %291, %292 : vector<8x128xf32>
    %294 = vector.extract_strided_slice %287 {offsets = [0, 128], sizes = [8, 128], strides = [1, 1]} : vector<8x512xf32> to vector<8x128xf32>
    %cst_111 = arith.constant 5.000000e-01 : f32
    %295 = vector.broadcast %cst_111 : f32 to vector<8x128xf32>
    %296 = arith.mulf %294, %295 : vector<8x128xf32>
    %cst_112 = arith.constant 5.000000e-01 : f32
    %297 = vector.broadcast %cst_112 : f32 to vector<8x128xf32>
    %298 = arith.addf %296, %297 : vector<8x128xf32>
    %299 = vector.extract_strided_slice %287 {offsets = [0, 256], sizes = [8, 128], strides = [1, 1]} : vector<8x512xf32> to vector<8x128xf32>
    %300 = vector.extract_strided_slice %287 {offsets = [0, 384], sizes = [8, 128], strides = [1, 1]} : vector<8x512xf32> to vector<8x128xf32>
    %cst_113 = arith.constant 5.000000e-01 : f32
    %301 = vector.broadcast %cst_113 : f32 to vector<8x128xf32>
    %302 = arith.mulf %300, %301 : vector<8x128xf32>
    %cst_114 = arith.constant 5.000000e-01 : f32
    %303 = vector.broadcast %cst_114 : f32 to vector<8x128xf32>
    %304 = arith.addf %302, %303 : vector<8x128xf32>
    %305 = vector.extract_strided_slice %288 {offsets = [0, 0], sizes = [8, 128], strides = [1, 1]} : vector<8x512xf32> to vector<8x128xf32>
    %cst_115 = arith.constant 5.000000e-01 : f32
    %306 = vector.broadcast %cst_115 : f32 to vector<8x128xf32>
    %307 = arith.mulf %305, %306 : vector<8x128xf32>
    %cst_116 = arith.constant 5.000000e-01 : f32
    %308 = vector.broadcast %cst_116 : f32 to vector<8x128xf32>
    %309 = arith.addf %307, %308 : vector<8x128xf32>
    %310 = vector.extract_strided_slice %288 {offsets = [0, 128], sizes = [8, 128], strides = [1, 1]} : vector<8x512xf32> to vector<8x128xf32>
    %cst_117 = arith.constant 5.000000e-01 : f32
    %311 = vector.broadcast %cst_117 : f32 to vector<8x128xf32>
    %312 = arith.mulf %310, %311 : vector<8x128xf32>
    %cst_118 = arith.constant 5.000000e-01 : f32
    %313 = vector.broadcast %cst_118 : f32 to vector<8x128xf32>
    %314 = arith.addf %312, %313 : vector<8x128xf32>
    %315 = vector.extract_strided_slice %288 {offsets = [0, 256], sizes = [8, 128], strides = [1, 1]} : vector<8x512xf32> to vector<8x128xf32>
    %316 = vector.extract_strided_slice %288 {offsets = [0, 384], sizes = [8, 128], strides = [1, 1]} : vector<8x512xf32> to vector<8x128xf32>
    %cst_119 = arith.constant 5.000000e-01 : f32
    %317 = vector.broadcast %cst_119 : f32 to vector<8x128xf32>
    %318 = arith.mulf %316, %317 : vector<8x128xf32>
    %cst_120 = arith.constant 5.000000e-01 : f32
    %319 = vector.broadcast %cst_120 : f32 to vector<8x128xf32>
    %320 = arith.addf %318, %319 : vector<8x128xf32>
    %321 = arith.mulf %298, %260 : vector<8x128xf32>
    %322 = arith.mulf %293, %299 : vector<8x128xf32>
    %323 = arith.addf %321, %322 : vector<8x128xf32>
    %324 = arith.mulf %314, %263 : vector<8x128xf32>
    %325 = arith.mulf %309, %315 : vector<8x128xf32>
    %326 = arith.addf %324, %325 : vector<8x128xf32>
    %327 = math.tanh %323 : vector<8x128xf32>
    %328 = arith.mulf %304, %327 : vector<8x128xf32>
    %329 = math.tanh %326 : vector<8x128xf32>
    %330 = arith.mulf %320, %329 : vector<8x128xf32>
    %331 = arith.index_cast %274 : i32 to index
    %c0_121 = arith.constant 0 : index
    %332 = vector.load %arg10[%331, %c0_121] : memref<64x128xf32, #tpu.memory_space<vmem>>, vector<8x128xf32>
    tpu.vector_store %arg10[%331, %c0_121], %328 {strides = array<i32>} : memref<64x128xf32, #tpu.memory_space<vmem>>, vector<8x128xf32>,
    %333 = arith.index_cast %277 : i32 to index
    %c0_122 = arith.constant 0 : index
    %334 = vector.load %arg11[%333, %c0_122] : memref<64x128xf32, #tpu.memory_space<vmem>>, vector<8x128xf32>
    tpu.vector_store %arg11[%333, %c0_122], %330 {strides = array<i32>} : memref<64x128xf32, #tpu.memory_space<vmem>>, vector<8x128xf32>,
    %335 = tpu.concatenate %328, %330 in 1 : vector<8x128xf32>, vector<8x128xf32> -> vector<8x256xf32>
    %c5_i32 = arith.constant 5 : i32
    %c8_i32_123 = arith.constant 8 : i32
    %336 = arith.muli %c5_i32, %c8_i32_123 : i32
    %337 = tpu.assume_multiple %336, 8 : i32
    %c7_i32_124 = arith.constant 7 : i32
    %338 = arith.subi %c7_i32_124, %c5_i32 : i32
    %c8_i32_125 = arith.constant 8 : i32
    %339 = arith.muli %338, %c8_i32_125 : i32
    %340 = tpu.assume_multiple %339, 8 : i32
    %cst_126 = arith.constant dense<0.000000e+00> : vector<8x1024xf32>
    %341 = tpu.matmul %335, %17, %cst_126 {dimension_numbers = #tpu.dot_dimension_numbers<[1], [0], [0], [1], [0, 0, 1, 1], [], []>} : vector<8x256xf32>, vector<256x1024xf32>, vector<8x1024xf32> -> vector<8x1024xf32>
    %342 = vector.extract_strided_slice %341 {offsets = [0, 0], sizes = [8, 512], strides = [1, 1]} : vector<8x1024xf32> to vector<8x512xf32>
    %343 = arith.index_cast %337 : i32 to index
    %c0_127 = arith.constant 0 : index
    %344 = vector.load %arg14[%343, %c0_127] : memref<64x512xf32, #tpu.memory_space<vmem>>, vector<8x512xf32>
    %345 = arith.addf %342, %344 : vector<8x512xf32>
    %346 = vector.extract_strided_slice %341 {offsets = [0, 512], sizes = [8, 512], strides = [1, 1]} : vector<8x1024xf32> to vector<8x512xf32>
    %347 = arith.index_cast %340 : i32 to index
    %c0_128 = arith.constant 0 : index
    %348 = vector.load %arg15[%347, %c0_128] : memref<64x512xf32, #tpu.memory_space<vmem>>, vector<8x512xf32>
    %349 = arith.addf %346, %348 : vector<8x512xf32>
    %350 = math.tanh %345 : vector<8x512xf32>
    %351 = math.tanh %349 : vector<8x512xf32>
    %352 = vector.extract_strided_slice %350 {offsets = [0, 0], sizes = [8, 128], strides = [1, 1]} : vector<8x512xf32> to vector<8x128xf32>
    %cst_129 = arith.constant 5.000000e-01 : f32
    %353 = vector.broadcast %cst_129 : f32 to vector<8x128xf32>
    %354 = arith.mulf %352, %353 : vector<8x128xf32>
    %cst_130 = arith.constant 5.000000e-01 : f32
    %355 = vector.broadcast %cst_130 : f32 to vector<8x128xf32>
    %356 = arith.addf %354, %355 : vector<8x128xf32>
    %357 = vector.extract_strided_slice %350 {offsets = [0, 128], sizes = [8, 128], strides = [1, 1]} : vector<8x512xf32> to vector<8x128xf32>
    %cst_131 = arith.constant 5.000000e-01 : f32
    %358 = vector.broadcast %cst_131 : f32 to vector<8x128xf32>
    %359 = arith.mulf %357, %358 : vector<8x128xf32>
    %cst_132 = arith.constant 5.000000e-01 : f32
    %360 = vector.broadcast %cst_132 : f32 to vector<8x128xf32>
    %361 = arith.addf %359, %360 : vector<8x128xf32>
    %362 = vector.extract_strided_slice %350 {offsets = [0, 256], sizes = [8, 128], strides = [1, 1]} : vector<8x512xf32> to vector<8x128xf32>
    %363 = vector.extract_strided_slice %350 {offsets = [0, 384], sizes = [8, 128], strides = [1, 1]} : vector<8x512xf32> to vector<8x128xf32>
    %cst_133 = arith.constant 5.000000e-01 : f32
    %364 = vector.broadcast %cst_133 : f32 to vector<8x128xf32>
    %365 = arith.mulf %363, %364 : vector<8x128xf32>
    %cst_134 = arith.constant 5.000000e-01 : f32
    %366 = vector.broadcast %cst_134 : f32 to vector<8x128xf32>
    %367 = arith.addf %365, %366 : vector<8x128xf32>
    %368 = vector.extract_strided_slice %351 {offsets = [0, 0], sizes = [8, 128], strides = [1, 1]} : vector<8x512xf32> to vector<8x128xf32>
    %cst_135 = arith.constant 5.000000e-01 : f32
    %369 = vector.broadcast %cst_135 : f32 to vector<8x128xf32>
    %370 = arith.mulf %368, %369 : vector<8x128xf32>
    %cst_136 = arith.constant 5.000000e-01 : f32
    %371 = vector.broadcast %cst_136 : f32 to vector<8x128xf32>
    %372 = arith.addf %370, %371 : vector<8x128xf32>
    %373 = vector.extract_strided_slice %351 {offsets = [0, 128], sizes = [8, 128], strides = [1, 1]} : vector<8x512xf32> to vector<8x128xf32>
    %cst_137 = arith.constant 5.000000e-01 : f32
    %374 = vector.broadcast %cst_137 : f32 to vector<8x128xf32>
    %375 = arith.mulf %373, %374 : vector<8x128xf32>
    %cst_138 = arith.constant 5.000000e-01 : f32
    %376 = vector.broadcast %cst_138 : f32 to vector<8x128xf32>
    %377 = arith.addf %375, %376 : vector<8x128xf32>
    %378 = vector.extract_strided_slice %351 {offsets = [0, 256], sizes = [8, 128], strides = [1, 1]} : vector<8x512xf32> to vector<8x128xf32>
    %379 = vector.extract_strided_slice %351 {offsets = [0, 384], sizes = [8, 128], strides = [1, 1]} : vector<8x512xf32> to vector<8x128xf32>
    %cst_139 = arith.constant 5.000000e-01 : f32
    %380 = vector.broadcast %cst_139 : f32 to vector<8x128xf32>
    %381 = arith.mulf %379, %380 : vector<8x128xf32>
    %cst_140 = arith.constant 5.000000e-01 : f32
    %382 = vector.broadcast %cst_140 : f32 to vector<8x128xf32>
    %383 = arith.addf %381, %382 : vector<8x128xf32>
    %384 = arith.mulf %361, %323 : vector<8x128xf32>
    %385 = arith.mulf %356, %362 : vector<8x128xf32>
    %386 = arith.addf %384, %385 : vector<8x128xf32>
    %387 = arith.mulf %377, %326 : vector<8x128xf32>
    %388 = arith.mulf %372, %378 : vector<8x128xf32>
    %389 = arith.addf %387, %388 : vector<8x128xf32>
    %390 = math.tanh %386 : vector<8x128xf32>
    %391 = arith.mulf %367, %390 : vector<8x128xf32>
    %392 = math.tanh %389 : vector<8x128xf32>
    %393 = arith.mulf %383, %392 : vector<8x128xf32>
    %394 = arith.index_cast %337 : i32 to index
    %c0_141 = arith.constant 0 : index
    %395 = vector.load %arg10[%394, %c0_141] : memref<64x128xf32, #tpu.memory_space<vmem>>, vector<8x128xf32>
    tpu.vector_store %arg10[%394, %c0_141], %391 {strides = array<i32>} : memref<64x128xf32, #tpu.memory_space<vmem>>, vector<8x128xf32>,
    %396 = arith.index_cast %340 : i32 to index
    %c0_142 = arith.constant 0 : index
    %397 = vector.load %arg11[%396, %c0_142] : memref<64x128xf32, #tpu.memory_space<vmem>>, vector<8x128xf32>
    tpu.vector_store %arg11[%396, %c0_142], %393 {strides = array<i32>} : memref<64x128xf32, #tpu.memory_space<vmem>>, vector<8x128xf32>,
    %398 = tpu.concatenate %391, %393 in 1 : vector<8x128xf32>, vector<8x128xf32> -> vector<8x256xf32>
    %c6_i32 = arith.constant 6 : i32
    %c8_i32_143 = arith.constant 8 : i32
    %399 = arith.muli %c6_i32, %c8_i32_143 : i32
    %400 = tpu.assume_multiple %399, 8 : i32
    %c7_i32_144 = arith.constant 7 : i32
    %401 = arith.subi %c7_i32_144, %c6_i32 : i32
    %c8_i32_145 = arith.constant 8 : i32
    %402 = arith.muli %401, %c8_i32_145 : i32
    %403 = tpu.assume_multiple %402, 8 : i32
    %cst_146 = arith.constant dense<0.000000e+00> : vector<8x1024xf32>
    %404 = tpu.matmul %398, %17, %cst_146 {dimension_numbers = #tpu.dot_dimension_numbers<[1], [0], [0], [1], [0, 0, 1, 1], [], []>} : vector<8x256xf32>, vector<256x1024xf32>, vector<8x1024xf32> -> vector<8x1024xf32>
    %405 = vector.extract_strided_slice %404 {offsets = [0, 0], sizes = [8, 512], strides = [1, 1]} : vector<8x1024xf32> to vector<8x512xf32>
    %406 = arith.index_cast %400 : i32 to index
    %c0_147 = arith.constant 0 : index
    %407 = vector.load %arg14[%406, %c0_147] : memref<64x512xf32, #tpu.memory_space<vmem>>, vector<8x512xf32>
    %408 = arith.addf %405, %407 : vector<8x512xf32>
    %409 = vector.extract_strided_slice %404 {offsets = [0, 512], sizes = [8, 512], strides = [1, 1]} : vector<8x1024xf32> to vector<8x512xf32>
    %410 = arith.index_cast %403 : i32 to index
    %c0_148 = arith.constant 0 : index
    %411 = vector.load %arg15[%410, %c0_148] : memref<64x512xf32, #tpu.memory_space<vmem>>, vector<8x512xf32>
    %412 = arith.addf %409, %411 : vector<8x512xf32>
    %413 = math.tanh %408 : vector<8x512xf32>
    %414 = math.tanh %412 : vector<8x512xf32>
    %415 = vector.extract_strided_slice %413 {offsets = [0, 0], sizes = [8, 128], strides = [1, 1]} : vector<8x512xf32> to vector<8x128xf32>
    %cst_149 = arith.constant 5.000000e-01 : f32
    %416 = vector.broadcast %cst_149 : f32 to vector<8x128xf32>
    %417 = arith.mulf %415, %416 : vector<8x128xf32>
    %cst_150 = arith.constant 5.000000e-01 : f32
    %418 = vector.broadcast %cst_150 : f32 to vector<8x128xf32>
    %419 = arith.addf %417, %418 : vector<8x128xf32>
    %420 = vector.extract_strided_slice %413 {offsets = [0, 128], sizes = [8, 128], strides = [1, 1]} : vector<8x512xf32> to vector<8x128xf32>
    %cst_151 = arith.constant 5.000000e-01 : f32
    %421 = vector.broadcast %cst_151 : f32 to vector<8x128xf32>
    %422 = arith.mulf %420, %421 : vector<8x128xf32>
    %cst_152 = arith.constant 5.000000e-01 : f32
    %423 = vector.broadcast %cst_152 : f32 to vector<8x128xf32>
    %424 = arith.addf %422, %423 : vector<8x128xf32>
    %425 = vector.extract_strided_slice %413 {offsets = [0, 256], sizes = [8, 128], strides = [1, 1]} : vector<8x512xf32> to vector<8x128xf32>
    %426 = vector.extract_strided_slice %413 {offsets = [0, 384], sizes = [8, 128], strides = [1, 1]} : vector<8x512xf32> to vector<8x128xf32>
    %cst_153 = arith.constant 5.000000e-01 : f32
    %427 = vector.broadcast %cst_153 : f32 to vector<8x128xf32>
    %428 = arith.mulf %426, %427 : vector<8x128xf32>
    %cst_154 = arith.constant 5.000000e-01 : f32
    %429 = vector.broadcast %cst_154 : f32 to vector<8x128xf32>
    %430 = arith.addf %428, %429 : vector<8x128xf32>
    %431 = vector.extract_strided_slice %414 {offsets = [0, 0], sizes = [8, 128], strides = [1, 1]} : vector<8x512xf32> to vector<8x128xf32>
    %cst_155 = arith.constant 5.000000e-01 : f32
    %432 = vector.broadcast %cst_155 : f32 to vector<8x128xf32>
    %433 = arith.mulf %431, %432 : vector<8x128xf32>
    %cst_156 = arith.constant 5.000000e-01 : f32
    %434 = vector.broadcast %cst_156 : f32 to vector<8x128xf32>
    %435 = arith.addf %433, %434 : vector<8x128xf32>
    %436 = vector.extract_strided_slice %414 {offsets = [0, 128], sizes = [8, 128], strides = [1, 1]} : vector<8x512xf32> to vector<8x128xf32>
    %cst_157 = arith.constant 5.000000e-01 : f32
    %437 = vector.broadcast %cst_157 : f32 to vector<8x128xf32>
    %438 = arith.mulf %436, %437 : vector<8x128xf32>
    %cst_158 = arith.constant 5.000000e-01 : f32
    %439 = vector.broadcast %cst_158 : f32 to vector<8x128xf32>
    %440 = arith.addf %438, %439 : vector<8x128xf32>
    %441 = vector.extract_strided_slice %414 {offsets = [0, 256], sizes = [8, 128], strides = [1, 1]} : vector<8x512xf32> to vector<8x128xf32>
    %442 = vector.extract_strided_slice %414 {offsets = [0, 384], sizes = [8, 128], strides = [1, 1]} : vector<8x512xf32> to vector<8x128xf32>
    %cst_159 = arith.constant 5.000000e-01 : f32
    %443 = vector.broadcast %cst_159 : f32 to vector<8x128xf32>
    %444 = arith.mulf %442, %443 : vector<8x128xf32>
    %cst_160 = arith.constant 5.000000e-01 : f32
    %445 = vector.broadcast %cst_160 : f32 to vector<8x128xf32>
    %446 = arith.addf %444, %445 : vector<8x128xf32>
    %447 = arith.mulf %424, %386 : vector<8x128xf32>
    %448 = arith.mulf %419, %425 : vector<8x128xf32>
    %449 = arith.addf %447, %448 : vector<8x128xf32>
    %450 = arith.mulf %440, %389 : vector<8x128xf32>
    %451 = arith.mulf %435, %441 : vector<8x128xf32>
    %452 = arith.addf %450, %451 : vector<8x128xf32>
    %453 = math.tanh %449 : vector<8x128xf32>
    %454 = arith.mulf %430, %453 : vector<8x128xf32>
    %455 = math.tanh %452 : vector<8x128xf32>
    %456 = arith.mulf %446, %455 : vector<8x128xf32>
    %457 = arith.index_cast %400 : i32 to index
    %c0_161 = arith.constant 0 : index
    %458 = vector.load %arg10[%457, %c0_161] : memref<64x128xf32, #tpu.memory_space<vmem>>, vector<8x128xf32>
    tpu.vector_store %arg10[%457, %c0_161], %454 {strides = array<i32>} : memref<64x128xf32, #tpu.memory_space<vmem>>, vector<8x128xf32>,
    %459 = arith.index_cast %403 : i32 to index
    %c0_162 = arith.constant 0 : index
    %460 = vector.load %arg11[%459, %c0_162] : memref<64x128xf32, #tpu.memory_space<vmem>>, vector<8x128xf32>
    tpu.vector_store %arg11[%459, %c0_162], %456 {strides = array<i32>} : memref<64x128xf32, #tpu.memory_space<vmem>>, vector<8x128xf32>,
    %461 = tpu.concatenate %454, %456 in 1 : vector<8x128xf32>, vector<8x128xf32> -> vector<8x256xf32>
    %c7_i32_163 = arith.constant 7 : i32
    %c8_i32_164 = arith.constant 8 : i32
    %462 = arith.muli %c7_i32_163, %c8_i32_164 : i32
    %463 = tpu.assume_multiple %462, 8 : i32
    %c7_i32_165 = arith.constant 7 : i32
    %464 = arith.subi %c7_i32_165, %c7_i32_163 : i32
    %c8_i32_166 = arith.constant 8 : i32
    %465 = arith.muli %464, %c8_i32_166 : i32
    %466 = tpu.assume_multiple %465, 8 : i32
    %cst_167 = arith.constant dense<0.000000e+00> : vector<8x1024xf32>
    %467 = tpu.matmul %461, %17, %cst_167 {dimension_numbers = #tpu.dot_dimension_numbers<[1], [0], [0], [1], [0, 0, 1, 1], [], []>} : vector<8x256xf32>, vector<256x1024xf32>, vector<8x1024xf32> -> vector<8x1024xf32>
    %468 = vector.extract_strided_slice %467 {offsets = [0, 0], sizes = [8, 512], strides = [1, 1]} : vector<8x1024xf32> to vector<8x512xf32>
    %469 = arith.index_cast %463 : i32 to index
    %c0_168 = arith.constant 0 : index
    %470 = vector.load %arg14[%469, %c0_168] : memref<64x512xf32, #tpu.memory_space<vmem>>, vector<8x512xf32>
    %471 = arith.addf %468, %470 : vector<8x512xf32>
    %472 = vector.extract_strided_slice %467 {offsets = [0, 512], sizes = [8, 512], strides = [1, 1]} : vector<8x1024xf32> to vector<8x512xf32>
    %473 = arith.index_cast %466 : i32 to index
    %c0_169 = arith.constant 0 : index
    %474 = vector.load %arg15[%473, %c0_169] : memref<64x512xf32, #tpu.memory_space<vmem>>, vector<8x512xf32>
    %475 = arith.addf %472, %474 : vector<8x512xf32>
    %476 = math.tanh %471 : vector<8x512xf32>
    %477 = math.tanh %475 : vector<8x512xf32>
    %478 = vector.extract_strided_slice %476 {offsets = [0, 0], sizes = [8, 128], strides = [1, 1]} : vector<8x512xf32> to vector<8x128xf32>
    %cst_170 = arith.constant 5.000000e-01 : f32
    %479 = vector.broadcast %cst_170 : f32 to vector<8x128xf32>
    %480 = arith.mulf %478, %479 : vector<8x128xf32>
    %cst_171 = arith.constant 5.000000e-01 : f32
    %481 = vector.broadcast %cst_171 : f32 to vector<8x128xf32>
    %482 = arith.addf %480, %481 : vector<8x128xf32>
    %483 = vector.extract_strided_slice %476 {offsets = [0, 128], sizes = [8, 128], strides = [1, 1]} : vector<8x512xf32> to vector<8x128xf32>
    %cst_172 = arith.constant 5.000000e-01 : f32
    %484 = vector.broadcast %cst_172 : f32 to vector<8x128xf32>
    %485 = arith.mulf %483, %484 : vector<8x128xf32>
    %cst_173 = arith.constant 5.000000e-01 : f32
    %486 = vector.broadcast %cst_173 : f32 to vector<8x128xf32>
    %487 = arith.addf %485, %486 : vector<8x128xf32>
    %488 = vector.extract_strided_slice %476 {offsets = [0, 256], sizes = [8, 128], strides = [1, 1]} : vector<8x512xf32> to vector<8x128xf32>
    %489 = vector.extract_strided_slice %476 {offsets = [0, 384], sizes = [8, 128], strides = [1, 1]} : vector<8x512xf32> to vector<8x128xf32>
    %cst_174 = arith.constant 5.000000e-01 : f32
    %490 = vector.broadcast %cst_174 : f32 to vector<8x128xf32>
    %491 = arith.mulf %489, %490 : vector<8x128xf32>
    %cst_175 = arith.constant 5.000000e-01 : f32
    %492 = vector.broadcast %cst_175 : f32 to vector<8x128xf32>
    %493 = arith.addf %491, %492 : vector<8x128xf32>
    %494 = vector.extract_strided_slice %477 {offsets = [0, 0], sizes = [8, 128], strides = [1, 1]} : vector<8x512xf32> to vector<8x128xf32>
    %cst_176 = arith.constant 5.000000e-01 : f32
    %495 = vector.broadcast %cst_176 : f32 to vector<8x128xf32>
    %496 = arith.mulf %494, %495 : vector<8x128xf32>
    %cst_177 = arith.constant 5.000000e-01 : f32
    %497 = vector.broadcast %cst_177 : f32 to vector<8x128xf32>
    %498 = arith.addf %496, %497 : vector<8x128xf32>
    %499 = vector.extract_strided_slice %477 {offsets = [0, 128], sizes = [8, 128], strides = [1, 1]} : vector<8x512xf32> to vector<8x128xf32>
    %cst_178 = arith.constant 5.000000e-01 : f32
    %500 = vector.broadcast %cst_178 : f32 to vector<8x128xf32>
    %501 = arith.mulf %499, %500 : vector<8x128xf32>
    %cst_179 = arith.constant 5.000000e-01 : f32
    %502 = vector.broadcast %cst_179 : f32 to vector<8x128xf32>
    %503 = arith.addf %501, %502 : vector<8x128xf32>
    %504 = vector.extract_strided_slice %477 {offsets = [0, 256], sizes = [8, 128], strides = [1, 1]} : vector<8x512xf32> to vector<8x128xf32>
    %505 = vector.extract_strided_slice %477 {offsets = [0, 384], sizes = [8, 128], strides = [1, 1]} : vector<8x512xf32> to vector<8x128xf32>
    %cst_180 = arith.constant 5.000000e-01 : f32
    %506 = vector.broadcast %cst_180 : f32 to vector<8x128xf32>
    %507 = arith.mulf %505, %506 : vector<8x128xf32>
    %cst_181 = arith.constant 5.000000e-01 : f32
    %508 = vector.broadcast %cst_181 : f32 to vector<8x128xf32>
    %509 = arith.addf %507, %508 : vector<8x128xf32>
    %510 = arith.mulf %487, %449 : vector<8x128xf32>
    %511 = arith.mulf %482, %488 : vector<8x128xf32>
    %512 = arith.addf %510, %511 : vector<8x128xf32>
    %513 = arith.mulf %503, %452 : vector<8x128xf32>
    %514 = arith.mulf %498, %504 : vector<8x128xf32>
    %515 = arith.addf %513, %514 : vector<8x128xf32>
    %516 = math.tanh %512 : vector<8x128xf32>
    %517 = arith.mulf %493, %516 : vector<8x128xf32>
    %518 = math.tanh %515 : vector<8x128xf32>
    %519 = arith.mulf %509, %518 : vector<8x128xf32>
    %520 = arith.index_cast %463 : i32 to index
    %c0_182 = arith.constant 0 : index
    %521 = vector.load %arg10[%520, %c0_182] : memref<64x128xf32, #tpu.memory_space<vmem>>, vector<8x128xf32>
    tpu.vector_store %arg10[%520, %c0_182], %517 {strides = array<i32>} : memref<64x128xf32, #tpu.memory_space<vmem>>, vector<8x128xf32>,
    %522 = arith.index_cast %466 : i32 to index
    %c0_183 = arith.constant 0 : index
    %523 = vector.load %arg11[%522, %c0_183] : memref<64x128xf32, #tpu.memory_space<vmem>>, vector<8x128xf32>
    tpu.vector_store %arg11[%522, %c0_183], %519 {strides = array<i32>} : memref<64x128xf32, #tpu.memory_space<vmem>>, vector<8x128xf32>,
    %524 = tpu.concatenate %517, %519 in 1 : vector<8x128xf32>, vector<8x128xf32> -> vector<8x256xf32>
    %c8_i32_184 = arith.constant 8 : i32
    %c0_185 = arith.constant 0 : index
    %c0_186 = arith.constant 0 : index
    %525 = vector.load %arg16[%c0_185, %c0_186] : memref<8x256xf32, #tpu.memory_space<vmem>>, vector<8x256xf32>
    tpu.vector_store %arg16[%c0_185, %c0_186], %524 {strides = array<i32>} : memref<8x256xf32, #tpu.memory_space<vmem>>, vector<8x256xf32>,
    %c0_187 = arith.constant 0 : index
    %c0_188 = arith.constant 0 : index
    %526 = vector.load %arg17[%c0_187, %c0_188] : memref<8x256xf32, #tpu.memory_space<vmem>>, vector<8x128xf32>
    tpu.vector_store %arg17[%c0_187, %c0_188], %512 {strides = array<i32>} : memref<8x256xf32, #tpu.memory_space<vmem>>, vector<8x128xf32>,
    %c0_189 = arith.constant 0 : index
    %c128_190 = arith.constant 128 : index
    %527 = vector.load %arg17[%c0_189, %c128_190] : memref<8x256xf32, #tpu.memory_space<vmem>>, vector<8x128xf32>
    tpu.vector_store %arg17[%c0_189, %c128_190], %515 {strides = array<i32>} : memref<8x256xf32, #tpu.memory_space<vmem>>, vector<8x128xf32>,
    %c0_i32_191 = arith.constant 0 : i32
    %528 = arith.cmpi eq, %arg0, %c0_i32_191 : i32
    %529 = arith.extui %528 : i1 to i32
    %c0_i32_192 = arith.constant 0 : i32
    %530 = arith.cmpi ne, %529, %c0_i32_192 : i32
    scf.if %530 {
      %c0_193 = arith.constant 0 : index
      %c0_194 = arith.constant 0 : index
      %531 = vector.load %arg16[%c0_193, %c0_194] : memref<8x256xf32, #tpu.memory_space<vmem>>, vector<8x128xf32>
      %c0_195 = arith.constant 0 : index
      %c0_196 = arith.constant 0 : index
      %c0_197 = arith.constant 0 : index
      %532 = vector.load %arg12[%c0_195, %c0_196, %c0_197] : memref<2x8x128xf32, #tpu.memory_space<vmem>>, vector<1x8x128xf32>
      %533 = vector.shape_cast %532 : vector<1x8x128xf32> to vector<8x128xf32>
      %534 = vector.shape_cast %531 : vector<8x128xf32> to vector<1x8x128xf32>
      tpu.vector_store %arg12[%c0_195, %c0_196, %c0_197], %534 {strides = array<i32>} : memref<2x8x128xf32, #tpu.memory_space<vmem>>, vector<1x8x128xf32>,
      %c0_198 = arith.constant 0 : index
      %c128_199 = arith.constant 128 : index
      %535 = vector.load %arg16[%c0_198, %c128_199] : memref<8x256xf32, #tpu.memory_space<vmem>>, vector<8x128xf32>
      %c1 = arith.constant 1 : index
      %c0_200 = arith.constant 0 : index
      %c0_201 = arith.constant 0 : index
      %536 = vector.load %arg12[%c1, %c0_200, %c0_201] : memref<2x8x128xf32, #tpu.memory_space<vmem>>, vector<1x8x128xf32>
      %537 = vector.shape_cast %536 : vector<1x8x128xf32> to vector<8x128xf32>
      %538 = vector.shape_cast %535 : vector<8x128xf32> to vector<1x8x128xf32>
      tpu.vector_store %arg12[%c1, %c0_200, %c0_201], %538 {strides = array<i32>} : memref<2x8x128xf32, #tpu.memory_space<vmem>>, vector<1x8x128xf32>,
      %c0_202 = arith.constant 0 : index
      %c0_203 = arith.constant 0 : index
      %539 = vector.load %arg17[%c0_202, %c0_203] : memref<8x256xf32, #tpu.memory_space<vmem>>, vector<8x128xf32>
      %c0_204 = arith.constant 0 : index
      %c0_205 = arith.constant 0 : index
      %c0_206 = arith.constant 0 : index
      %540 = vector.load %arg13[%c0_204, %c0_205, %c0_206] : memref<2x8x128xf32, #tpu.memory_space<vmem>>, vector<1x8x128xf32>
      %541 = vector.shape_cast %540 : vector<1x8x128xf32> to vector<8x128xf32>
      %542 = vector.shape_cast %539 : vector<8x128xf32> to vector<1x8x128xf32>
      tpu.vector_store %arg13[%c0_204, %c0_205, %c0_206], %542 {strides = array<i32>} : memref<2x8x128xf32, #tpu.memory_space<vmem>>, vector<1x8x128xf32>,
      %c0_207 = arith.constant 0 : index
      %c128_208 = arith.constant 128 : index
      %543 = vector.load %arg17[%c0_207, %c128_208] : memref<8x256xf32, #tpu.memory_space<vmem>>, vector<8x128xf32>
      %c1_209 = arith.constant 1 : index
      %c0_210 = arith.constant 0 : index
      %c0_211 = arith.constant 0 : index
      %544 = vector.load %arg13[%c1_209, %c0_210, %c0_211] : memref<2x8x128xf32, #tpu.memory_space<vmem>>, vector<1x8x128xf32>
      %545 = vector.shape_cast %544 : vector<1x8x128xf32> to vector<8x128xf32>
      %546 = vector.shape_cast %543 : vector<8x128xf32> to vector<1x8x128xf32>
      tpu.vector_store %arg13[%c1_209, %c0_210, %c0_211], %546 {strides = array<i32>} : memref<2x8x128xf32, #tpu.memory_space<vmem>>, vector<1x8x128xf32>,
    } else {
    }
    return
  }
  func.func @transform_0(%arg0: i32) -> (i32, i32) {
    %c0_i32 = arith.constant 0 : i32
    %c0_i32_0 = arith.constant 0 : i32
    return %arg0, %c0_i32 : i32, i32
  }
  func.func @transform_1(%arg0: i32) -> (i32, i32) {
    %c0_i32 = arith.constant 0 : i32
    %0 = arith.subi %c0_i32, %arg0 : i32
    %c0_i32_0 = arith.constant 0 : i32
    %c0_i32_1 = arith.constant 0 : i32
    return %0, %c0_i32_0 : i32, i32
  }
  func.func @transform_2(%arg0: i32) -> (i32, i32) {
    %c0_i32 = arith.constant 0 : i32
    %c0_i32_0 = arith.constant 0 : i32
    %c0_i32_1 = arith.constant 0 : i32
    return %c0_i32, %c0_i32_0 : i32, i32
  }
  func.func @transform_3(%arg0: i32) -> (i32, i32) {
    %c0_i32 = arith.constant 0 : i32
    %c0_i32_0 = arith.constant 0 : i32
    %c0_i32_1 = arith.constant 0 : i32
    return %c0_i32, %c0_i32_0 : i32, i32
  }
  func.func @transform_4(%arg0: i32) -> (i32, i32) {
    %c0_i32 = arith.constant 0 : i32
    %c0_i32_0 = arith.constant 0 : i32
    %c0_i32_1 = arith.constant 0 : i32
    return %c0_i32, %c0_i32_0 : i32, i32
  }
  func.func @transform_5(%arg0: i32) -> (i32, i32) {
    %c0_i32 = arith.constant 0 : i32
    %c0_i32_0 = arith.constant 0 : i32
    %c0_i32_1 = arith.constant 0 : i32
    return %c0_i32, %c0_i32_0 : i32, i32
  }
  func.func @transform_6(%arg0: i32) -> (i32, i32) {
    %c0_i32 = arith.constant 0 : i32
    %c0_i32_0 = arith.constant 0 : i32
    %c0_i32_1 = arith.constant 0 : i32
    return %c0_i32, %c0_i32_0 : i32, i32
  }
  func.func @transform_7(%arg0: i32) -> (i32, i32, i32) {
    %c0_i32 = arith.constant 0 : i32
    %c0_i32_0 = arith.constant 0 : i32
    %c0_i32_1 = arith.constant 0 : i32
    %c0_i32_2 = arith.constant 0 : i32
    return %c0_i32, %c0_i32_0, %c0_i32_1 : i32, i32, i32
  }
  func.func @transform_8(%arg0: i32) -> (i32, i32, i32) {
    %c0_i32 = arith.constant 0 : i32
    %c0_i32_0 = arith.constant 0 : i32
    %c0_i32_1 = arith.constant 0 : i32
    %c0_i32_2 = arith.constant 0 : i32
    return %c0_i32, %c0_i32_0, %c0_i32_1 : i32, i32, i32
  }
  func.func @transform_9(%arg0: i32) -> (i32, i32) {
    %c0_i32 = arith.constant 0 : i32
    %c0_i32_0 = arith.constant 0 : i32
    return %arg0, %c0_i32 : i32, i32
  }
  func.func @transform_10(%arg0: i32) -> (i32, i32) {
    %c0_i32 = arith.constant 0 : i32
    %0 = arith.subi %c0_i32, %arg0 : i32
    %c0_i32_0 = arith.constant 0 : i32
    %c0_i32_1 = arith.constant 0 : i32
    return %0, %c0_i32_0 : i32, i32
  }
  func.func @transform_11(%arg0: i32) -> (i32, i32, i32) {
    %c0_i32 = arith.constant 0 : i32
    %c0_i32_0 = arith.constant 0 : i32
    %c0_i32_1 = arith.constant 0 : i32
    %c0_i32_2 = arith.constant 0 : i32
    return %c0_i32, %c0_i32_0, %c0_i32_1 : i32, i32, i32
  }
  func.func @transform_12(%arg0: i32) -> (i32, i32, i32) {
    %c0_i32 = arith.constant 0 : i32
    %c0_i32_0 = arith.constant 0 : i32
    %c0_i32_1 = arith.constant 0 : i32
    %c0_i32_2 = arith.constant 0 : i32
    return %c0_i32, %c0_i32_0, %c0_i32_1 : i32, i32, i32
  }
}

</mosaic_0001>

<llo_original>
// kernel: tpu_custom_call.1
$region0: #{tpu_custom_call.1}
  #allocation0 [shape = 'u32[]', space=smem, size = 0x4, offset = 0x4, fixed_abs, tag = 'smem constant byte address 0x4 - core index']
  #allocation1 [shape = 'u32[144,128]{1,0:T(1,128)}', space=vmem, size = 0x12000, scoped, tag = 'internal scratch']
  %s0 = inlined_call_operand.hbm [shape: f32[8,128], index: 0, kind: input, shape index: {}]
  %s1 = inlined_call_operand.hbm [shape: f32[16,128], index: 1, kind: output, shape index: {}]
  %s2 = sld [smem:[#allocation0]]
  $region41: #{tpu_custom_call.1} parent=0
    _
  %s4 = ssub.s32 1, %s2
  %s5 = scalar_select 0, %s4, %s2
  $region1: #{tpu_custom_call.1} parent=0
    #allocation2 [shape = 'u8[4096]{0}', space=vmem, size = 0x1000, scoped, tag = 'input window, operand 0, single buffered']
    #allocation3 [shape = 's32[2]{0}', space=sflag, size = 0x8, scoped, tag = 'scoped memory for tpu_custom_call.1']
    #allocation4 [shape = 's32[2]{0}', space=sflag, size = 0x8, scoped, tag = 'scoped memory for tpu_custom_call.1']
    #allocation5 [shape = 'u8[8192]{0}', space=vmem, size = 0x2000, scoped, tag = 'output window, operand 0']
    %6 = vsyncpa [#allocation3], 0
    %7 = vsyncpa [#allocation4], 0
    %s8 = scalar_lea.sflag [#allocation4], 1
    %9 = vsyncpa %s8, 0
    loop: start=0, step=1, limit=4
    $region2: #{tpu_custom_call.1} parent=1 // loop_pre_header
      _
    $region3: #{tpu_custom_call.1} parent=1 // loop_header
      %s11 = sphi 0, %s15
      %p12 = scmp.ge.s32.totalorder %s11, 4
      %s19 = sphi 0, %s19
      %s21 = sphi 0, %s19
      %s22 = sphi 0, %s21
      %s36 = sphi 0, %s22
      %s42 = sphi 0, %s44
      %s45 = sphi 0, %s42
      %s46 = sphi 0, %s45
      %s62 = sphi 0, %s46
    $region4: #{tpu_custom_call.1} parent=1 // loop_header_branch
      %14 = sbr.rel (%p12) target = $region8
    $region5: #{tpu_custom_call.1} parent=1 // loop_body
      %s16 = ssub.s32 %s11, 1
      %s17 = ssub.s32 %s11, 2
      %s18 = sadd.s32 %s11, 1
      %s20 = sadd.s32 %s19, 1
      %p23 = scmp.eq.s32.totalorder %s11, 1
      %p24 = scmp.ne.s32.totalorder %s19, %s21
      %p25 = scmp.eq.s32.totalorder %s11, 0
      %p26 = por %p24, %p25
      %p27 = scmp.ne.s32.totalorder %s19, %s21
      %p28 = scmp.eq.s32.totalorder %s16, 1
      %p29 = por %p27, %p28
      %p30 = scmp.ne.s32.totalorder %s21, %s22
      %p31 = scmp.eq.s32.totalorder %s16, 0
      %p32 = por %p30, %p31
      %p33 = scmp.ne.s32.totalorder %s21, %s22
      %p34 = scmp.eq.s32.totalorder %s17, 1
      %p35 = por %p33, %p34
      %p37 = scmp.ne.s32.totalorder %s22, %s36
      %p38 = scmp.eq.s32.totalorder %s17, 0
      %p39 = por %p37, %p38
      %s40 = ssub.s32 %s11, %s18
      %p41 = scmp.eq.s32.totalorder %s40, 0
      %s43 = sadd.s32 %s42, 1
      %s44 = scalar_select %p41, %s42, %s43
      %p47 = pneg %p41
      %p48 = scmp.eq.s32.totalorder %s11, 1
      %p49 = por %p47, %p48
      %p50 = scmp.ne.s32.totalorder %s42, %s45
      %p51 = scmp.eq.s32.totalorder %s11, 0
      %p52 = por %p50, %p51
      %p53 = scmp.ne.s32.totalorder %s42, %s45
      %p54 = scmp.eq.s32.totalorder %s16, 1
      %p55 = por %p53, %p54
      %p56 = scmp.ne.s32.totalorder %s45, %s46
      %p57 = scmp.eq.s32.totalorder %s16, 0
      %p58 = por %p56, %p57
      %p59 = scmp.ne.s32.totalorder %s45, %s46
      %p60 = scmp.eq.s32.totalorder %s17, 1
      %p61 = por %p59, %p60
      %p63 = scmp.ne.s32.totalorder %s46, %s62
      %p64 = scmp.eq.s32.totalorder %s17, 0
      %p65 = por %p63, %p64
      %p66 = scmp.le.s32.totalorder 1, %s11
      %p67 = scmp.lt.s32.totalorder %s11, 3
      %p68 = pnand %p66, %p67
      %p69 = pneg %p68
      // Predicated region
      $region9: #{tpu_custom_call.1} parent=5 // pred_check
        _
      $region10: #{tpu_custom_call.1} parent=5 // pred_check_branch
        %71 = sbr.rel (%p68) target = $region12
      $region11: #{tpu_custom_call.1} parent=5 // pred_region
        %s72 = ssub.s32 %s11, 1
        // Predicated region
        $region13: #{tpu_custom_call.1} parent=11 // pred_check
          %p73 = pneg %p32
        $region14: #{tpu_custom_call.1} parent=11 // pred_check_branch
          %75 = sbr.rel (%p73) target = $region16
        $region15: #{tpu_custom_call.1} parent=11 // pred_region
          %s77 = ssub.s32 128, 128
          %78 = vsyncadd [#allocation3], %s77
          %s80 = sshll.u32 [#allocation2], 4
          %s81 = int_to_ptr.vmem [resolvable:$true] %s80
          %83 = dma.hbm_to_vmem [thread:$0]  %s0, 128, %s81, [#allocation3]
        $region16: #{tpu_custom_call.1} parent=11 // pred_fallthru
          _
      $region12: #{tpu_custom_call.1} parent=5 // pred_fallthru
        _
      %p84 = scmp.lt.s32.totalorder %s11, 2
      // Predicated region
      $region17: #{tpu_custom_call.1} parent=5 // pred_check
        %p85 = pneg %p84
      $region18: #{tpu_custom_call.1} parent=5 // pred_check_branch
        %87 = sbr.rel (%p85) target = $region20
      $region19: #{tpu_custom_call.1} parent=5 // pred_region
        _
      $region20: #{tpu_custom_call.1} parent=5 // pred_fallthru
        _
      %p88 = scmp.le.s32.totalorder 1, %s11
      %p89 = scmp.lt.s32.totalorder %s11, 3
      %p90 = pnand %p88, %p89
      %p91 = pneg %p90
      // Predicated region
      $region21: #{tpu_custom_call.1} parent=5 // pred_check
        _
      $region22: #{tpu_custom_call.1} parent=5 // pred_check_branch
        %93 = sbr.rel (%p90) target = $region24
      $region23: #{tpu_custom_call.1} parent=5 // pred_region
        %s94 = ssub.s32 %s11, 1
        // Predicated region
        $region25: #{tpu_custom_call.1} parent=23 // pred_check
          %p95 = pneg %p32
        $region26: #{tpu_custom_call.1} parent=23 // pred_check_branch
          %97 = sbr.rel (%p95) target = $region28
        $region27: #{tpu_custom_call.1} parent=23 // pred_region
          %98 = dma.done [#allocation3], 128
        $region28: #{tpu_custom_call.1} parent=23 // pred_fallthru
          _
        %p99 = pneg %p32
        %p100 = pneg %p29
        %p101 = pneg %p58
        %p102 = pneg %p55
        %s103 = sand.u32 %s45, 1
        %s104 = scalar_lea.sflag [#allocation4], %s103
        %s105 = sand.u32 %s45, 1
        %s106 = smul.addr %s105, 8
        %s107 = scalar_lea.vmem [#allocation5], %s106
        %v108 = vld [vmem:[#allocation2] sm:$0xff]
        %v109 = vmul.f32 %v108, 2.0
        %110 = vst [vmem:[%s107] sm:$0xff] %v109
        %s111 = sand.u32 %s45, 1
        %s112 = scalar_lea.sflag [#allocation4], %s111
        %s113 = sand.u32 %s45, 1
        %s114 = smul.addr %s113, 8
        %s115 = scalar_lea.vmem [#allocation5], %s114
        // Predicated region
        $region29: #{tpu_custom_call.1} parent=23 // pred_check
          %p116 = pneg %p55
        $region30: #{tpu_custom_call.1} parent=23 // pred_check_branch
          %118 = sbr.rel (%p116) target = $region32
        $region31: #{tpu_custom_call.1} parent=23 // pred_region
          %s120 = ssub.s32 128, 128
          %121 = vsyncadd %s112, %s120
          %s122 = smul.addr %s16, 128
          %s123 = scalar_lea.hbm %s1, %s122
          %s125 = sshll.u32 %s115, 4
          %s126 = int_to_ptr.vmem [resolvable:$true] %s125
          %128 = dma.vmem_to_hbm [thread:$0]  %s126, 128, %s123, %s112
        $region32: #{tpu_custom_call.1} parent=23 // pred_fallthru
          _
      $region24: #{tpu_custom_call.1} parent=5 // pred_fallthru
        _
      %p129 = scmp.le.s32.totalorder 2, %s11
      // Predicated region
      $region33: #{tpu_custom_call.1} parent=5 // pred_check
        %p130 = pneg %p129
      $region34: #{tpu_custom_call.1} parent=5 // pred_check_branch
        %132 = sbr.rel (%p130) target = $region36
      $region35: #{tpu_custom_call.1} parent=5 // pred_region
        %s133 = ssub.s32 %s11, 2
        // Predicated region
        $region37: #{tpu_custom_call.1} parent=35 // pred_check
          %p134 = pneg %p61
        $region38: #{tpu_custom_call.1} parent=35 // pred_check_branch
          %136 = sbr.rel (%p134) target = $region40
        $region39: #{tpu_custom_call.1} parent=35 // pred_region
          %s137 = sand.u32 %s46, 1
          %s138 = scalar_lea.sflag [#allocation4], %s137
          %s139 = sand.u32 %s46, 1
          %s140 = smul.addr %s139, 8
          %s141 = scalar_lea.vmem [#allocation5], %s140
          %142 = dma.done %s138, 128
        $region40: #{tpu_custom_call.1} parent=35 // pred_fallthru
          _
      $region36: #{tpu_custom_call.1} parent=5 // pred_fallthru
        _
    $region6: #{tpu_custom_call.1} parent=1 // loop_footer
      %s15 = sadd.s32 1, %s11
    $region7: #{tpu_custom_call.1} parent=1 // loop_footer_branch
      %10 = sbr.rel target = $region3
    $region8: #{tpu_custom_call.1} parent=1 // loop_exit
      _
    %143 = vsyncpa [#allocation3], 1
    %s144 = scalar_lea.sflag [#allocation3], 1
    %145 = vsyncpa %s144, 1
    %146 = vsyncpa [#allocation4], 1
    %s147 = scalar_lea.sflag [#allocation4], 1
    %148 = vsyncpa %s147, 1

// kernel: tpu_custom_call.1
$region0: #{tpu_custom_call.1}
  #allocation0 [shape = 'u32[]', space=smem, size = 0x4, offset = 0x4, fixed_abs, tag = 'smem constant byte address 0x4 - core index']
  #allocation1 [shape = 'u32[144,128]{1,0:T(1,128)}', space=vmem, size = 0x12000, scoped, tag = 'internal scratch']
  #allocation2 [shape = 'f32[64,512]{1,0:T(8,128)}', space=vmem, size = 0x20000, scoped, tag = 'scratch operand']
  #allocation3 [shape = 'f32[64,512]{1,0:T(8,128)}', space=vmem, size = 0x20000, scoped, tag = 'scratch operand']
  #allocation4 [shape = 'f32[8,256]{1,0:T(8,128)}', space=vmem, size = 0x2000, scoped, tag = 'scratch operand']
  #allocation5 [shape = 'f32[8,256]{1,0:T(8,128)}', space=vmem, size = 0x2000, scoped, tag = 'scratch operand']
  %s0 = inlined_call_operand.hbm [shape: f32[64,128], index: 0, kind: input, shape index: {}]
  %s1 = inlined_call_operand.hbm [shape: f32[64,128], index: 1, kind: input, shape index: {}]
  %s2 = inlined_call_operand.hbm [shape: f32[128,512], index: 2, kind: input, shape index: {}]
  %s3 = inlined_call_operand.hbm [shape: f32[128,512], index: 3, kind: input, shape index: {}]
  %s4 = inlined_call_operand.hbm [shape: f32[256,1024], index: 4, kind: input, shape index: {}]
  %s5 = inlined_call_operand.vmem [shape: f32[1,512], index: 5, kind: input, shape index: {}]
  %s6 = inlined_call_operand.vmem [shape: f32[1,512], index: 6, kind: input, shape index: {}]
  %s7 = inlined_call_operand.hbm [shape: f32[2,8,128], index: 7, kind: input, shape index: {}]
  %s8 = inlined_call_operand.hbm [shape: f32[2,8,128], index: 8, kind: input, shape index: {}]
  %s9 = inlined_call_operand.hbm [shape: f32[64,128], index: 9, kind: output, shape index: {0}]
  %s10 = inlined_call_operand.hbm [shape: f32[64,128], index: 10, kind: output, shape index: {1}]
  %s11 = inlined_call_operand.hbm [shape: f32[2,8,128], index: 11, kind: output, shape index: {2}]
  %s12 = inlined_call_operand.hbm [shape: f32[2,8,128], index: 12, kind: output, shape index: {3}]
  %13 = xla_tuple %s9, %s10, %s11, %s12
  %s14 = sld [smem:[#allocation0]]
  $region106: #{tpu_custom_call.1} parent=0
    _
  %s16 = ssub.s32 1, %s14
  %s17 = scalar_select 0, %s16, %s14
  $region1: #{tpu_custom_call.1} parent=0
    #allocation6 [shape = 'u8[32768]{0}', space=vmem, size = 0x8000, scoped, tag = 'input window, operand 0, single buffered']
    #allocation7 [shape = 's32[1]{0}', space=sflag, size = 0x4, scoped, tag = 'scoped memory for tpu_custom_call.1']
    #allocation8 [shape = 's32[1]{0}', space=sflag, size = 0x4, scoped, tag = 'scoped memory for tpu_custom_call.1']
    #allocation9 [shape = 'u8[32768]{0}', space=vmem, size = 0x8000, scoped, tag = 'input window, operand 1, single buffered']
    #allocation10 [shape = 's32[1]{0}', space=sflag, size = 0x4, scoped, tag = 'scoped memory for tpu_custom_call.1']
    #allocation11 [shape = 'u8[262144]{0}', space=vmem, size = 0x40000, scoped, tag = 'input window, operand 2, single buffered']
    #allocation12 [shape = 'u8[262144]{0}', space=vmem, size = 0x40000, scoped, tag = 'input window, operand 3, single buffered']
    #allocation13 [shape = 's32[1]{0}', space=sflag, size = 0x4, scoped, tag = 'scoped memory for tpu_custom_call.1']
    #allocation14 [shape = 'u8[1048576]{0}', space=vmem, size = 0x100000, scoped, tag = 'input window, operand 4, single buffered']
    #allocation15 [shape = 'u8[8192]{0}', space=vmem, size = 0x2000, scoped, tag = 'input window, operand 7, single buffered']
    #allocation16 [shape = 's32[1]{0}', space=sflag, size = 0x4, scoped, tag = 'scoped memory for tpu_custom_call.1']
    #allocation17 [shape = 'u8[8192]{0}', space=vmem, size = 0x2000, scoped, tag = 'input window, operand 8, single buffered']
    #allocation18 [shape = 'u8[32768]{0}', space=vmem, size = 0x8000, scoped, tag = 'output window, operand 0, single buffered']
    #allocation19 [shape = 'u8[32768]{0}', space=vmem, size = 0x8000, scoped, tag = 'output window, operand 1, single buffered']
    #allocation20 [shape = 's32[1]{0}', space=sflag, size = 0x4, scoped, tag = 'scoped memory for tpu_custom_call.1']
    #allocation21 [shape = 'u8[8192]{0}', space=vmem, size = 0x2000, scoped, tag = 'output window, operand 2, single buffered']
    #allocation22 [shape = 'u8[8192]{0}', space=vmem, size = 0x2000, scoped, tag = 'output window, operand 3, single buffered']
    #allocation23 [shape = 's32[1]{0}', space=sflag, size = 0x4, scoped, tag = 'scoped memory for tpu_custom_call.1']
    %18 = vsyncpa [#allocation7], 0
    %19 = vsyncpa [#allocation10], 0
    %20 = vsyncpa [#allocation13], 0
    %21 = vsyncpa [#allocation16], 0
    %22 = vsyncpa [#allocation8], 0
    %23 = vsyncpa [#allocation20], 0
    %24 = vsyncpa [#allocation23], 0
    // Predicated region
    $region2: #{tpu_custom_call.1} parent=1 // pred_check
      _
    $region3: #{tpu_custom_call.1} parent=1 // pred_check_branch
      %26 = sbr.rel (0) target = $region5
    $region4: #{tpu_custom_call.1} parent=1 // pred_region
      %s28 = ssub.s32 1024, 1024
      %29 = vsyncadd [#allocation7], %s28
      %s30 = sshll.u32 [#allocation6], 4
      %s31 = int_to_ptr.vmem [resolvable:$true] %s30
      %36 = dma.hbm_to_vmem [thread:$0]  %s0, 1024, %s31, [#allocation7], 128, 128, 8
    $region5: #{tpu_custom_call.1} parent=1 // pred_fallthru
      _
    // Predicated region
    $region6: #{tpu_custom_call.1} parent=1 // pred_check
      _
    $region7: #{tpu_custom_call.1} parent=1 // pred_check_branch
      %38 = sbr.rel (0) target = $region9
    $region8: #{tpu_custom_call.1} parent=1 // pred_region
      %s39 = ssub.s32 0, 0
      %s40 = smul.u32 8, %s39
      %s42 = ssub.s32 1024, 1024
      %43 = vsyncadd [#allocation10], %s42
      %s44 = smul.addr %s40, 128
      %s45 = scalar_lea.hbm %s1, %s44
      %s46 = sshll.u32 [#allocation9], 4
      %s47 = int_to_ptr.vmem [resolvable:$true] %s46
      %52 = dma.hbm_to_vmem [thread:$0]  %s45, 1024, %s47, [#allocation10], 128, 128, 8
    $region9: #{tpu_custom_call.1} parent=1 // pred_fallthru
      _
    // Predicated region
    $region10: #{tpu_custom_call.1} parent=1 // pred_check
      _
    $region11: #{tpu_custom_call.1} parent=1 // pred_check_branch
      %54 = sbr.rel (0) target = $region13
    $region12: #{tpu_custom_call.1} parent=1 // pred_region
      %s56 = ssub.s32 8192, 8192
      %57 = vsyncadd [#allocation10], %s56
      %s58 = sshll.u32 [#allocation11], 4
      %s59 = int_to_ptr.vmem [resolvable:$true] %s58
      %64 = dma.hbm_to_vmem [thread:$0]  %s2, 8192, %s59, [#allocation10], 512, 512, 32
    $region13: #{tpu_custom_call.1} parent=1 // pred_fallthru
      _
    // Predicated region
    $region14: #{tpu_custom_call.1} parent=1 // pred_check
      _
    $region15: #{tpu_custom_call.1} parent=1 // pred_check_branch
      %66 = sbr.rel (0) target = $region17
    $region16: #{tpu_custom_call.1} parent=1 // pred_region
      %s68 = ssub.s32 8192, 8192
      %69 = vsyncadd [#allocation13], %s68
      %s70 = sshll.u32 [#allocation12], 4
      %s71 = int_to_ptr.vmem [resolvable:$true] %s70
      %76 = dma.hbm_to_vmem [thread:$0]  %s3, 8192, %s71, [#allocation13], 512, 512, 32
    $region17: #{tpu_custom_call.1} parent=1 // pred_fallthru
      _
    // Predicated region
    $region18: #{tpu_custom_call.1} parent=1 // pred_check
      _
    $region19: #{tpu_custom_call.1} parent=1 // pred_check_branch
      %78 = sbr.rel (0) target = $region21
    $region20: #{tpu_custom_call.1} parent=1 // pred_region
      %s80 = ssub.s32 32768, 32768
      %81 = vsyncadd [#allocation13], %s80
      %s82 = sshll.u32 [#allocation14], 4
      %s83 = int_to_ptr.vmem [resolvable:$true] %s82
      %88 = dma.hbm_to_vmem [thread:$0]  %s4, 32768, %s83, [#allocation13], 1024, 1024, 64
    $region21: #{tpu_custom_call.1} parent=1 // pred_fallthru
      _
    // Predicated region
    $region22: #{tpu_custom_call.1} parent=1 // pred_check
      _
    $region23: #{tpu_custom_call.1} parent=1 // pred_check_branch
      %90 = sbr.rel (0) target = $region25
    $region24: #{tpu_custom_call.1} parent=1 // pred_region
      _
    $region25: #{tpu_custom_call.1} parent=1 // pred_fallthru
      _
    // Predicated region
    $region26: #{tpu_custom_call.1} parent=1 // pred_check
      _
    $region27: #{tpu_custom_call.1} parent=1 // pred_check_branch
      %92 = sbr.rel (0) target = $region29
    $region28: #{tpu_custom_call.1} parent=1 // pred_region
      _
    $region29: #{tpu_custom_call.1} parent=1 // pred_fallthru
      _
    // Predicated region
    $region30: #{tpu_custom_call.1} parent=1 // pred_check
      _
    $region31: #{tpu_custom_call.1} parent=1 // pred_check_branch
      %94 = sbr.rel (0) target = $region33
    $region32: #{tpu_custom_call.1} parent=1 // pred_region
      %s96 = ssub.s32 256, 256
      %97 = vsyncadd [#allocation16], %s96
      %s98 = sshll.u32 [#allocation15], 4
      %s99 = int_to_ptr.vmem [resolvable:$true] %s98
      %104 = dma.hbm_to_vmem [thread:$0]  %s7, 256, %s99, [#allocation16], 128, 128, 8
    $region33: #{tpu_custom_call.1} parent=1 // pred_fallthru
      _
    // Predicated region
    $region34: #{tpu_custom_call.1} parent=1 // pred_check
      _
    $region35: #{tpu_custom_call.1} parent=1 // pred_check_branch
      %106 = sbr.rel (0) target = $region37
    $region36: #{tpu_custom_call.1} parent=1 // pred_region
      %s108 = ssub.s32 256, 256
      %109 = vsyncadd [#allocation16], %s108
      %s110 = sshll.u32 [#allocation17], 4
      %s111 = int_to_ptr.vmem [resolvable:$true] %s110
      %116 = dma.hbm_to_vmem [thread:$0]  %s8, 256, %s111, [#allocation16], 128, 128, 8
    $region37: #{tpu_custom_call.1} parent=1 // pred_fallthru
      _
    // Predicated region
    $region38: #{tpu_custom_call.1} parent=1 // pred_check
      _
    $region39: #{tpu_custom_call.1} parent=1 // pred_check_branch
      %118 = sbr.rel (0) target = $region41
    $region40: #{tpu_custom_call.1} parent=1 // pred_region
      %119 = dma.done [#allocation7], 1024
    $region41: #{tpu_custom_call.1} parent=1 // pred_fallthru
      _
    // Predicated region
    $region42: #{tpu_custom_call.1} parent=1 // pred_check
      _
    $region43: #{tpu_custom_call.1} parent=1 // pred_check_branch
      %121 = sbr.rel (0) target = $region45
    $region44: #{tpu_custom_call.1} parent=1 // pred_region
      %122 = dma.done [#allocation10], 1024
    $region45: #{tpu_custom_call.1} parent=1 // pred_fallthru
      _
    // Predicated region
    $region46: #{tpu_custom_call.1} parent=1 // pred_check
      _
    $region47: #{tpu_custom_call.1} parent=1 // pred_check_branch
      %124 = sbr.rel (0) target = $region49
    $region48: #{tpu_custom_call.1} parent=1 // pred_region
      %125 = dma.done [#allocation10], 8192
    $region49: #{tpu_custom_call.1} parent=1 // pred_fallthru
      _
    // Predicated region
    $region50: #{tpu_custom_call.1} parent=1 // pred_check
      _
    $region51: #{tpu_custom_call.1} parent=1 // pred_check_branch
      %127 = sbr.rel (0) target = $region53
    $region52: #{tpu_custom_call.1} parent=1 // pred_region
      %128 = dma.done [#allocation13], 8192
    $region53: #{tpu_custom_call.1} parent=1 // pred_fallthru
      _
    // Predicated region
    $region54: #{tpu_custom_call.1} parent=1 // pred_check
      _
    $region55: #{tpu_custom_call.1} parent=1 // pred_check_branch
      %130 = sbr.rel (0) target = $region57
    $region56: #{tpu_custom_call.1} parent=1 // pred_region
      %131 = dma.done [#allocation13], 32768
    $region57: #{tpu_custom_call.1} parent=1 // pred_fallthru
      _
    // Predicated region
    $region58: #{tpu_custom_call.1} parent=1 // pred_check
      _
    $region59: #{tpu_custom_call.1} parent=1 // pred_check_branch
      %133 = sbr.rel (0) target = $region61
    $region60: #{tpu_custom_call.1} parent=1 // pred_region
      %134 = dma.done [#allocation16], 256
    $region61: #{tpu_custom_call.1} parent=1 // pred_fallthru
      _
    // Predicated region
    $region62: #{tpu_custom_call.1} parent=1 // pred_check
      _
    $region63: #{tpu_custom_call.1} parent=1 // pred_check_branch
      %136 = sbr.rel (0) target = $region65
    $region64: #{tpu_custom_call.1} parent=1 // pred_region
      %137 = dma.done [#allocation16], 256
    $region65: #{tpu_custom_call.1} parent=1 // pred_fallthru
      _
    %s138 = ssub.s32 0, 0
    %s139 = smul.u32 8, %s138
    %s140 = ssub.s32 0, 0
    %s141 = smul.u32 8, %s140
    %p142 = scmp.eq.s32.totalorder 0, 0
    // Predicated region
    $region66: #{tpu_custom_call.1} parent=1 // pred_check
      %p143 = pneg %p142
    $region67: #{tpu_custom_call.1} parent=1 // pred_check_branch
      %145 = sbr.rel (%p143) target = $region69
    $region68: #{tpu_custom_call.1} parent=1 // pred_region
      %v146 = vld [vmem:[#allocation15] sm:$0xff]
      %147 = vst [vmem:[#allocation4] sm:$0xff] %v146
      %s148 = scalar_lea.vmem [#allocation15], 8
      %v149 = vld [vmem:[%s148] sm:$0xff]
      %150 = vst [vmem:[#allocation4 + $0x8] sm:$0xff] %v149
      %v151 = vld [vmem:[#allocation17] sm:$0xff]
      %152 = vst [vmem:[#allocation5] sm:$0xff] %v151
      %s153 = scalar_lea.vmem [#allocation17], 8
      %v154 = vld [vmem:[%s153] sm:$0xff]
      %155 = vst [vmem:[#allocation5 + $0x8] sm:$0xff] %v154
    $region69: #{tpu_custom_call.1} parent=1 // pred_fallthru
      _
    %v156 = vld [vmem:[#allocation6] sm:$0xff]
    %v157 = vld [vmem:[#allocation6 + $0x8] sm:$0xff]
    %v158 = vld [vmem:[#allocation6 + $0x10] sm:$0xff]
    %v159 = vld [vmem:[#allocation6 + $0x18] sm:$0xff]
    %v160 = vld [vmem:[#allocation6 + $0x20] sm:$0xff]
    %v161 = vld [vmem:[#allocation6 + $0x28] sm:$0xff]
    %v162 = vld [vmem:[#allocation6 + $0x30] sm:$0xff]
    %v163 = vld [vmem:[#allocation6 + $0x38] sm:$0xff]
    %v164 = vld [vmem:[#allocation11] sm:$0xff]
    %v165 = vld [vmem:[#allocation11 + $0x8] sm:$0xff]
    %v166 = vld [vmem:[#allocation11 + $0x10] sm:$0xff]
    %v167 = vld [vmem:[#allocation11 + $0x18] sm:$0xff]
    %v168 = vld [vmem:[#allocation11 + $0x20] sm:$0xff]
    %v169 = vld [vmem:[#allocation11 + $0x28] sm:$0xff]
    %v170 = vld [vmem:[#allocation11 + $0x30] sm:$0xff]
    %v171 = vld [vmem:[#allocation11 + $0x38] sm:$0xff]
    %v172 = vld [vmem:[#allocation11 + $0x40] sm:$0xff]
    %v173 = vld [vmem:[#allocation11 + $0x48] sm:$0xff]
    %v174 = vld [vmem:[#allocation11 + $0x50] sm:$0xff]
    %v175 = vld [vmem:[#allocation11 + $0x58] sm:$0xff]
    %v176 = vld [vmem:[#allocation11 + $0x60] sm:$0xff]
    %v177 = vld [vmem:[#allocation11 + $0x68] sm:$0xff]
    %v178 = vld [vmem:[#allocation11 + $0x70] sm:$0xff]
    %v179 = vld [vmem:[#allocation11 + $0x78] sm:$0xff]
    %v180 = vld [vmem:[#allocation11 + $0x80] sm:$0xff]
    %v181 = vld [vmem:[#allocation11 + $0x88] sm:$0xff]
    %v182 = vld [vmem:[#allocation11 + $0x90] sm:$0xff]
    %v183 = vld [vmem:[#allocation11 + $0x98] sm:$0xff]
    %v184 = vld [vmem:[#allocation11 + $0xa0] sm:$0xff]
    %v185 = vld [vmem:[#allocation11 + $0xa8] sm:$0xff]
    %v186 = vld [vmem:[#allocation11 + $0xb0] sm:$0xff]
    %v187 = vld [vmem:[#allocation11 + $0xb8] sm:$0xff]
    %v188 = vld [vmem:[#allocation11 + $0xc0] sm:$0xff]
    %v189 = vld [vmem:[#allocation11 + $0xc8] sm:$0xff]
    %v190 = vld [vmem:[#allocation11 + $0xd0] sm:$0xff]
    %v191 = vld [vmem:[#allocation11 + $0xd8] sm:$0xff]
    %v192 = vld [vmem:[#allocation11 + $0xe0] sm:$0xff]
    %v193 = vld [vmem:[#allocation11 + $0xe8] sm:$0xff]
    %v194 = vld [vmem:[#allocation11 + $0xf0] sm:$0xff]
    %v195 = vld [vmem:[#allocation11 + $0xf8] sm:$0xff]
    %v196 = vld [vmem:[#allocation11 + $0x100] sm:$0xff]
    %v197 = vld [vmem:[#allocation11 + $0x108] sm:$0xff]
    %v198 = vld [vmem:[#allocation11 + $0x110] sm:$0xff]
    %v199 = vld [vmem:[#allocation11 + $0x118] sm:$0xff]
    %v200 = vld [vmem:[#allocation11 + $0x120] sm:$0xff]
    %v201 = vld [vmem:[#allocation11 + $0x128] sm:$0xff]
    %v202 = vld [vmem:[#allocation11 + $0x130] sm:$0xff]
    %v203 = vld [vmem:[#allocation11 + $0x138] sm:$0xff]
    %v204 = vld [vmem:[#allocation11 + $0x140] sm:$0xff]
    %v205 = vld [vmem:[#allocation11 + $0x148] sm:$0xff]
    %v206 = vld [vmem:[#allocation11 + $0x150] sm:$0xff]
    %v207 = vld [vmem:[#allocation11 + $0x158] sm:$0xff]
    %v208 = vld [vmem:[#allocation11 + $0x160] sm:$0xff]
    %v209 = vld [vmem:[#allocation11 + $0x168] sm:$0xff]
    %v210 = vld [vmem:[#allocation11 + $0x170] sm:$0xff]
    %v211 = vld [vmem:[#allocation11 + $0x178] sm:$0xff]
    %v212 = vld [vmem:[#allocation11 + $0x180] sm:$0xff]
    %v213 = vld [vmem:[#allocation11 + $0x188] sm:$0xff]
    %v214 = vld [vmem:[#allocation11 + $0x190] sm:$0xff]
    %v215 = vld [vmem:[#allocation11 + $0x198] sm:$0xff]
    %v216 = vld [vmem:[#allocation11 + $0x1a0] sm:$0xff]
    %v217 = vld [vmem:[#allocation11 + $0x1a8] sm:$0xff]
    %v218 = vld [vmem:[#allocation11 + $0x1b0] sm:$0xff]
    %v219 = vld [vmem:[#allocation11 + $0x1b8] sm:$0xff]
    %v220 = vld [vmem:[#allocation11 + $0x1c0] sm:$0xff]
    %v221 = vld [vmem:[#allocation11 + $0x1c8] sm:$0xff]
    %v222 = vld [vmem:[#allocation11 + $0x1d0] sm:$0xff]
    %v223 = vld [vmem:[#allocation11 + $0x1d8] sm:$0xff]
    %v224 = vld [vmem:[#allocation11 + $0x1e0] sm:$0xff]
    %v225 = vld [vmem:[#allocation11 + $0x1e8] sm:$0xff]
    %v226 = vld [vmem:[#allocation11 + $0x1f0] sm:$0xff]
    %v227 = vld [vmem:[#allocation11 + $0x1f8] sm:$0xff]
    %v228 = vld [vmem:[%s5] sm:$0xf]
    %v230 = vlaneseq
    %v231 = vshrl.u32 %v230, 7
    %v232 = vsub.s32 0, %v231
    %v233 = vrot.slane %v228, %v232
    %v234 = vlaneseq
    %v235 = vshrl.u32 %v234, 7
    %v236 = vsub.s32 1, %v235
    %v237 = vrot.slane %v228, %v236
    %v238 = vlaneseq
    %v239 = vshrl.u32 %v238, 7
    %v240 = vsub.s32 2, %v239
    %v241 = vrot.slane %v228, %v240
    %v242 = vlaneseq
    %v243 = vshrl.u32 %v242, 7
    %v244 = vsub.s32 3, %v243
    %v245 = vrot.slane %v228, %v244
    %250 = vmatprep.subr.mxu0 %v225
    %251 = vmatpush1.msra.mxu0 %v224
    %252 = vmatprep.subr.mxu0 %v221
    %253 = vmatpush1.msra.mxu0 %v220
    %254 = vmatprep.subr.mxu0 %v217
    %255 = vmatpush1.msra.mxu0 %v216
    %256 = vmatprep.subr.mxu0 %v213
    %257 = vmatpush1.msra.mxu0 %v212
    %258 = vmatprep.subr.mxu0 %v209
    %259 = vmatpush1.msra.mxu0 %v208
    %260 = vmatprep.subr.mxu0 %v205
    %261 = vmatpush1.msra.mxu0 %v204
    %262 = vmatprep.subr.mxu0 %v201
    %263 = vmatpush1.msra.mxu0 %v200
    %264 = vmatprep.subr.mxu0 %v197
    %265 = vmatpush1.msra.mxu0 %v196
    %266 = vmatprep.subr.mxu0 %v193
    %267 = vmatpush1.msra.mxu0 %v192
    %268 = vmatprep.subr.mxu0 %v189
    %269 = vmatpush1.msra.mxu0 %v188
    %270 = vmatprep.subr.mxu0 %v185
    %271 = vmatpush1.msra.mxu0 %v184
    %272 = vmatprep.subr.mxu0 %v181
    %273 = vmatpush1.msra.mxu0 %v180
    %274 = vmatprep.subr.mxu0 %v177
    %275 = vmatpush1.msra.mxu0 %v176
    %276 = vmatprep.subr.mxu0 %v173
    %277 = vmatpush1.msra.mxu0 %v172
    %278 = vmatprep.subr.mxu0 %v169
    %279 = vmatpush1.msra.mxu0 %v168
    %280 = vmatprep.subr.mxu0 %v165
    %281 = vmatpush1.msra.mxu0 %v164
    %282 = vmatprep.subr.mxu0 0.0
    %283 = vmatpush2.msra.mxu0 0.0
    %284 = vmatprep.subr.mxu0 0.0
    %285 = vmatpush2.msra.mxu0 0.0
    %286 = vmatprep.subr.mxu0 0.0
    %287 = vmatpush2.msra.mxu0 0.0
    %288 = vmatprep.subr.mxu0 0.0
    %289 = vmatpush2.msra.mxu0 0.0
    %290 = vmatprep.subr.mxu0 0.0
    %291 = vmatpush2.msra.mxu0 0.0
    %292 = vmatprep.subr.mxu0 0.0
    %293 = vmatpush2.msra.mxu0 0.0
    %294 = vmatprep.subr.mxu0 0.0
    %295 = vmatpush2.msra.mxu0 0.0
    %296 = vmatprep.subr.mxu0 0.0
    %297 = vmatpush2.msra.mxu0 0.0
    %298 = vmatprep.subr.mxu0 0.0
    %299 = vmatpush2.msra.mxu0 0.0
    %300 = vmatprep.subr.mxu0 0.0
    %301 = vmatpush2.msra.mxu0 0.0
    %302 = vmatprep.subr.mxu0 0.0
    %303 = vmatpush2.msra.mxu0 0.0
    %304 = vmatprep.subr.mxu0 0.0
    %305 = vmatpush2.msra.mxu0 0.0
    %306 = vmatprep.subr.mxu0 0.0
    %307 = vmatpush2.msra.mxu0 0.0
    %308 = vmatprep.subr.mxu0 0.0
    %309 = vmatpush2.msra.mxu0 0.0
    %310 = vmatprep.subr.mxu0 0.0
    %311 = vmatpush2.msra.mxu0 0.0
    %312 = vmatprep.subr.mxu0 0.0
    %313 = vmatpush2.msra.mxu0 0.0
    %314 = vmatprep.mubr.f32.mxu0 0.0
    %315 = vmatmul.mubr.f32.gmra.mxu0 %v156
    %v316 = vpop.f32.mrf.mxu0
    %v317 = vadd.f32 %v233, %v316
    %v318 = vpop.f32.mrf.mxu0
    %v319 = vadd.f32 %v237, %v318
    %320 = vmatprep.mubr.f32.mxu0 0.0
    %321 = vmatmul.mubr.f32.gmra.mxu0 %v157
    %v322 = vpop.f32.mrf.mxu0
    %v323 = vadd.f32 %v233, %v322
    %v324 = vpop.f32.mrf.mxu0
    %v325 = vadd.f32 %v237, %v324
    %326 = vmatprep.mubr.f32.mxu0 0.0
    %327 = vmatmul.mubr.f32.gmra.mxu0 %v158
    %v328 = vpop.f32.mrf.mxu0
    %v329 = vadd.f32 %v233, %v328
    %v330 = vpop.f32.mrf.mxu0
    %v331 = vadd.f32 %v237, %v330
    %332 = vmatprep.mubr.f32.mxu0 0.0
    %333 = vmatmul.mubr.f32.gmra.mxu0 %v159
    %v334 = vpop.f32.mrf.mxu0
    %v335 = vadd.f32 %v233, %v334
    %v336 = vpop.f32.mrf.mxu0
    %v337 = vadd.f32 %v237, %v336
    %338 = vmatprep.mubr.f32.mxu0 0.0
    %339 = vmatmul.mubr.f32.gmra.mxu0 %v160
    %v340 = vpop.f32.mrf.mxu0
    %v341 = vadd.f32 %v233, %v340
    %v342 = vpop.f32.mrf.mxu0
    %v343 = vadd.f32 %v237, %v342
    %344 = vmatprep.mubr.f32.mxu0 0.0
    %345 = vmatmul.mubr.f32.gmra.mxu0 %v161
    %v346 = vpop.f32.mrf.mxu0
    %v347 = vadd.f32 %v233, %v346
    %v348 = vpop.f32.mrf.mxu0
    %v349 = vadd.f32 %v237, %v348
    %350 = vmatprep.mubr.f32.mxu0 0.0
    %351 = vmatmul.mubr.f32.gmra.mxu0 %v162
    %v352 = vpop.f32.mrf.mxu0
    %v353 = vadd.f32 %v233, %v352
    %v354 = vpop.f32.mrf.mxu0
    %v355 = vadd.f32 %v237, %v354
    %356 = vmatprep.mubr.f32.mxu0 0.0
    %357 = vmatmul.mubr.f32.gmra.mxu0 %v163
    %v358 = vpop.f32.mrf.mxu0
    %v359 = vadd.f32 %v233, %v358
    %v360 = vpop.f32.mrf.mxu0
    %v361 = vadd.f32 %v237, %v360
    %362 = vdwg.mxu0
    %363 = vmatprep.subr.mxu0 %v227
    %364 = vmatpush1.msra.mxu0 %v226
    %365 = vmatprep.subr.mxu0 %v223
    %366 = vmatpush1.msra.mxu0 %v222
    %367 = vmatprep.subr.mxu0 %v219
    %368 = vmatpush1.msra.mxu0 %v218
    %369 = vmatprep.subr.mxu0 %v215
    %370 = vmatpush1.msra.mxu0 %v214
    %371 = vmatprep.subr.mxu0 %v211
    %372 = vmatpush1.msra.mxu0 %v210
    %373 = vmatprep.subr.mxu0 %v207
    %374 = vmatpush1.msra.mxu0 %v206
    %375 = vmatprep.subr.mxu0 %v203
    %376 = vmatpush1.msra.mxu0 %v202
    %377 = vmatprep.subr.mxu0 %v199
    %378 = vmatpush1.msra.mxu0 %v198
    %379 = vmatprep.subr.mxu0 %v195
    %380 = vmatpush1.msra.mxu0 %v194
    %381 = vmatprep.subr.mxu0 %v191
    %382 = vmatpush1.msra.mxu0 %v190
    %383 = vmatprep.subr.mxu0 %v187
    %384 = vmatpush1.msra.mxu0 %v186
    %385 = vmatprep.subr.mxu0 %v183
    %386 = vmatpush1.msra.mxu0 %v182
    %387 = vmatprep.subr.mxu0 %v179
    %388 = vmatpush1.msra.mxu0 %v178
    %389 = vmatprep.subr.mxu0 %v175
    %390 = vmatpush1.msra.mxu0 %v174
    %391 = vmatprep.subr.mxu0 %v171
    %392 = vmatpush1.msra.mxu0 %v170
    %393 = vmatprep.subr.mxu0 %v167
    %394 = vmatpush1.msra.mxu0 %v166
    %395 = vmatprep.subr.mxu0 0.0
    %396 = vmatpush2.msra.mxu0 0.0
    %397 = vmatprep.subr.mxu0 0.0
    %398 = vmatpush2.msra.mxu0 0.0
    %399 = vmatprep.subr.mxu0 0.0
    %400 = vmatpush2.msra.mxu0 0.0
    %401 = vmatprep.subr.mxu0 0.0
    %402 = vmatpush2.msra.mxu0 0.0
    %403 = vmatprep.subr.mxu0 0.0
    %404 = vmatpush2.msra.mxu0 0.0
    %405 = vmatprep.subr.mxu0 0.0
    %406 = vmatpush2.msra.mxu0 0.0
    %407 = vmatprep.subr.mxu0 0.0
    %408 = vmatpush2.msra.mxu0 0.0
    %409 = vmatprep.subr.mxu0 0.0
    %410 = vmatpush2.msra.mxu0 0.0
    %411 = vmatprep.subr.mxu0 0.0
    %412 = vmatpush2.msra.mxu0 0.0
    %413 = vmatprep.subr.mxu0 0.0
    %414 = vmatpush2.msra.mxu0 0.0
    %415 = vmatprep.subr.mxu0 0.0
    %416 = vmatpush2.msra.mxu0 0.0
    %417 = vmatprep.subr.mxu0 0.0
    %418 = vmatpush2.msra.mxu0 0.0
    %419 = vmatprep.subr.mxu0 0.0
    %420 = vmatpush2.msra.mxu0 0.0
    %421 = vmatprep.subr.mxu0 0.0
    %422 = vmatpush2.msra.mxu0 0.0
    %423 = vmatprep.subr.mxu0 0.0
    %424 = vmatpush2.msra.mxu0 0.0
    %425 = vmatprep.subr.mxu0 0.0
    %426 = vmatpush2.msra.mxu0 0.0
    %427 = vmatprep.mubr.f32.mxu0 0.0
    %428 = vmatmul.mubr.f32.gmra.mxu0 %v156
    %v429 = vpop.f32.mrf.mxu0
    %v430 = vadd.f32 %v241, %v429
    %v431 = vpop.f32.mrf.mxu0
    %v432 = vadd.f32 %v245, %v431
    %433 = vmatprep.mubr.f32.mxu0 0.0
    %434 = vmatmul.mubr.f32.gmra.mxu0 %v157
    %v435 = vpop.f32.mrf.mxu0
    %v436 = vadd.f32 %v241, %v435
    %v437 = vpop.f32.mrf.mxu0
    %v438 = vadd.f32 %v245, %v437
    %439 = vmatprep.mubr.f32.mxu0 0.0
    %440 = vmatmul.mubr.f32.gmra.mxu0 %v158
    %v441 = vpop.f32.mrf.mxu0
    %v442 = vadd.f32 %v241, %v441
    %v443 = vpop.f32.mrf.mxu0
    %v444 = vadd.f32 %v245, %v443
    %445 = vmatprep.mubr.f32.mxu0 0.0
    %446 = vmatmul.mubr.f32.gmra.mxu0 %v159
    %v447 = vpop.f32.mrf.mxu0
    %v448 = vadd.f32 %v241, %v447
    %v449 = vpop.f32.mrf.mxu0
    %v450 = vadd.f32 %v245, %v449
    %451 = vmatprep.mubr.f32.mxu0 0.0
    %452 = vmatmul.mubr.f32.gmra.mxu0 %v160
    %v453 = vpop.f32.mrf.mxu0
    %v454 = vadd.f32 %v241, %v453
    %v455 = vpop.f32.mrf.mxu0
    %v456 = vadd.f32 %v245, %v455
    %457 = vmatprep.mubr.f32.mxu0 0.0
    %458 = vmatmul.mubr.f32.gmra.mxu0 %v161
    %v459 = vpop.f32.mrf.mxu0
    %v460 = vadd.f32 %v241, %v459
    %v461 = vpop.f32.mrf.mxu0
    %v462 = vadd.f32 %v245, %v461
    %463 = vmatprep.mubr.f32.mxu0 0.0
    %464 = vmatmul.mubr.f32.gmra.mxu0 %v162
    %v465 = vpop.f32.mrf.mxu0
    %v466 = vadd.f32 %v241, %v465
    %v467 = vpop.f32.mrf.mxu0
    %v468 = vadd.f32 %v245, %v467
    %469 = vmatprep.mubr.f32.mxu0 0.0
    %470 = vmatmul.mubr.f32.gmra.mxu0 %v163
    %v471 = vpop.f32.mrf.mxu0
    %v472 = vadd.f32 %v241, %v471
    %v473 = vpop.f32.mrf.mxu0
    %v474 = vadd.f32 %v245, %v473
    %475 = vdwg.mxu0
    %476 = vst [vmem:[#allocation2] sm:$0xff] %v317
    %477 = vst [vmem:[#allocation2 + $0x8] sm:$0xff] %v319
    %478 = vst [vmem:[#allocation2 + $0x10] sm:$0xff] %v430
    %479 = vst [vmem:[#allocation2 + $0x18] sm:$0xff] %v432
    %480 = vst [vmem:[#allocation2 + $0x20] sm:$0xff] %v323
    %481 = vst [vmem:[#allocation2 + $0x28] sm:$0xff] %v325
    %482 = vst [vmem:[#allocation2 + $0x30] sm:$0xff] %v436
    %483 = vst [vmem:[#allocation2 + $0x38] sm:$0xff] %v438
    %484 = vst [vmem:[#allocation2 + $0x40] sm:$0xff] %v329
    %485 = vst [vmem:[#allocation2 + $0x48] sm:$0xff] %v331
    %486 = vst [vmem:[#allocation2 + $0x50] sm:$0xff] %v442
    %487 = vst [vmem:[#allocation2 + $0x58] sm:$0xff] %v444
    %488 = vst [vmem:[#allocation2 + $0x60] sm:$0xff] %v335
    %489 = vst [vmem:[#allocation2 + $0x68] sm:$0xff] %v337
    %490 = vst [vmem:[#allocation2 + $0x70] sm:$0xff] %v448
    %491 = vst [vmem:[#allocation2 + $0x78] sm:$0xff] %v450
    %492 = vst [vmem:[#allocation2 + $0x80] sm:$0xff] %v341
    %493 = vst [vmem:[#allocation2 + $0x88] sm:$0xff] %v343
    %494 = vst [vmem:[#allocation2 + $0x90] sm:$0xff] %v454
    %495 = vst [vmem:[#allocation2 + $0x98] sm:$0xff] %v456
    %496 = vst [vmem:[#allocation2 + $0xa0] sm:$0xff] %v347
    %497 = vst [vmem:[#allocation2 + $0xa8] sm:$0xff] %v349
    %498 = vst [vmem:[#allocation2 + $0xb0] sm:$0xff] %v460
    %499 = vst [vmem:[#allocation2 + $0xb8] sm:$0xff] %v462
    %500 = vst [vmem:[#allocation2 + $0xc0] sm:$0xff] %v353
    %501 = vst [vmem:[#allocation2 + $0xc8] sm:$0xff] %v355
    %502 = vst [vmem:[#allocation2 + $0xd0] sm:$0xff] %v466
    %503 = vst [vmem:[#allocation2 + $0xd8] sm:$0xff] %v468
    %504 = vst [vmem:[#allocation2 + $0xe0] sm:$0xff] %v359
    %505 = vst [vmem:[#allocation2 + $0xe8] sm:$0xff] %v361
    %506 = vst [vmem:[#allocation2 + $0xf0] sm:$0xff] %v472
    %507 = vst [vmem:[#allocation2 + $0xf8] sm:$0xff] %v474
    %v508 = vld [vmem:[#allocation9] sm:$0xff]
    %v509 = vld [vmem:[#allocation9 + $0x8] sm:$0xff]
    %v510 = vld [vmem:[#allocation9 + $0x10] sm:$0xff]
    %v511 = vld [vmem:[#allocation9 + $0x18] sm:$0xff]
    %v512 = vld [vmem:[#allocation9 + $0x20] sm:$0xff]
    %v513 = vld [vmem:[#allocation9 + $0x28] sm:$0xff]
    %v514 = vld [vmem:[#allocation9 + $0x30] sm:$0xff]
    %v515 = vld [vmem:[#allocation9 + $0x38] sm:$0xff]
    %v516 = vld [vmem:[#allocation12] sm:$0xff]
    %v517 = vld [vmem:[#allocation12 + $0x8] sm:$0xff]
    %v518 = vld [vmem:[#allocation12 + $0x10] sm:$0xff]
    %v519 = vld [vmem:[#allocation12 + $0x18] sm:$0xff]
    %v520 = vld [vmem:[#allocation12 + $0x20] sm:$0xff]
    %v521 = vld [vmem:[#allocation12 + $0x28] sm:$0xff]
    %v522 = vld [vmem:[#allocation12 + $0x30] sm:$0xff]
    %v523 = vld [vmem:[#allocation12 + $0x38] sm:$0xff]
    %v524 = vld [vmem:[#allocation12 + $0x40] sm:$0xff]
    %v525 = vld [vmem:[#allocation12 + $0x48] sm:$0xff]
    %v526 = vld [vmem:[#allocation12 + $0x50] sm:$0xff]
    %v527 = vld [vmem:[#allocation12 + $0x58] sm:$0xff]
    %v528 = vld [vmem:[#allocation12 + $0x60] sm:$0xff]
    %v529 = vld [vmem:[#allocation12 + $0x68] sm:$0xff]
    %v530 = vld [vmem:[#allocation12 + $0x70] sm:$0xff]
    %v531 = vld [vmem:[#allocation12 + $0x78] sm:$0xff]
    %v532 = vld [vmem:[#allocation12 + $0x80] sm:$0xff]
    %v533 = vld [vmem:[#allocation12 + $0x88] sm:$0xff]
    %v534 = vld [vmem:[#allocation12 + $0x90] sm:$0xff]
    %v535 = vld [vmem:[#allocation12 + $0x98] sm:$0xff]
    %v536 = vld [vmem:[#allocation12 + $0xa0] sm:$0xff]
    %v537 = vld [vmem:[#allocation12 + $0xa8] sm:$0xff]
    %v538 = vld [vmem:[#allocation12 + $0xb0] sm:$0xff]
    %v539 = vld [vmem:[#allocation12 + $0xb8] sm:$0xff]
    %v540 = vld [vmem:[#allocation12 + $0xc0] sm:$0xff]
    %v541 = vld [vmem:[#allocation12 + $0xc8] sm:$0xff]
    %v542 = vld [vmem:[#allocation12 + $0xd0] sm:$0xff]
    %v543 = vld [vmem:[#allocation12 + $0xd8] sm:$0xff]
    %v544 = vld [vmem:[#allocation12 + $0xe0] sm:$0xff]
    %v545 = vld [vmem:[#allocation12 + $0xe8] sm:$0xff]
    %v546 = vld [vmem:[#allocation12 + $0xf0] sm:$0xff]
    %v547 = vld [vmem:[#allocation12 + $0xf8] sm:$0xff]
    %v548 = vld [vmem:[#allocation12 + $0x100] sm:$0xff]
    %v549 = vld [vmem:[#allocation12 + $0x108] sm:$0xff]
    %v550 = vld [vmem:[#allocation12 + $0x110] sm:$0xff]
    %v551 = vld [vmem:[#allocation12 + $0x118] sm:$0xff]
    %v552 = vld [vmem:[#allocation12 + $0x120] sm:$0xff]
    %v553 = vld [vmem:[#allocation12 + $0x128] sm:$0xff]
    %v554 = vld [vmem:[#allocation12 + $0x130] sm:$0xff]
    %v555 = vld [vmem:[#allocation12 + $0x138] sm:$0xff]
    %v556 = vld [vmem:[#allocation12 + $0x140] sm:$0xff]
    %v557 = vld [vmem:[#allocation12 + $0x148] sm:$0xff]
    %v558 = vld [vmem:[#allocation12 + $0x150] sm:$0xff]
    %v559 = vld [vmem:[#allocation12 + $0x158] sm:$0xff]
    %v560 = vld [vmem:[#allocation12 + $0x160] sm:$0xff]
    %v561 = vld [vmem:[#allocation12 + $0x168] sm:$0xff]
    %v562 = vld [vmem:[#allocation12 + $0x170] sm:$0xff]
    %v563 = vld [vmem:[#allocation12 + $0x178] sm:$0xff]
    %v564 = vld [vmem:[#allocation12 + $0x180] sm:$0xff]
    %v565 = vld [vmem:[#allocation12 + $0x188] sm:$0xff]
    %v566 = vld [vmem:[#allocation12 + $0x190] sm:$0xff]
    %v567 = vld [vmem:[#allocation12 + $0x198] sm:$0xff]
    %v568 = vld [vmem:[#allocation12 + $0x1a0] sm:$0xff]
    %v569 = vld [vmem:[#allocation12 + $0x1a8] sm:$0xff]
    %v570 = vld [vmem:[#allocation12 + $0x1b0] sm:$0xff]
    %v571 = vld [vmem:[#allocation12 + $0x1b8] sm:$0xff]
    %v572 = vld [vmem:[#allocation12 + $0x1c0] sm:$0xff]
    %v573 = vld [vmem:[#allocation12 + $0x1c8] sm:$0xff]
    %v574 = vld [vmem:[#allocation12 + $0x1d0] sm:$0xff]
    %v575 = vld [vmem:[#allocation12 + $0x1d8] sm:$0xff]
    %v576 = vld [vmem:[#allocation12 + $0x1e0] sm:$0xff]
    %v577 = vld [vmem:[#allocation12 + $0x1e8] sm:$0xff]
    %v578 = vld [vmem:[#allocation12 + $0x1f0] sm:$0xff]
    %v579 = vld [vmem:[#allocation12 + $0x1f8] sm:$0xff]
    %v580 = vld [vmem:[%s6] sm:$0xf]
    %v582 = vlaneseq
    %v583 = vshrl.u32 %v582, 7
    %v584 = vsub.s32 0, %v583
    %v585 = vrot.slane %v580, %v584
    %v586 = vlaneseq
    %v587 = vshrl.u32 %v586, 7
    %v588 = vsub.s32 1, %v587
    %v589 = vrot.slane %v580, %v588
    %v590 = vlaneseq
    %v591 = vshrl.u32 %v590, 7
    %v592 = vsub.s32 2, %v591
    %v593 = vrot.slane %v580, %v592
    %v594 = vlaneseq
    %v595 = vshrl.u32 %v594, 7
    %v596 = vsub.s32 3, %v595
    %v597 = vrot.slane %v580, %v596
    %602 = vmatprep.subr.mxu0 %v577
    %603 = vmatpush1.msra.mxu0 %v576
    %604 = vmatprep.subr.mxu0 %v573
    %605 = vmatpush1.msra.mxu0 %v572
    %606 = vmatprep.subr.mxu0 %v569
    %607 = vmatpush1.msra.mxu0 %v568
    %608 = vmatprep.subr.mxu0 %v565
    %609 = vmatpush1.msra.mxu0 %v564
    %610 = vmatprep.subr.mxu0 %v561
    %611 = vmatpush1.msra.mxu0 %v560
    %612 = vmatprep.subr.mxu0 %v557
    %613 = vmatpush1.msra.mxu0 %v556
    %614 = vmatprep.subr.mxu0 %v553
    %615 = vmatpush1.msra.mxu0 %v552
    %616 = vmatprep.subr.mxu0 %v549
    %617 = vmatpush1.msra.mxu0 %v548
    %618 = vmatprep.subr.mxu0 %v545
    %619 = vmatpush1.msra.mxu0 %v544
    %620 = vmatprep.subr.mxu0 %v541
    %621 = vmatpush1.msra.mxu0 %v540
    %622 = vmatprep.subr.mxu0 %v537
    %623 = vmatpush1.msra.mxu0 %v536
    %624 = vmatprep.subr.mxu0 %v533
    %625 = vmatpush1.msra.mxu0 %v532
    %626 = vmatprep.subr.mxu0 %v529
    %627 = vmatpush1.msra.mxu0 %v528
    %628 = vmatprep.subr.mxu0 %v525
    %629 = vmatpush1.msra.mxu0 %v524
    %630 = vmatprep.subr.mxu0 %v521
    %631 = vmatpush1.msra.mxu0 %v520
    %632 = vmatprep.subr.mxu0 %v517
    %633 = vmatpush1.msra.mxu0 %v516
    %634 = vmatprep.subr.mxu0 0.0
    %635 = vmatpush2.msra.mxu0 0.0
    %636 = vmatprep.subr.mxu0 0.0
    %637 = vmatpush2.msra.mxu0 0.0
    %638 = vmatprep.subr.mxu0 0.0
    %639 = vmatpush2.msra.mxu0 0.0
    %640 = vmatprep.subr.mxu0 0.0
    %641 = vmatpush2.msra.mxu0 0.0
    %642 = vmatprep.subr.mxu0 0.0
    %643 = vmatpush2.msra.mxu0 0.0
    %644 = vmatprep.subr.mxu0 0.0
    %645 = vmatpush2.msra.mxu0 0.0
    %646 = vmatprep.subr.mxu0 0.0
    %647 = vmatpush2.msra.mxu0 0.0
    %648 = vmatprep.subr.mxu0 0.0
    %649 = vmatpush2.msra.mxu0 0.0
    %650 = vmatprep.subr.mxu0 0.0
    %651 = vmatpush2.msra.mxu0 0.0
    %652 = vmatprep.subr.mxu0 0.0
    %653 = vmatpush2.msra.mxu0 0.0
    %654 = vmatprep.subr.mxu0 0.0
    %655 = vmatpush2.msra.mxu0 0.0
    %656 = vmatprep.subr.mxu0 0.0
    %657 = vmatpush2.msra.mxu0 0.0
    %658 = vmatprep.subr.mxu0 0.0
    %659 = vmatpush2.msra.mxu0 0.0
    %660 = vmatprep.subr.mxu0 0.0
    %661 = vmatpush2.msra.mxu0 0.0
    %662 = vmatprep.subr.mxu0 0.0
    %663 = vmatpush2.msra.mxu0 0.0
    %664 = vmatprep.subr.mxu0 0.0
    %665 = vmatpush2.msra.mxu0 0.0
    %666 = vmatprep.mubr.f32.mxu0 0.0
    %667 = vmatmul.mubr.f32.gmra.mxu0 %v508
    %v668 = vpop.f32.mrf.mxu0
    %v669 = vadd.f32 %v585, %v668
    %v670 = vpop.f32.mrf.mxu0
    %v671 = vadd.f32 %v589, %v670
    %672 = vmatprep.mubr.f32.mxu0 0.0
    %673 = vmatmul.mubr.f32.gmra.mxu0 %v509
    %v674 = vpop.f32.mrf.mxu0
    %v675 = vadd.f32 %v585, %v674
    %v676 = vpop.f32.mrf.mxu0
    %v677 = vadd.f32 %v589, %v676
    %678 = vmatprep.mubr.f32.mxu0 0.0
    %679 = vmatmul.mubr.f32.gmra.mxu0 %v510
    %v680 = vpop.f32.mrf.mxu0
    %v681 = vadd.f32 %v585, %v680
    %v682 = vpop.f32.mrf.mxu0
    %v683 = vadd.f32 %v589, %v682
    %684 = vmatprep.mubr.f32.mxu0 0.0
    %685 = vmatmul.mubr.f32.gmra.mxu0 %v511
    %v686 = vpop.f32.mrf.mxu0
    %v687 = vadd.f32 %v585, %v686
    %v688 = vpop.f32.mrf.mxu0
    %v689 = vadd.f32 %v589, %v688
    %690 = vmatprep.mubr.f32.mxu0 0.0
    %691 = vmatmul.mubr.f32.gmra.mxu0 %v512
    %v692 = vpop.f32.mrf.mxu0
    %v693 = vadd.f32 %v585, %v692
    %v694 = vpop.f32.mrf.mxu0
    %v695 = vadd.f32 %v589, %v694
    %696 = vmatprep.mubr.f32.mxu0 0.0
    %697 = vmatmul.mubr.f32.gmra.mxu0 %v513
    %v698 = vpop.f32.mrf.mxu0
    %v699 = vadd.f32 %v585, %v698
    %v700 = vpop.f32.mrf.mxu0
    %v701 = vadd.f32 %v589, %v700
    %702 = vmatprep.mubr.f32.mxu0 0.0
    %703 = vmatmul.mubr.f32.gmra.mxu0 %v514
    %v704 = vpop.f32.mrf.mxu0
    %v705 = vadd.f32 %v585, %v704
    %v706 = vpop.f32.mrf.mxu0
    %v707 = vadd.f32 %v589, %v706
    %708 = vmatprep.mubr.f32.mxu0 0.0
    %709 = vmatmul.mubr.f32.gmra.mxu0 %v515
    %v710 = vpop.f32.mrf.mxu0
    %v711 = vadd.f32 %v585, %v710
    %v712 = vpop.f32.mrf.mxu0
    %v713 = vadd.f32 %v589, %v712
    %714 = vdwg.mxu0
    %715 = vmatprep.subr.mxu0 %v579
    %716 = vmatpush1.msra.mxu0 %v578
    %717 = vmatprep.subr.mxu0 %v575
    %718 = vmatpush1.msra.mxu0 %v574
    %719 = vmatprep.subr.mxu0 %v571
    %720 = vmatpush1.msra.mxu0 %v570
    %721 = vmatprep.subr.mxu0 %v567
    %722 = vmatpush1.msra.mxu0 %v566
    %723 = vmatprep.subr.mxu0 %v563
    %724 = vmatpush1.msra.mxu0 %v562
    %725 = vmatprep.subr.mxu0 %v559
    %726 = vmatpush1.msra.mxu0 %v558
    %727 = vmatprep.subr.mxu0 %v555
    %728 = vmatpush1.msra.mxu0 %v554
    %729 = vmatprep.subr.mxu0 %v551
    %730 = vmatpush1.msra.mxu0 %v550
    %731 = vmatprep.subr.mxu0 %v547
    %732 = vmatpush1.msra.mxu0 %v546
    %733 = vmatprep.subr.mxu0 %v543
    %734 = vmatpush1.msra.mxu0 %v542
    %735 = vmatprep.subr.mxu0 %v539
    %736 = vmatpush1.msra.mxu0 %v538
    %737 = vmatprep.subr.mxu0 %v535
    %738 = vmatpush1.msra.mxu0 %v534
    %739 = vmatprep.subr.mxu0 %v531
    %740 = vmatpush1.msra.mxu0 %v530
    %741 = vmatprep.subr.mxu0 %v527
    %742 = vmatpush1.msra.mxu0 %v526
    %743 = vmatprep.subr.mxu0 %v523
    %744 = vmatpush1.msra.mxu0 %v522
    %745 = vmatprep.subr.mxu0 %v519
    %746 = vmatpush1.msra.mxu0 %v518
    %747 = vmatprep.subr.mxu0 0.0
    %748 = vmatpush2.msra.mxu0 0.0
    %749 = vmatprep.subr.mxu0 0.0
    %750 = vmatpush2.msra.mxu0 0.0
    %751 = vmatprep.subr.mxu0 0.0
    %752 = vmatpush2.msra.mxu0 0.0
    %753 = vmatprep.subr.mxu0 0.0
    %754 = vmatpush2.msra.mxu0 0.0
    %755 = vmatprep.subr.mxu0 0.0
    %756 = vmatpush2.msra.mxu0 0.0
    %757 = vmatprep.subr.mxu0 0.0
    %758 = vmatpush2.msra.mxu0 0.0
    %759 = vmatprep.subr.mxu0 0.0
    %760 = vmatpush2.msra.mxu0 0.0
    %761 = vmatprep.subr.mxu0 0.0
    %762 = vmatpush2.msra.mxu0 0.0
    %763 = vmatprep.subr.mxu0 0.0
    %764 = vmatpush2.msra.mxu0 0.0
    %765 = vmatprep.subr.mxu0 0.0
    %766 = vmatpush2.msra.mxu0 0.0
    %767 = vmatprep.subr.mxu0 0.0
    %768 = vmatpush2.msra.mxu0 0.0
    %769 = vmatprep.subr.mxu0 0.0
    %770 = vmatpush2.msra.mxu0 0.0
    %771 = vmatprep.subr.mxu0 0.0
    %772 = vmatpush2.msra.mxu0 0.0
    %773 = vmatprep.subr.mxu0 0.0
    %774 = vmatpush2.msra.mxu0 0.0
    %775 = vmatprep.subr.mxu0 0.0
    %776 = vmatpush2.msra.mxu0 0.0
    %777 = vmatprep.subr.mxu0 0.0
    %778 = vmatpush2.msra.mxu0 0.0
    %779 = vmatprep.mubr.f32.mxu0 0.0
    %780 = vmatmul.mubr.f32.gmra.mxu0 %v508
    %v781 = vpop.f32.mrf.mxu0
    %v782 = vadd.f32 %v593, %v781
    %v783 = vpop.f32.mrf.mxu0
    %v784 = vadd.f32 %v597, %v783
    %785 = vmatprep.mubr.f32.mxu0 0.0
    %786 = vmatmul.mubr.f32.gmra.mxu0 %v509
    %v787 = vpop.f32.mrf.mxu0
    %v788 = vadd.f32 %v593, %v787
    %v789 = vpop.f32.mrf.mxu0
    %v790 = vadd.f32 %v597, %v789
    %791 = vmatprep.mubr.f32.mxu0 0.0
    %792 = vmatmul.mubr.f32.gmra.mxu0 %v510
    %v793 = vpop.f32.mrf.mxu0
    %v794 = vadd.f32 %v593, %v793
    %v795 = vpop.f32.mrf.mxu0
    %v796 = vadd.f32 %v597, %v795
    %797 = vmatprep.mubr.f32.mxu0 0.0
    %798 = vmatmul.mubr.f32.gmra.mxu0 %v511
    %v799 = vpop.f32.mrf.mxu0
    %v800 = vadd.f32 %v593, %v799
    %v801 = vpop.f32.mrf.mxu0
    %v802 = vadd.f32 %v597, %v801
    %803 = vmatprep.mubr.f32.mxu0 0.0
    %804 = vmatmul.mubr.f32.gmra.mxu0 %v512
    %v805 = vpop.f32.mrf.mxu0
    %v806 = vadd.f32 %v593, %v805
    %v807 = vpop.f32.mrf.mxu0
    %v808 = vadd.f32 %v597, %v807
    %809 = vmatprep.mubr.f32.mxu0 0.0
    %810 = vmatmul.mubr.f32.gmra.mxu0 %v513
    %v811 = vpop.f32.mrf.mxu0
    %v812 = vadd.f32 %v593, %v811
    %v813 = vpop.f32.mrf.mxu0
    %v814 = vadd.f32 %v597, %v813
    %815 = vmatprep.mubr.f32.mxu0 0.0
    %816 = vmatmul.mubr.f32.gmra.mxu0 %v514
    %v817 = vpop.f32.mrf.mxu0
    %v818 = vadd.f32 %v593, %v817
    %v819 = vpop.f32.mrf.mxu0
    %v820 = vadd.f32 %v597, %v819
    %821 = vmatprep.mubr.f32.mxu0 0.0
    %822 = vmatmul.mubr.f32.gmra.mxu0 %v515
    %v823 = vpop.f32.mrf.mxu0
    %v824 = vadd.f32 %v593, %v823
    %v825 = vpop.f32.mrf.mxu0
    %v826 = vadd.f32 %v597, %v825
    %827 = vdwg.mxu0
    %828 = vst [vmem:[#allocation3] sm:$0xff] %v669
    %829 = vst [vmem:[#allocation3 + $0x8] sm:$0xff] %v671
    %830 = vst [vmem:[#allocation3 + $0x10] sm:$0xff] %v782
    %831 = vst [vmem:[#allocation3 + $0x18] sm:$0xff] %v784
    %832 = vst [vmem:[#allocation3 + $0x20] sm:$0xff] %v675
    %833 = vst [vmem:[#allocation3 + $0x28] sm:$0xff] %v677
    %834 = vst [vmem:[#allocation3 + $0x30] sm:$0xff] %v788
    %835 = vst [vmem:[#allocation3 + $0x38] sm:$0xff] %v790
    %836 = vst [vmem:[#allocation3 + $0x40] sm:$0xff] %v681
    %837 = vst [vmem:[#allocation3 + $0x48] sm:$0xff] %v683
    %838 = vst [vmem:[#allocation3 + $0x50] sm:$0xff] %v794
    %839 = vst [vmem:[#allocation3 + $0x58] sm:$0xff] %v796
    %840 = vst [vmem:[#allocation3 + $0x60] sm:$0xff] %v687
    %841 = vst [vmem:[#allocation3 + $0x68] sm:$0xff] %v689
    %842 = vst [vmem:[#allocation3 + $0x70] sm:$0xff] %v800
    %843 = vst [vmem:[#allocation3 + $0x78] sm:$0xff] %v802
    %844 = vst [vmem:[#allocation3 + $0x80] sm:$0xff] %v693
    %845 = vst [vmem:[#allocation3 + $0x88] sm:$0xff] %v695
    %846 = vst [vmem:[#allocation3 + $0x90] sm:$0xff] %v806
    %847 = vst [vmem:[#allocation3 + $0x98] sm:$0xff] %v808
    %848 = vst [vmem:[#allocation3 + $0xa0] sm:$0xff] %v699
    %849 = vst [vmem:[#allocation3 + $0xa8] sm:$0xff] %v701
    %850 = vst [vmem:[#allocation3 + $0xb0] sm:$0xff] %v812
    %851 = vst [vmem:[#allocation3 + $0xb8] sm:$0xff] %v814
    %852 = vst [vmem:[#allocation3 + $0xc0] sm:$0xff] %v705
    %853 = vst [vmem:[#allocation3 + $0xc8] sm:$0xff] %v707
    %854 = vst [vmem:[#allocation3 + $0xd0] sm:$0xff] %v818
    %855 = vst [vmem:[#allocation3 + $0xd8] sm:$0xff] %v820
    %856 = vst [vmem:[#allocation3 + $0xe0] sm:$0xff] %v711
    %857 = vst [vmem:[#allocation3 + $0xe8] sm:$0xff] %v713
    %858 = vst [vmem:[#allocation3 + $0xf0] sm:$0xff] %v824
    %859 = vst [vmem:[#allocation3 + $0xf8] sm:$0xff] %v826
    %v860 = vld [vmem:[#allocation14] sm:$0xff]
    %v861 = vld [vmem:[#allocation14 + $0x8] sm:$0xff]
    %v862 = vld [vmem:[#allocation14 + $0x10] sm:$0xff]
    %v863 = vld [vmem:[#allocation14 + $0x18] sm:$0xff]
    %v864 = vld [vmem:[#allocation14 + $0x20] sm:$0xff]
    %v865 = vld [vmem:[#allocation14 + $0x28] sm:$0xff]
    %v866 = vld [vmem:[#allocation14 + $0x30] sm:$0xff]
    %v867 = vld [vmem:[#allocation14 + $0x38] sm:$0xff]
    %v868 = vld [vmem:[#allocation14 + $0x40] sm:$0xff]
    %v869 = vld [vmem:[#allocation14 + $0x48] sm:$0xff]
    %v870 = vld [vmem:[#allocation14 + $0x50] sm:$0xff]
    %v871 = vld [vmem:[#allocation14 + $0x58] sm:$0xff]
    %v872 = vld [vmem:[#allocation14 + $0x60] sm:$0xff]
    %v873 = vld [vmem:[#allocation14 + $0x68] sm:$0xff]
    %v874 = vld [vmem:[#allocation14 + $0x70] sm:$0xff]
    %v875 = vld [vmem:[#allocation14 + $0x78] sm:$0xff]
    %v876 = vld [vmem:[#allocation14 + $0x80] sm:$0xff]
    %v877 = vld [vmem:[#allocation14 + $0x88] sm:$0xff]
    %v878 = vld [vmem:[#allocation14 + $0x90] sm:$0xff]
    %v879 = vld [vmem:[#allocation14 + $0x98] sm:$0xff]
    %v880 = vld [vmem:[#allocation14 + $0xa0] sm:$0xff]
    %v881 = vld [vmem:[#allocation14 + $0xa8] sm:$0xff]
    %v882 = vld [vmem:[#allocation14 + $0xb0] sm:$0xff]
    %v883 = vld [vmem:[#allocation14 + $0xb8] sm:$0xff]
    %v884 = vld [vmem:[#allocation14 + $0xc0] sm:$0xff]
    %v885 = vld [vmem:[#allocation14 + $0xc8] sm:$0xff]
    %v886 = vld [vmem:[#allocation14 + $0xd0] sm:$0xff]
    %v887 = vld [vmem:[#allocation14 + $0xd8] sm:$0xff]
    %v888 = vld [vmem:[#allocation14 + $0xe0] sm:$0xff]
    %v889 = vld [vmem:[#allocation14 + $0xe8] sm:$0xff]
    %v890 = vld [vmem:[#allocation14 + $0xf0] sm:$0xff]
    %v891 = vld [vmem:[#allocation14 + $0xf8] sm:$0xff]
    %v892 = vld [vmem:[#allocation14 + $0x100] sm:$0xff]
    %v893 = vld [vmem:[#allocation14 + $0x108] sm:$0xff]
    %v894 = vld [vmem:[#allocation14 + $0x110] sm:$0xff]
    %v895 = vld [vmem:[#allocation14 + $0x118] sm:$0xff]
    %v896 = vld [vmem:[#allocation14 + $0x120] sm:$0xff]
    %v897 = vld [vmem:[#allocation14 + $0x128] sm:$0xff]
    %v898 = vld [vmem:[#allocation14 + $0x130] sm:$0xff]
    %v899 = vld [vmem:[#allocation14 + $0x138] sm:$0xff]
    %v900 = vld [vmem:[#allocation14 + $0x140] sm:$0xff]
    %v901 = vld [vmem:[#allocation14 + $0x148] sm:$0xff]
    %v902 = vld [vmem:[#allocation14 + $0x150] sm:$0xff]
    %v903 = vld [vmem:[#allocation14 + $0x158] sm:$0xff]
    %v904 = vld [vmem:[#allocation14 + $0x160] sm:$0xff]
    %v905 = vld [vmem:[#allocation14 + $0x168] sm:$0xff]
    %v906 = vld [vmem:[#allocation14 + $0x170] sm:$0xff]
    %v907 = vld [vmem:[#allocation14 + $0x178] sm:$0xff]
    %v908 = vld [vmem:[#allocation14 + $0x180] sm:$0xff]
    %v909 = vld [vmem:[#allocation14 + $0x188] sm:$0xff]
    %v910 = vld [vmem:[#allocation14 + $0x190] sm:$0xff]
    %v911 = vld [vmem:[#allocation14 + $0x198] sm:$0xff]
    %v912 = vld [vmem:[#allocation14 + $0x1a0] sm:$0xff]
    %v913 = vld [vmem:[#allocation14 + $0x1a8] sm:$0xff]
    %v914 = vld [vmem:[#allocation14 + $0x1b0] sm:$0xff]
    %v915 = vld [vmem:[#allocation14 + $0x1b8] sm:$0xff]
    %v916 = vld [vmem:[#allocation14 + $0x1c0] sm:$0xff]
    %v917 = vld [vmem:[#allocation14 + $0x1c8] sm:$0xff]
    %v918 = vld [vmem:[#allocation14 + $0x1d0] sm:$0xff]
    %v919 = vld [vmem:[#allocation14 + $0x1d8] sm:$0xff]
    %v920 = vld [vmem:[#allocation14 + $0x1e0] sm:$0xff]
    %v921 = vld [vmem:[#allocation14 + $0x1e8] sm:$0xff]
    %v922 = vld [vmem:[#allocation14 + $0x1f0] sm:$0xff]
    %v923 = vld [vmem:[#allocation14 + $0x1f8] sm:$0xff]
    %v924 = vld [vmem:[#allocation14 + $0x200] sm:$0xff]
    %v925 = vld [vmem:[#allocation14 + $0x208] sm:$0xff]
    %v926 = vld [vmem:[#allocation14 + $0x210] sm:$0xff]
    %v927 = vld [vmem:[#allocation14 + $0x218] sm:$0xff]
    %v928 = vld [vmem:[#allocation14 + $0x220] sm:$0xff]
    %v929 = vld [vmem:[#allocation14 + $0x228] sm:$0xff]
    %v930 = vld [vmem:[#allocation14 + $0x230] sm:$0xff]
    %v931 = vld [vmem:[#allocation14 + $0x238] sm:$0xff]
    %v932 = vld [vmem:[#allocation14 + $0x240] sm:$0xff]
    %v933 = vld [vmem:[#allocation14 + $0x248] sm:$0xff]
    %v934 = vld [vmem:[#allocation14 + $0x250] sm:$0xff]
    %v935 = vld [vmem:[#allocation14 + $0x258] sm:$0xff]
    %v936 = vld [vmem:[#allocation14 + $0x260] sm:$0xff]
    %v937 = vld [vmem:[#allocation14 + $0x268] sm:$0xff]
    %v938 = vld [vmem:[#allocation14 + $0x270] sm:$0xff]
    %v939 = vld [vmem:[#allocation14 + $0x278] sm:$0xff]
    %v940 = vld [vmem:[#allocation14 + $0x280] sm:$0xff]
    %v941 = vld [vmem:[#allocation14 + $0x288] sm:$0xff]
    %v942 = vld [vmem:[#allocation14 + $0x290] sm:$0xff]
    %v943 = vld [vmem:[#allocation14 + $0x298] sm:$0xff]
    %v944 = vld [vmem:[#allocation14 + $0x2a0] sm:$0xff]
    %v945 = vld [vmem:[#allocation14 + $0x2a8] sm:$0xff]
    %v946 = vld [vmem:[#allocation14 + $0x2b0] sm:$0xff]
    %v947 = vld [vmem:[#allocation14 + $0x2b8] sm:$0xff]
    %v948 = vld [vmem:[#allocation14 + $0x2c0] sm:$0xff]
    %v949 = vld [vmem:[#allocation14 + $0x2c8] sm:$0xff]
    %v950 = vld [vmem:[#allocation14 + $0x2d0] sm:$0xff]
    %v951 = vld [vmem:[#allocation14 + $0x2d8] sm:$0xff]
    %v952 = vld [vmem:[#allocation14 + $0x2e0] sm:$0xff]
    %v953 = vld [vmem:[#allocation14 + $0x2e8] sm:$0xff]
    %v954 = vld [vmem:[#allocation14 + $0x2f0] sm:$0xff]
    %v955 = vld [vmem:[#allocation14 + $0x2f8] sm:$0xff]
    %v956 = vld [vmem:[#allocation14 + $0x300] sm:$0xff]
    %v957 = vld [vmem:[#allocation14 + $0x308] sm:$0xff]
    %v958 = vld [vmem:[#allocation14 + $0x310] sm:$0xff]
    %v959 = vld [vmem:[#allocation14 + $0x318] sm:$0xff]
    %v960 = vld [vmem:[#allocation14 + $0x320] sm:$0xff]
    %v961 = vld [vmem:[#allocation14 + $0x328] sm:$0xff]
    %v962 = vld [vmem:[#allocation14 + $0x330] sm:$0xff]
    %v963 = vld [vmem:[#allocation14 + $0x338] sm:$0xff]
    %v964 = vld [vmem:[#allocation14 + $0x340] sm:$0xff]
    %v965 = vld [vmem:[#allocation14 + $0x348] sm:$0xff]
    %v966 = vld [vmem:[#allocation14 + $0x350] sm:$0xff]
    %v967 = vld [vmem:[#allocation14 + $0x358] sm:$0xff]
    %v968 = vld [vmem:[#allocation14 + $0x360] sm:$0xff]
    %v969 = vld [vmem:[#allocation14 + $0x368] sm:$0xff]
    %v970 = vld [vmem:[#allocation14 + $0x370] sm:$0xff]
    %v971 = vld [vmem:[#allocation14 + $0x378] sm:$0xff]
    %v972 = vld [vmem:[#allocation14 + $0x380] sm:$0xff]
    %v973 = vld [vmem:[#allocation14 + $0x388] sm:$0xff]
    %v974 = vld [vmem:[#allocation14 + $0x390] sm:$0xff]
    %v975 = vld [vmem:[#allocation14 + $0x398] sm:$0xff]
    %v976 = vld [vmem:[#allocation14 + $0x3a0] sm:$0xff]
    %v977 = vld [vmem:[#allocation14 + $0x3a8] sm:$0xff]
    %v978 = vld [vmem:[#allocation14 + $0x3b0] sm:$0xff]
    %v979 = vld [vmem:[#allocation14 + $0x3b8] sm:$0xff]
    %v980 = vld [vmem:[#allocation14 + $0x3c0] sm:$0xff]
    %v981 = vld [vmem:[#allocation14 + $0x3c8] sm:$0xff]
    %v982 = vld [vmem:[#allocation14 + $0x3d0] sm:$0xff]
    %v983 = vld [vmem:[#allocation14 + $0x3d8] sm:$0xff]
    %v984 = vld [vmem:[#allocation14 + $0x3e0] sm:$0xff]
    %v985 = vld [vmem:[#allocation14 + $0x3e8] sm:$0xff]
    %v986 = vld [vmem:[#allocation14 + $0x3f0] sm:$0xff]
    %v987 = vld [vmem:[#allocation14 + $0x3f8] sm:$0xff]
    %v988 = vld [vmem:[#allocation14 + $0x400] sm:$0xff]
    %v989 = vld [vmem:[#allocation14 + $0x408] sm:$0xff]
    %v990 = vld [vmem:[#allocation14 + $0x410] sm:$0xff]
    %v991 = vld [vmem:[#allocation14 + $0x418] sm:$0xff]
    %v992 = vld [vmem:[#allocation14 + $0x420] sm:$0xff]
    %v993 = vld [vmem:[#allocation14 + $0x428] sm:$0xff]
    %v994 = vld [vmem:[#allocation14 + $0x430] sm:$0xff]
    %v995 = vld [vmem:[#allocation14 + $0x438] sm:$0xff]
    %v996 = vld [vmem:[#allocation14 + $0x440] sm:$0xff]
    %v997 = vld [vmem:[#allocation14 + $0x448] sm:$0xff]
    %v998 = vld [vmem:[#allocation14 + $0x450] sm:$0xff]
    %v999 = vld [vmem:[#allocation14 + $0x458] sm:$0xff]
    %v1000 = vld [vmem:[#allocation14 + $0x460] sm:$0xff]
    %v1001 = vld [vmem:[#allocation14 + $0x468] sm:$0xff]
    %v1002 = vld [vmem:[#allocation14 + $0x470] sm:$0xff]
    %v1003 = vld [vmem:[#allocation14 + $0x478] sm:$0xff]
    %v1004 = vld [vmem:[#allocation14 + $0x480] sm:$0xff]
    %v1005 = vld [vmem:[#allocation14 + $0x488] sm:$0xff]
    %v1006 = vld [vmem:[#allocation14 + $0x490] sm:$0xff]
    %v1007 = vld [vmem:[#allocation14 + $0x498] sm:$0xff]
    %v1008 = vld [vmem:[#allocation14 + $0x4a0] sm:$0xff]
    %v1009 = vld [vmem:[#allocation14 + $0x4a8] sm:$0xff]
    %v1010 = vld [vmem:[#allocation14 + $0x4b0] sm:$0xff]
    %v1011 = vld [vmem:[#allocation14 + $0x4b8] sm:$0xff]
    %v1012 = vld [vmem:[#allocation14 + $0x4c0] sm:$0xff]
    %v1013 = vld [vmem:[#allocation14 + $0x4c8] sm:$0xff]
    %v1014 = vld [vmem:[#allocation14 + $0x4d0] sm:$0xff]
    %v1015 = vld [vmem:[#allocation14 + $0x4d8] sm:$0xff]
    %v1016 = vld [vmem:[#allocation14 + $0x4e0] sm:$0xff]
    %v1017 = vld [vmem:[#allocation14 + $0x4e8] sm:$0xff]
    %v1018 = vld [vmem:[#allocation14 + $0x4f0] sm:$0xff]
    %v1019 = vld [vmem:[#allocation14 + $0x4f8] sm:$0xff]
    %v1020 = vld [vmem:[#allocation14 + $0x500] sm:$0xff]
    %v1021 = vld [vmem:[#allocation14 + $0x508] sm:$0xff]
    %v1022 = vld [vmem:[#allocation14 + $0x510] sm:$0xff]
    %v1023 = vld [vmem:[#allocation14 + $0x518] sm:$0xff]
    %v1024 = vld [vmem:[#allocation14 + $0x520] sm:$0xff]
    %v1025 = vld [vmem:[#allocation14 + $0x528] sm:$0xff]
    %v1026 = vld [vmem:[#allocation14 + $0x530] sm:$0xff]
    %v1027 = vld [vmem:[#allocation14 + $0x538] sm:$0xff]
    %v1028 = vld [vmem:[#allocation14 + $0x540] sm:$0xff]
    %v1029 = vld [vmem:[#allocation14 + $0x548] sm:$0xff]
    %v1030 = vld [vmem:[#allocation14 + $0x550] sm:$0xff]
    %v1031 = vld [vmem:[#allocation14 + $0x558] sm:$0xff]
    %v1032 = vld [vmem:[#allocation14 + $0x560] sm:$0xff]
    %v1033 = vld [vmem:[#allocation14 + $0x568] sm:$0xff]
    %v1034 = vld [vmem:[#allocation14 + $0x570] sm:$0xff]
    %v1035 = vld [vmem:[#allocation14 + $0x578] sm:$0xff]
    %v1036 = vld [vmem:[#allocation14 + $0x580] sm:$0xff]
    %v1037 = vld [vmem:[#allocation14 + $0x588] sm:$0xff]
    %v1038 = vld [vmem:[#allocation14 + $0x590] sm:$0xff]
    %v1039 = vld [vmem:[#allocation14 + $0x598] sm:$0xff]
    %v1040 = vld [vmem:[#allocation14 + $0x5a0] sm:$0xff]
    %v1041 = vld [vmem:[#allocation14 + $0x5a8] sm:$0xff]
    %v1042 = vld [vmem:[#allocation14 + $0x5b0] sm:$0xff]
    %v1043 = vld [vmem:[#allocation14 + $0x5b8] sm:$0xff]
    %v1044 = vld [vmem:[#allocation14 + $0x5c0] sm:$0xff]
    %v1045 = vld [vmem:[#allocation14 + $0x5c8] sm:$0xff]
    %v1046 = vld [vmem:[#allocation14 + $0x5d0] sm:$0xff]
    %v1047 = vld [vmem:[#allocation14 + $0x5d8] sm:$0xff]
    %v1048 = vld [vmem:[#allocation14 + $0x5e0] sm:$0xff]
    %v1049 = vld [vmem:[#allocation14 + $0x5e8] sm:$0xff]
    %v1050 = vld [vmem:[#allocation14 + $0x5f0] sm:$0xff]
    %v1051 = vld [vmem:[#allocation14 + $0x5f8] sm:$0xff]
    %v1052 = vld [vmem:[#allocation14 + $0x600] sm:$0xff]
    %v1053 = vld [vmem:[#allocation14 + $0x608] sm:$0xff]
    %v1054 = vld [vmem:[#allocation14 + $0x610] sm:$0xff]
    %v1055 = vld [vmem:[#allocation14 + $0x618] sm:$0xff]
    %v1056 = vld [vmem:[#allocation14 + $0x620] sm:$0xff]
    %v1057 = vld [vmem:[#allocation14 + $0x628] sm:$0xff]
    %v1058 = vld [vmem:[#allocation14 + $0x630] sm:$0xff]
    %v1059 = vld [vmem:[#allocation14 + $0x638] sm:$0xff]
    %v1060 = vld [vmem:[#allocation14 + $0x640] sm:$0xff]
    %v1061 = vld [vmem:[#allocation14 + $0x648] sm:$0xff]
    %v1062 = vld [vmem:[#allocation14 + $0x650] sm:$0xff]
    %v1063 = vld [vmem:[#allocation14 + $0x658] sm:$0xff]
    %v1064 = vld [vmem:[#allocation14 + $0x660] sm:$0xff]
    %v1065 = vld [vmem:[#allocation14 + $0x668] sm:$0xff]
    %v1066 = vld [vmem:[#allocation14 + $0x670] sm:$0xff]
    %v1067 = vld [vmem:[#allocation14 + $0x678] sm:$0xff]
    %v1068 = vld [vmem:[#allocation14 + $0x680] sm:$0xff]
    %v1069 = vld [vmem:[#allocation14 + $0x688] sm:$0xff]
    %v1070 = vld [vmem:[#allocation14 + $0x690] sm:$0xff]
    %v1071 = vld [vmem:[#allocation14 + $0x698] sm:$0xff]
    %v1072 = vld [vmem:[#allocation14 + $0x6a0] sm:$0xff]
    %v1073 = vld [vmem:[#allocation14 + $0x6a8] sm:$0xff]
    %v1074 = vld [vmem:[#allocation14 + $0x6b0] sm:$0xff]
    %v1075 = vld [vmem:[#allocation14 + $0x6b8] sm:$0xff]
    %v1076 = vld [vmem:[#allocation14 + $0x6c0] sm:$0xff]
    %v1077 = vld [vmem:[#allocation14 + $0x6c8] sm:$0xff]
    %v1078 = vld [vmem:[#allocation14 + $0x6d0] sm:$0xff]
    %v1079 = vld [vmem:[#allocation14 + $0x6d8] sm:$0xff]
    %v1080 = vld [vmem:[#allocation14 + $0x6e0] sm:$0xff]
    %v1081 = vld [vmem:[#allocation14 + $0x6e8] sm:$0xff]
    %v1082 = vld [vmem:[#allocation14 + $0x6f0] sm:$0xff]
    %v1083 = vld [vmem:[#allocation14 + $0x6f8] sm:$0xff]
    %v1084 = vld [vmem:[#allocation14 + $0x700] sm:$0xff]
    %v1085 = vld [vmem:[#allocation14 + $0x708] sm:$0xff]
    %v1086 = vld [vmem:[#allocation14 + $0x710] sm:$0xff]
    %v1087 = vld [vmem:[#allocation14 + $0x718] sm:$0xff]
    %v1088 = vld [vmem:[#allocation14 + $0x720] sm:$0xff]
    %v1089 = vld [vmem:[#allocation14 + $0x728] sm:$0xff]
    %v1090 = vld [vmem:[#allocation14 + $0x730] sm:$0xff]
    %v1091 = vld [vmem:[#allocation14 + $0x738] sm:$0xff]
    %v1092 = vld [vmem:[#allocation14 + $0x740] sm:$0xff]
    %v1093 = vld [vmem:[#allocation14 + $0x748] sm:$0xff]
    %v1094 = vld [vmem:[#allocation14 + $0x750] sm:$0xff]
    %v1095 = vld [vmem:[#allocation14 + $0x758] sm:$0xff]
    %v1096 = vld [vmem:[#allocation14 + $0x760] sm:$0xff]
    %v1097 = vld [vmem:[#allocation14 + $0x768] sm:$0xff]
    %v1098 = vld [vmem:[#allocation14 + $0x770] sm:$0xff]
    %v1099 = vld [vmem:[#allocation14 + $0x778] sm:$0xff]
    %v1100 = vld [vmem:[#allocation14 + $0x780] sm:$0xff]
    %v1101 = vld [vmem:[#allocation14 + $0x788] sm:$0xff]
    %v1102 = vld [vmem:[#allocation14 + $0x790] sm:$0xff]
    %v1103 = vld [vmem:[#allocation14 + $0x798] sm:$0xff]
    %v1104 = vld [vmem:[#allocation14 + $0x7a0] sm:$0xff]
    %v1105 = vld [vmem:[#allocation14 + $0x7a8] sm:$0xff]
    %v1106 = vld [vmem:[#allocation14 + $0x7b0] sm:$0xff]
    %v1107 = vld [vmem:[#allocation14 + $0x7b8] sm:$0xff]
    %v1108 = vld [vmem:[#allocation14 + $0x7c0] sm:$0xff]
    %v1109 = vld [vmem:[#allocation14 + $0x7c8] sm:$0xff]
    %v1110 = vld [vmem:[#allocation14 + $0x7d0] sm:$0xff]
    %v1111 = vld [vmem:[#allocation14 + $0x7d8] sm:$0xff]
    %v1112 = vld [vmem:[#allocation14 + $0x7e0] sm:$0xff]
    %v1113 = vld [vmem:[#allocation14 + $0x7e8] sm:$0xff]
    %v1114 = vld [vmem:[#allocation14 + $0x7f0] sm:$0xff]
    %v1115 = vld [vmem:[#allocation14 + $0x7f8] sm:$0xff]
    %v1116 = vld [vmem:[#allocation4] sm:$0xff]
    %v1117 = vld [vmem:[#allocation4 + $0x8] sm:$0xff]
    %v1118 = vld [vmem:[#allocation5] sm:$0xff]
    %v1119 = vld [vmem:[#allocation5 + $0x8] sm:$0xff]
    %1120 = vmatprep.subr.mxu0 %v981
    %1121 = vmatpush1.msra.mxu0 %v980
    %1122 = vmatprep.subr.mxu0 %v973
    %1123 = vmatpush1.msra.mxu0 %v972
    %1124 = vmatprep.subr.mxu0 %v965
    %1125 = vmatpush1.msra.mxu0 %v964
    %1126 = vmatprep.subr.mxu0 %v957
    %1127 = vmatpush1.msra.mxu0 %v956
    %1128 = vmatprep.subr.mxu0 %v949
    %1129 = vmatpush1.msra.mxu0 %v948
    %1130 = vmatprep.subr.mxu0 %v941
    %1131 = vmatpush1.msra.mxu0 %v940
    %1132 = vmatprep.subr.mxu0 %v933
    %1133 = vmatpush1.msra.mxu0 %v932
    %1134 = vmatprep.subr.mxu0 %v925
    %1135 = vmatpush1.msra.mxu0 %v924
    %1136 = vmatprep.subr.mxu0 %v917
    %1137 = vmatpush1.msra.mxu0 %v916
    %1138 = vmatprep.subr.mxu0 %v909
    %1139 = vmatpush1.msra.mxu0 %v908
    %1140 = vmatprep.subr.mxu0 %v901
    %1141 = vmatpush1.msra.mxu0 %v900
    %1142 = vmatprep.subr.mxu0 %v893
    %1143 = vmatpush1.msra.mxu0 %v892
    %1144 = vmatprep.subr.mxu0 %v885
    %1145 = vmatpush1.msra.mxu0 %v884
    %1146 = vmatprep.subr.mxu0 %v877
    %1147 = vmatpush1.msra.mxu0 %v876
    %1148 = vmatprep.subr.mxu0 %v869
    %1149 = vmatpush1.msra.mxu0 %v868
    %1150 = vmatprep.subr.mxu0 %v861
    %1151 = vmatpush1.msra.mxu0 %v860
    %1152 = vmatprep.subr.mxu0 %v1109
    %1153 = vmatpush2.msra.mxu0 %v1108
    %1154 = vmatprep.subr.mxu0 %v1101
    %1155 = vmatpush2.msra.mxu0 %v1100
    %1156 = vmatprep.subr.mxu0 %v1093
    %1157 = vmatpush2.msra.mxu0 %v1092
    %1158 = vmatprep.subr.mxu0 %v1085
    %1159 = vmatpush2.msra.mxu0 %v1084
    %1160 = vmatprep.subr.mxu0 %v1077
    %1161 = vmatpush2.msra.mxu0 %v1076
    %1162 = vmatprep.subr.mxu0 %v1069
    %1163 = vmatpush2.msra.mxu0 %v1068
    %1164 = vmatprep.subr.mxu0 %v1061
    %1165 = vmatpush2.msra.mxu0 %v1060
    %1166 = vmatprep.subr.mxu0 %v1053
    %1167 = vmatpush2.msra.mxu0 %v1052
    %1168 = vmatprep.subr.mxu0 %v1045
    %1169 = vmatpush2.msra.mxu0 %v1044
    %1170 = vmatprep.subr.mxu0 %v1037
    %1171 = vmatpush2.msra.mxu0 %v1036
    %1172 = vmatprep.subr.mxu0 %v1029
    %1173 = vmatpush2.msra.mxu0 %v1028
    %1174 = vmatprep.subr.mxu0 %v1021
    %1175 = vmatpush2.msra.mxu0 %v1020
    %1176 = vmatprep.subr.mxu0 %v1013
    %1177 = vmatpush2.msra.mxu0 %v1012
    %1178 = vmatprep.subr.mxu0 %v1005
    %1179 = vmatpush2.msra.mxu0 %v1004
    %1180 = vmatprep.subr.mxu0 %v997
    %1181 = vmatpush2.msra.mxu0 %v996
    %1182 = vmatprep.subr.mxu0 %v989
    %1183 = vmatpush2.msra.mxu0 %v988
    %1184 = vmatprep.mubr.f32.mxu0 %v1117
    %1185 = vmatmul.mubr.f32.gmra.mxu0 %v1116
    %v1186 = vpop.f32.mrf.mxu0
    %v1187 = vadd.f32 0.0, %v1186
    %v1188 = vpop.f32.mrf.mxu0
    %v1189 = vadd.f32 0.0, %v1188
    %1190 = vdwg.mxu0
    %1191 = vmatprep.subr.mxu0 %v983
    %1192 = vmatpush1.msra.mxu0 %v982
    %1193 = vmatprep.subr.mxu0 %v975
    %1194 = vmatpush1.msra.mxu0 %v974
    %1195 = vmatprep.subr.mxu0 %v967
    %1196 = vmatpush1.msra.mxu0 %v966
    %1197 = vmatprep.subr.mxu0 %v959
    %1198 = vmatpush1.msra.mxu0 %v958
    %1199 = vmatprep.subr.mxu0 %v951
    %1200 = vmatpush1.msra.mxu0 %v950
    %1201 = vmatprep.subr.mxu0 %v943
    %1202 = vmatpush1.msra.mxu0 %v942
    %1203 = vmatprep.subr.mxu0 %v935
    %1204 = vmatpush1.msra.mxu0 %v934
    %1205 = vmatprep.subr.mxu0 %v927
    %1206 = vmatpush1.msra.mxu0 %v926
    %1207 = vmatprep.subr.mxu0 %v919
    %1208 = vmatpush1.msra.mxu0 %v918
    %1209 = vmatprep.subr.mxu0 %v911
    %1210 = vmatpush1.msra.mxu0 %v910
    %1211 = vmatprep.subr.mxu0 %v903
    %1212 = vmatpush1.msra.mxu0 %v902
    %1213 = vmatprep.subr.mxu0 %v895
    %1214 = vmatpush1.msra.mxu0 %v894
    %1215 = vmatprep.subr.mxu0 %v887
    %1216 = vmatpush1.msra.mxu0 %v886
    %1217 = vmatprep.subr.mxu0 %v879
    %1218 = vmatpush1.msra.mxu0 %v878
    %1219 = vmatprep.subr.mxu0 %v871
    %1220 = vmatpush1.msra.mxu0 %v870
    %1221 = vmatprep.subr.mxu0 %v863
    %1222 = vmatpush1.msra.mxu0 %v862
    %1223 = vmatprep.subr.mxu0 %v1111
    %1224 = vmatpush2.msra.mxu0 %v1110
    %1225 = vmatprep.subr.mxu0 %v1103
    %1226 = vmatpush2.msra.mxu0 %v1102
    %1227 = vmatprep.subr.mxu0 %v1095
    %1228 = vmatpush2.msra.mxu0 %v1094
    %1229 = vmatprep.subr.mxu0 %v1087
    %1230 = vmatpush2.msra.mxu0 %v1086
    %1231 = vmatprep.subr.mxu0 %v1079
    %1232 = vmatpush2.msra.mxu0 %v1078
    %1233 = vmatprep.subr.mxu0 %v1071
    %1234 = vmatpush2.msra.mxu0 %v1070
    %1235 = vmatprep.subr.mxu0 %v1063
    %1236 = vmatpush2.msra.mxu0 %v1062
    %1237 = vmatprep.subr.mxu0 %v1055
    %1238 = vmatpush2.msra.mxu0 %v1054
    %1239 = vmatprep.subr.mxu0 %v1047
    %1240 = vmatpush2.msra.mxu0 %v1046
    %1241 = vmatprep.subr.mxu0 %v1039
    %1242 = vmatpush2.msra.mxu0 %v1038
    %1243 = vmatprep.subr.mxu0 %v1031
    %1244 = vmatpush2.msra.mxu0 %v1030
    %1245 = vmatprep.subr.mxu0 %v1023
    %1246 = vmatpush2.msra.mxu0 %v1022
    %1247 = vmatprep.subr.mxu0 %v1015
    %1248 = vmatpush2.msra.mxu0 %v1014
    %1249 = vmatprep.subr.mxu0 %v1007
    %1250 = vmatpush2.msra.mxu0 %v1006
    %1251 = vmatprep.subr.mxu0 %v999
    %1252 = vmatpush2.msra.mxu0 %v998
    %1253 = vmatprep.subr.mxu0 %v991
    %1254 = vmatpush2.msra.mxu0 %v990
    %1255 = vmatprep.mubr.f32.mxu0 %v1117
    %1256 = vmatmul.mubr.f32.gmra.mxu0 %v1116
    %v1257 = vpop.f32.mrf.mxu0
    %v1258 = vadd.f32 0.0, %v1257
    %v1259 = vpop.f32.mrf.mxu0
    %v1260 = vadd.f32 0.0, %v1259
    %1261 = vdwg.mxu0
    %1262 = vmatprep.subr.mxu0 %v985
    %1263 = vmatpush1.msra.mxu0 %v984
    %1264 = vmatprep.subr.mxu0 %v977
    %1265 = vmatpush1.msra.mxu0 %v976
    %1266 = vmatprep.subr.mxu0 %v969
    %1267 = vmatpush1.msra.mxu0 %v968
    %1268 = vmatprep.subr.mxu0 %v961
    %1269 = vmatpush1.msra.mxu0 %v960
    %1270 = vmatprep.subr.mxu0 %v953
    %1271 = vmatpush1.msra.mxu0 %v952
    %1272 = vmatprep.subr.mxu0 %v945
    %1273 = vmatpush1.msra.mxu0 %v944
    %1274 = vmatprep.subr.mxu0 %v937
    %1275 = vmatpush1.msra.mxu0 %v936
    %1276 = vmatprep.subr.mxu0 %v929
    %1277 = vmatpush1.msra.mxu0 %v928
    %1278 = vmatprep.subr.mxu0 %v921
    %1279 = vmatpush1.msra.mxu0 %v920
    %1280 = vmatprep.subr.mxu0 %v913
    %1281 = vmatpush1.msra.mxu0 %v912
    %1282 = vmatprep.subr.mxu0 %v905
    %1283 = vmatpush1.msra.mxu0 %v904
    %1284 = vmatprep.subr.mxu0 %v897
    %1285 = vmatpush1.msra.mxu0 %v896
    %1286 = vmatprep.subr.mxu0 %v889
    %1287 = vmatpush1.msra.mxu0 %v888
    %1288 = vmatprep.subr.mxu0 %v881
    %1289 = vmatpush1.msra.mxu0 %v880
    %1290 = vmatprep.subr.mxu0 %v873
    %1291 = vmatpush1.msra.mxu0 %v872
    %1292 = vmatprep.subr.mxu0 %v865
    %1293 = vmatpush1.msra.mxu0 %v864
    %1294 = vmatprep.subr.mxu0 %v1113
    %1295 = vmatpush2.msra.mxu0 %v1112
    %1296 = vmatprep.subr.mxu0 %v1105
    %1297 = vmatpush2.msra.mxu0 %v1104
    %1298 = vmatprep.subr.mxu0 %v1097
    %1299 = vmatpush2.msra.mxu0 %v1096
    %1300 = vmatprep.subr.mxu0 %v1089
    %1301 = vmatpush2.msra.mxu0 %v1088
    %1302 = vmatprep.subr.mxu0 %v1081
    %1303 = vmatpush2.msra.mxu0 %v1080
    %1304 = vmatprep.subr.mxu0 %v1073
    %1305 = vmatpush2.msra.mxu0 %v1072
    %1306 = vmatprep.subr.mxu0 %v1065
    %1307 = vmatpush2.msra.mxu0 %v1064
    %1308 = vmatprep.subr.mxu0 %v1057
    %1309 = vmatpush2.msra.mxu0 %v1056
    %1310 = vmatprep.subr.mxu0 %v1049
    %1311 = vmatpush2.msra.mxu0 %v1048
    %1312 = vmatprep.subr.mxu0 %v1041
    %1313 = vmatpush2.msra.mxu0 %v1040
    %1314 = vmatprep.subr.mxu0 %v1033
    %1315 = vmatpush2.msra.mxu0 %v1032
    %1316 = vmatprep.subr.mxu0 %v1025
    %1317 = vmatpush2.msra.mxu0 %v1024
    %1318 = vmatprep.subr.mxu0 %v1017
    %1319 = vmatpush2.msra.mxu0 %v1016
    %1320 = vmatprep.subr.mxu0 %v1009
    %1321 = vmatpush2.msra.mxu0 %v1008
    %1322 = vmatprep.subr.mxu0 %v1001
    %1323 = vmatpush2.msra.mxu0 %v1000
    %1324 = vmatprep.subr.mxu0 %v993
    %1325 = vmatpush2.msra.mxu0 %v992
    %1326 = vmatprep.mubr.f32.mxu0 %v1117
    %1327 = vmatmul.mubr.f32.gmra.mxu0 %v1116
    %v1328 = vpop.f32.mrf.mxu0
    %v1329 = vadd.f32 0.0, %v1328
    %v1330 = vpop.f32.mrf.mxu0
    %v1331 = vadd.f32 0.0, %v1330
    %1332 = vdwg.mxu0
    %1333 = vmatprep.subr.mxu0 %v987
    %1334 = vmatpush1.msra.mxu0 %v986
    %1335 = vmatprep.subr.mxu0 %v979
    %1336 = vmatpush1.msra.mxu0 %v978
    %1337 = vmatprep.subr.mxu0 %v971
    %1338 = vmatpush1.msra.mxu0 %v970
    %1339 = vmatprep.subr.mxu0 %v963
    %1340 = vmatpush1.msra.mxu0 %v962
    %1341 = vmatprep.subr.mxu0 %v955
    %1342 = vmatpush1.msra.mxu0 %v954
    %1343 = vmatprep.subr.mxu0 %v947
    %1344 = vmatpush1.msra.mxu0 %v946
    %1345 = vmatprep.subr.mxu0 %v939
    %1346 = vmatpush1.msra.mxu0 %v938
    %1347 = vmatprep.subr.mxu0 %v931
    %1348 = vmatpush1.msra.mxu0 %v930
    %1349 = vmatprep.subr.mxu0 %v923
    %1350 = vmatpush1.msra.mxu0 %v922
    %1351 = vmatprep.subr.mxu0 %v915
    %1352 = vmatpush1.msra.mxu0 %v914
    %1353 = vmatprep.subr.mxu0 %v907
    %1354 = vmatpush1.msra.mxu0 %v906
    %1355 = vmatprep.subr.mxu0 %v899
    %1356 = vmatpush1.msra.mxu0 %v898
    %1357 = vmatprep.subr.mxu0 %v891
    %1358 = vmatpush1.msra.mxu0 %v890
    %1359 = vmatprep.subr.mxu0 %v883
    %1360 = vmatpush1.msra.mxu0 %v882
    %1361 = vmatprep.subr.mxu0 %v875
    %1362 = vmatpush1.msra.mxu0 %v874
    %1363 = vmatprep.subr.mxu0 %v867
    %1364 = vmatpush1.msra.mxu0 %v866
    %1365 = vmatprep.subr.mxu0 %v1115
    %1366 = vmatpush2.msra.mxu0 %v1114
    %1367 = vmatprep.subr.mxu0 %v1107
    %1368 = vmatpush2.msra.mxu0 %v1106
    %1369 = vmatprep.subr.mxu0 %v1099
    %1370 = vmatpush2.msra.mxu0 %v1098
    %1371 = vmatprep.subr.mxu0 %v1091
    %1372 = vmatpush2.msra.mxu0 %v1090
    %1373 = vmatprep.subr.mxu0 %v1083
    %1374 = vmatpush2.msra.mxu0 %v1082
    %1375 = vmatprep.subr.mxu0 %v1075
    %1376 = vmatpush2.msra.mxu0 %v1074
    %1377 = vmatprep.subr.mxu0 %v1067
    %1378 = vmatpush2.msra.mxu0 %v1066
    %1379 = vmatprep.subr.mxu0 %v1059
    %1380 = vmatpush2.msra.mxu0 %v1058
    %1381 = vmatprep.subr.mxu0 %v1051
    %1382 = vmatpush2.msra.mxu0 %v1050
    %1383 = vmatprep.subr.mxu0 %v1043
    %1384 = vmatpush2.msra.mxu0 %v1042
    %1385 = vmatprep.subr.mxu0 %v1035
    %1386 = vmatpush2.msra.mxu0 %v1034
    %1387 = vmatprep.subr.mxu0 %v1027
    %1388 = vmatpush2.msra.mxu0 %v1026
    %1389 = vmatprep.subr.mxu0 %v1019
    %1390 = vmatpush2.msra.mxu0 %v1018
    %1391 = vmatprep.subr.mxu0 %v1011
    %1392 = vmatpush2.msra.mxu0 %v1010
    %1393 = vmatprep.subr.mxu0 %v1003
    %1394 = vmatpush2.msra.mxu0 %v1002
    %1395 = vmatprep.subr.mxu0 %v995
    %1396 = vmatpush2.msra.mxu0 %v994
    %1397 = vmatprep.mubr.f32.mxu0 %v1117
    %1398 = vmatmul.mubr.f32.gmra.mxu0 %v1116
    %v1399 = vpop.f32.mrf.mxu0
    %v1400 = vadd.f32 0.0, %v1399
    %v1401 = vpop.f32.mrf.mxu0
    %v1402 = vadd.f32 0.0, %v1401
    %1403 = vdwg.mxu0
    %s1404 = smul.u32 0, 4
    %s1405 = smul.addr %s1404, 8
    %s1406 = scalar_lea.vmem [#allocation2], %s1405
    %v1407 = vld [vmem:[%s1406] sm:$0xff]
    %v1408 = vld [vmem:[%s1406 + $0x8] sm:$0xff]
    %v1409 = vld [vmem:[%s1406 + $0x10] sm:$0xff]
    %v1410 = vld [vmem:[%s1406 + $0x18] sm:$0xff]
    %v1411 = vadd.f32 %v1187, %v1407
    %v1412 = vadd.f32 %v1189, %v1408
    %v1413 = vadd.f32 %v1258, %v1409
    %v1414 = vadd.f32 %v1260, %v1410
    %s1415 = smul.u32 7, 4
    %s1416 = smul.addr %s1415, 8
    %s1417 = scalar_lea.vmem [#allocation3], %s1416
    %v1418 = vld [vmem:[%s1417] sm:$0xff]
    %v1419 = vld [vmem:[%s1417 + $0x8] sm:$0xff]
    %v1420 = vld [vmem:[%s1417 + $0x10] sm:$0xff]
    %v1421 = vld [vmem:[%s1417 + $0x18] sm:$0xff]
    %v1422 = vadd.f32 %v1329, %v1418
    %v1423 = vadd.f32 %v1331, %v1419
    %v1424 = vadd.f32 %v1400, %v1420
    %v1425 = vadd.f32 %v1402, %v1421
    %v1426 = vtanh.pop %v1411
    %v1427 = vtanh.pop %v1412
    %v1428 = vtanh.pop %v1413
    %v1429 = vtanh.pop %v1414
    %v1430 = vtanh.pop %v1422
    %v1431 = vtanh.pop %v1423
    %v1432 = vtanh.pop %v1424
    %v1433 = vtanh.pop %v1425
    %v1434 = vmul.f32 %v1426, 0.5
    %v1435 = vadd.f32 %v1434, 0.5
    %v1436 = vmul.f32 %v1427, 0.5
    %v1437 = vadd.f32 %v1436, 0.5
    %v1438 = vmul.f32 %v1429, 0.5
    %v1439 = vadd.f32 %v1438, 0.5
    %v1440 = vmul.f32 %v1430, 0.5
    %v1441 = vadd.f32 %v1440, 0.5
    %v1442 = vmul.f32 %v1431, 0.5
    %v1443 = vadd.f32 %v1442, 0.5
    %v1444 = vmul.f32 %v1433, 0.5
    %v1445 = vadd.f32 %v1444, 0.5
    %v1446 = vmul.f32 %v1437, %v1118
    %v1447 = vmul.f32 %v1435, %v1428
    %v1448 = vadd.f32 %v1446, %v1447
    %v1449 = vmul.f32 %v1443, %v1119
    %v1450 = vmul.f32 %v1441, %v1432
    %v1451 = vadd.f32 %v1449, %v1450
    %v1452 = vtanh.pop %v1448
    %v1453 = vmul.f32 %v1439, %v1452
    %v1454 = vtanh.pop %v1451
    %v1455 = vmul.f32 %v1445, %v1454
    %1456 = vst [vmem:[#allocation18] sm:$0xff] %v1453
    %s1457 = scalar_lea.vmem [#allocation19], 56
    %1458 = vst [vmem:[%s1457] sm:$0xff] %v1455
    %1459 = vmatprep.subr.mxu0 %v981
    %1460 = vmatpush1.msra.mxu0 %v980
    %1461 = vmatprep.subr.mxu0 %v973
    %1462 = vmatpush1.msra.mxu0 %v972
    %1463 = vmatprep.subr.mxu0 %v965
    %1464 = vmatpush1.msra.mxu0 %v964
    %1465 = vmatprep.subr.mxu0 %v957
    %1466 = vmatpush1.msra.mxu0 %v956
    %1467 = vmatprep.subr.mxu0 %v949
    %1468 = vmatpush1.msra.mxu0 %v948
    %1469 = vmatprep.subr.mxu0 %v941
    %1470 = vmatpush1.msra.mxu0 %v940
    %1471 = vmatprep.subr.mxu0 %v933
    %1472 = vmatpush1.msra.mxu0 %v932
    %1473 = vmatprep.subr.mxu0 %v925
    %1474 = vmatpush1.msra.mxu0 %v924
    %1475 = vmatprep.subr.mxu0 %v917
    %1476 = vmatpush1.msra.mxu0 %v916
    %1477 = vmatprep.subr.mxu0 %v909
    %1478 = vmatpush1.msra.mxu0 %v908
    %1479 = vmatprep.subr.mxu0 %v901
    %1480 = vmatpush1.msra.mxu0 %v900
    %1481 = vmatprep.subr.mxu0 %v893
    %1482 = vmatpush1.msra.mxu0 %v892
    %1483 = vmatprep.subr.mxu0 %v885
    %1484 = vmatpush1.msra.mxu0 %v884
    %1485 = vmatprep.subr.mxu0 %v877
    %1486 = vmatpush1.msra.mxu0 %v876
    %1487 = vmatprep.subr.mxu0 %v869
    %1488 = vmatpush1.msra.mxu0 %v868
    %1489 = vmatprep.subr.mxu0 %v861
    %1490 = vmatpush1.msra.mxu0 %v860
    %1491 = vmatprep.subr.mxu0 %v1109
    %1492 = vmatpush2.msra.mxu0 %v1108
    %1493 = vmatprep.subr.mxu0 %v1101
    %1494 = vmatpush2.msra.mxu0 %v1100
    %1495 = vmatprep.subr.mxu0 %v1093
    %1496 = vmatpush2.msra.mxu0 %v1092
    %1497 = vmatprep.subr.mxu0 %v1085
    %1498 = vmatpush2.msra.mxu0 %v1084
    %1499 = vmatprep.subr.mxu0 %v1077
    %1500 = vmatpush2.msra.mxu0 %v1076
    %1501 = vmatprep.subr.mxu0 %v1069
    %1502 = vmatpush2.msra.mxu0 %v1068
    %1503 = vmatprep.subr.mxu0 %v1061
    %1504 = vmatpush2.msra.mxu0 %v1060
    %1505 = vmatprep.subr.mxu0 %v1053
    %1506 = vmatpush2.msra.mxu0 %v1052
    %1507 = vmatprep.subr.mxu0 %v1045
    %1508 = vmatpush2.msra.mxu0 %v1044
    %1509 = vmatprep.subr.mxu0 %v1037
    %1510 = vmatpush2.msra.mxu0 %v1036
    %1511 = vmatprep.subr.mxu0 %v1029
    %1512 = vmatpush2.msra.mxu0 %v1028
    %1513 = vmatprep.subr.mxu0 %v1021
    %1514 = vmatpush2.msra.mxu0 %v1020
    %1515 = vmatprep.subr.mxu0 %v1013
    %1516 = vmatpush2.msra.mxu0 %v1012
    %1517 = vmatprep.subr.mxu0 %v1005
    %1518 = vmatpush2.msra.mxu0 %v1004
    %1519 = vmatprep.subr.mxu0 %v997
    %1520 = vmatpush2.msra.mxu0 %v996
    %1521 = vmatprep.subr.mxu0 %v989
    %1522 = vmatpush2.msra.mxu0 %v988
    %1523 = vmatprep.mubr.f32.mxu0 %v1455
    %1524 = vmatmul.mubr.f32.gmra.mxu0 %v1453
    %v1525 = vpop.f32.mrf.mxu0
    %v1526 = vadd.f32 0.0, %v1525
    %v1527 = vpop.f32.mrf.mxu0
    %v1528 = vadd.f32 0.0, %v1527
    %1529 = vdwg.mxu0
    %1530 = vmatprep.subr.mxu0 %v983
    %1531 = vmatpush1.msra.mxu0 %v982
    %1532 = vmatprep.subr.mxu0 %v975
    %1533 = vmatpush1.msra.mxu0 %v974
    %1534 = vmatprep.subr.mxu0 %v967
    %1535 = vmatpush1.msra.mxu0 %v966
    %1536 = vmatprep.subr.mxu0 %v959
    %1537 = vmatpush1.msra.mxu0 %v958
    %1538 = vmatprep.subr.mxu0 %v951
    %1539 = vmatpush1.msra.mxu0 %v950
    %1540 = vmatprep.subr.mxu0 %v943
    %1541 = vmatpush1.msra.mxu0 %v942
    %1542 = vmatprep.subr.mxu0 %v935
    %1543 = vmatpush1.msra.mxu0 %v934
    %1544 = vmatprep.subr.mxu0 %v927
    %1545 = vmatpush1.msra.mxu0 %v926
    %1546 = vmatprep.subr.mxu0 %v919
    %1547 = vmatpush1.msra.mxu0 %v918
    %1548 = vmatprep.subr.mxu0 %v911
    %1549 = vmatpush1.msra.mxu0 %v910
    %1550 = vmatprep.subr.mxu0 %v903
    %1551 = vmatpush1.msra.mxu0 %v902
    %1552 = vmatprep.subr.mxu0 %v895
    %1553 = vmatpush1.msra.mxu0 %v894
    %1554 = vmatprep.subr.mxu0 %v887
    %1555 = vmatpush1.msra.mxu0 %v886
    %1556 = vmatprep.subr.mxu0 %v879
    %1557 = vmatpush1.msra.mxu0 %v878
    %1558 = vmatprep.subr.mxu0 %v871
    %1559 = vmatpush1.msra.mxu0 %v870
    %1560 = vmatprep.subr.mxu0 %v863
    %1561 = vmatpush1.msra.mxu0 %v862
    %1562 = vmatprep.subr.mxu0 %v1111
    %1563 = vmatpush2.msra.mxu0 %v1110
    %1564 = vmatprep.subr.mxu0 %v1103
    %1565 = vmatpush2.msra.mxu0 %v1102
    %1566 = vmatprep.subr.mxu0 %v1095
    %1567 = vmatpush2.msra.mxu0 %v1094
    %1568 = vmatprep.subr.mxu0 %v1087
    %1569 = vmatpush2.msra.mxu0 %v1086
    %1570 = vmatprep.subr.mxu0 %v1079
    %1571 = vmatpush2.msra.mxu0 %v1078
    %1572 = vmatprep.subr.mxu0 %v1071
    %1573 = vmatpush2.msra.mxu0 %v1070
    %1574 = vmatprep.subr.mxu0 %v1063
    %1575 = vmatpush2.msra.mxu0 %v1062
    %1576 = vmatprep.subr.mxu0 %v1055
    %1577 = vmatpush2.msra.mxu0 %v1054
    %1578 = vmatprep.subr.mxu0 %v1047
    %1579 = vmatpush2.msra.mxu0 %v1046
    %1580 = vmatprep.subr.mxu0 %v1039
    %1581 = vmatpush2.msra.mxu0 %v1038
    %1582 = vmatprep.subr.mxu0 %v1031
    %1583 = vmatpush2.msra.mxu0 %v1030
    %1584 = vmatprep.subr.mxu0 %v1023
    %1585 = vmatpush2.msra.mxu0 %v1022
    %1586 = vmatprep.subr.mxu0 %v1015
    %1587 = vmatpush2.msra.mxu0 %v1014
    %1588 = vmatprep.subr.mxu0 %v1007
    %1589 = vmatpush2.msra.mxu0 %v1006
    %1590 = vmatprep.subr.mxu0 %v999
    %1591 = vmatpush2.msra.mxu0 %v998
    %1592 = vmatprep.subr.mxu0 %v991
    %1593 = vmatpush2.msra.mxu0 %v990
    %1594 = vmatprep.mubr.f32.mxu0 %v1455
    %1595 = vmatmul.mubr.f32.gmra.mxu0 %v1453
    %v1596 = vpop.f32.mrf.mxu0
    %v1597 = vadd.f32 0.0, %v1596
    %v1598 = vpop.f32.mrf.mxu0
    %v1599 = vadd.f32 0.0, %v1598
    %1600 = vdwg.mxu0
    %1601 = vmatprep.subr.mxu0 %v985
    %1602 = vmatpush1.msra.mxu0 %v984
    %1603 = vmatprep.subr.mxu0 %v977
    %1604 = vmatpush1.msra.mxu0 %v976
    %1605 = vmatprep.subr.mxu0 %v969
    %1606 = vmatpush1.msra.mxu0 %v968
    %1607 = vmatprep.subr.mxu0 %v961
    %1608 = vmatpush1.msra.mxu0 %v960
    %1609 = vmatprep.subr.mxu0 %v953
    %1610 = vmatpush1.msra.mxu0 %v952
    %1611 = vmatprep.subr.mxu0 %v945
    %1612 = vmatpush1.msra.mxu0 %v944
    %1613 = vmatprep.subr.mxu0 %v937
    %1614 = vmatpush1.msra.mxu0 %v936
    %1615 = vmatprep.subr.mxu0 %v929
    %1616 = vmatpush1.msra.mxu0 %v928
    %1617 = vmatprep.subr.mxu0 %v921
    %1618 = vmatpush1.msra.mxu0 %v920
    %1619 = vmatprep.subr.mxu0 %v913
    %1620 = vmatpush1.msra.mxu0 %v912
    %1621 = vmatprep.subr.mxu0 %v905
    %1622 = vmatpush1.msra.mxu0 %v904
    %1623 = vmatprep.subr.mxu0 %v897
    %1624 = vmatpush1.msra.mxu0 %v896
    %1625 = vmatprep.subr.mxu0 %v889
    %1626 = vmatpush1.msra.mxu0 %v888
    %1627 = vmatprep.subr.mxu0 %v881
    %1628 = vmatpush1.msra.mxu0 %v880
    %1629 = vmatprep.subr.mxu0 %v873
    %1630 = vmatpush1.msra.mxu0 %v872
    %1631 = vmatprep.subr.mxu0 %v865
    %1632 = vmatpush1.msra.mxu0 %v864
    %1633 = vmatprep.subr.mxu0 %v1113
    %1634 = vmatpush2.msra.mxu0 %v1112
    %1635 = vmatprep.subr.mxu0 %v1105
    %1636 = vmatpush2.msra.mxu0 %v1104
    %1637 = vmatprep.subr.mxu0 %v1097
    %1638 = vmatpush2.msra.mxu0 %v1096
    %1639 = vmatprep.subr.mxu0 %v1089
    %1640 = vmatpush2.msra.mxu0 %v1088
    %1641 = vmatprep.subr.mxu0 %v1081
    %1642 = vmatpush2.msra.mxu0 %v1080
    %1643 = vmatprep.subr.mxu0 %v1073
    %1644 = vmatpush2.msra.mxu0 %v1072
    %1645 = vmatprep.subr.mxu0 %v1065
    %1646 = vmatpush2.msra.mxu0 %v1064
    %1647 = vmatprep.subr.mxu0 %v1057
    %1648 = vmatpush2.msra.mxu0 %v1056
    %1649 = vmatprep.subr.mxu0 %v1049
    %1650 = vmatpush2.msra.mxu0 %v1048
    %1651 = vmatprep.subr.mxu0 %v1041
    %1652 = vmatpush2.msra.mxu0 %v1040
    %1653 = vmatprep.subr.mxu0 %v1033
    %1654 = vmatpush2.msra.mxu0 %v1032
    %1655 = vmatprep.subr.mxu0 %v1025
    %1656 = vmatpush2.msra.mxu0 %v1024
    %1657 = vmatprep.subr.mxu0 %v1017
    %1658 = vmatpush2.msra.mxu0 %v1016
    %1659 = vmatprep.subr.mxu0 %v1009
    %1660 = vmatpush2.msra.mxu0 %v1008
    %1661 = vmatprep.subr.mxu0 %v1001
    %1662 = vmatpush2.msra.mxu0 %v1000
    %1663 = vmatprep.subr.mxu0 %v993
    %1664 = vmatpush2.msra.mxu0 %v992
    %1665 = vmatprep.mubr.f32.mxu0 %v1455
    %1666 = vmatmul.mubr.f32.gmra.mxu0 %v1453
    %v1667 = vpop.f32.mrf.mxu0
    %v1668 = vadd.f32 0.0, %v1667
    %v1669 = vpop.f32.mrf.mxu0
    %v1670 = vadd.f32 0.0, %v1669
    %1671 = vdwg.mxu0
    %1672 = vmatprep.subr.mxu0 %v987
    %1673 = vmatpush1.msra.mxu0 %v986
    %1674 = vmatprep.subr.mxu0 %v979
    %1675 = vmatpush1.msra.mxu0 %v978
    %1676 = vmatprep.subr.mxu0 %v971
    %1677 = vmatpush1.msra.mxu0 %v970
    %1678 = vmatprep.subr.mxu0 %v963
    %1679 = vmatpush1.msra.mxu0 %v962
    %1680 = vmatprep.subr.mxu0 %v955
    %1681 = vmatpush1.msra.mxu0 %v954
    %1682 = vmatprep.subr.mxu0 %v947
    %1683 = vmatpush1.msra.mxu0 %v946
    %1684 = vmatprep.subr.mxu0 %v939
    %1685 = vmatpush1.msra.mxu0 %v938
    %1686 = vmatprep.subr.mxu0 %v931
    %1687 = vmatpush1.msra.mxu0 %v930
    %1688 = vmatprep.subr.mxu0 %v923
    %1689 = vmatpush1.msra.mxu0 %v922
    %1690 = vmatprep.subr.mxu0 %v915
    %1691 = vmatpush1.msra.mxu0 %v914
    %1692 = vmatprep.subr.mxu0 %v907
    %1693 = vmatpush1.msra.mxu0 %v906
    %1694 = vmatprep.subr.mxu0 %v899
    %1695 = vmatpush1.msra.mxu0 %v898
    %1696 = vmatprep.subr.mxu0 %v891
    %1697 = vmatpush1.msra.mxu0 %v890
    %1698 = vmatprep.subr.mxu0 %v883
    %1699 = vmatpush1.msra.mxu0 %v882
    %1700 = vmatprep.subr.mxu0 %v875
    %1701 = vmatpush1.msra.mxu0 %v874
    %1702 = vmatprep.subr.mxu0 %v867
    %1703 = vmatpush1.msra.mxu0 %v866
    %1704 = vmatprep.subr.mxu0 %v1115
    %1705 = vmatpush2.msra.mxu0 %v1114
    %1706 = vmatprep.subr.mxu0 %v1107
    %1707 = vmatpush2.msra.mxu0 %v1106
    %1708 = vmatprep.subr.mxu0 %v1099
    %1709 = vmatpush2.msra.mxu0 %v1098
    %1710 = vmatprep.subr.mxu0 %v1091
    %1711 = vmatpush2.msra.mxu0 %v1090
    %1712 = vmatprep.subr.mxu0 %v1083
    %1713 = vmatpush2.msra.mxu0 %v1082
    %1714 = vmatprep.subr.mxu0 %v1075
    %1715 = vmatpush2.msra.mxu0 %v1074
    %1716 = vmatprep.subr.mxu0 %v1067
    %1717 = vmatpush2.msra.mxu0 %v1066
    %1718 = vmatprep.subr.mxu0 %v1059
    %1719 = vmatpush2.msra.mxu0 %v1058
    %1720 = vmatprep.subr.mxu0 %v1051
    %1721 = vmatpush2.msra.mxu0 %v1050
    %1722 = vmatprep.subr.mxu0 %v1043
    %1723 = vmatpush2.msra.mxu0 %v1042
    %1724 = vmatprep.subr.mxu0 %v1035
    %1725 = vmatpush2.msra.mxu0 %v1034
    %1726 = vmatprep.subr.mxu0 %v1027
    %1727 = vmatpush2.msra.mxu0 %v1026
    %1728 = vmatprep.subr.mxu0 %v1019
    %1729 = vmatpush2.msra.mxu0 %v1018
    %1730 = vmatprep.subr.mxu0 %v1011
    %1731 = vmatpush2.msra.mxu0 %v1010
    %1732 = vmatprep.subr.mxu0 %v1003
    %1733 = vmatpush2.msra.mxu0 %v1002
    %1734 = vmatprep.subr.mxu0 %v995
    %1735 = vmatpush2.msra.mxu0 %v994
    %1736 = vmatprep.mubr.f32.mxu0 %v1455
    %1737 = vmatmul.mubr.f32.gmra.mxu0 %v1453
    %v1738 = vpop.f32.mrf.mxu0
    %v1739 = vadd.f32 0.0, %v1738
    %v1740 = vpop.f32.mrf.mxu0
    %v1741 = vadd.f32 0.0, %v1740
    %1742 = vdwg.mxu0
    %s1743 = smul.u32 1, 4
    %s1744 = smul.addr %s1743, 8
    %s1745 = scalar_lea.vmem [#allocation2], %s1744
    %v1746 = vld [vmem:[%s1745] sm:$0xff]
    %v1747 = vld [vmem:[%s1745 + $0x8] sm:$0xff]
    %v1748 = vld [vmem:[%s1745 + $0x10] sm:$0xff]
    %v1749 = vld [vmem:[%s1745 + $0x18] sm:$0xff]
    %v1750 = vadd.f32 %v1526, %v1746
    %v1751 = vadd.f32 %v1528, %v1747
    %v1752 = vadd.f32 %v1597, %v1748
    %v1753 = vadd.f32 %v1599, %v1749
    %s1754 = smul.u32 6, 4
    %s1755 = smul.addr %s1754, 8
    %s1756 = scalar_lea.vmem [#allocation3], %s1755
    %v1757 = vld [vmem:[%s1756] sm:$0xff]
    %v1758 = vld [vmem:[%s1756 + $0x8] sm:$0xff]
    %v1759 = vld [vmem:[%s1756 + $0x10] sm:$0xff]
    %v1760 = vld [vmem:[%s1756 + $0x18] sm:$0xff]
    %v1761 = vadd.f32 %v1668, %v1757
    %v1762 = vadd.f32 %v1670, %v1758
    %v1763 = vadd.f32 %v1739, %v1759
    %v1764 = vadd.f32 %v1741, %v1760
    %v1765 = vtanh.pop %v1750
    %v1766 = vtanh.pop %v1751
    %v1767 = vtanh.pop %v1752
    %v1768 = vtanh.pop %v1753
    %v1769 = vtanh.pop %v1761
    %v1770 = vtanh.pop %v1762
    %v1771 = vtanh.pop %v1763
    %v1772 = vtanh.pop %v1764
    %v1773 = vmul.f32 %v1765, 0.5
    %v1774 = vadd.f32 %v1773, 0.5
    %v1775 = vmul.f32 %v1766, 0.5
    %v1776 = vadd.f32 %v1775, 0.5
    %v1777 = vmul.f32 %v1768, 0.5
    %v1778 = vadd.f32 %v1777, 0.5
    %v1779 = vmul.f32 %v1769, 0.5
    %v1780 = vadd.f32 %v1779, 0.5
    %v1781 = vmul.f32 %v1770, 0.5
    %v1782 = vadd.f32 %v1781, 0.5
    %v1783 = vmul.f32 %v1772, 0.5
    %v1784 = vadd.f32 %v1783, 0.5
    %v1785 = vmul.f32 %v1776, %v1448
    %v1786 = vmul.f32 %v1774, %v1767
    %v1787 = vadd.f32 %v1785, %v1786
    %v1788 = vmul.f32 %v1782, %v1451
    %v1789 = vmul.f32 %v1780, %v1771
    %v1790 = vadd.f32 %v1788, %v1789
    %v1791 = vtanh.pop %v1787
    %v1792 = vmul.f32 %v1778, %v1791
    %v1793 = vtanh.pop %v1790
    %v1794 = vmul.f32 %v1784, %v1793
    %s1795 = scalar_lea.vmem [#allocation18], 8
    %1796 = vst [vmem:[%s1795] sm:$0xff] %v1792
    %s1797 = scalar_lea.vmem [#allocation19], 48
    %1798 = vst [vmem:[%s1797] sm:$0xff] %v1794
    %1799 = vmatprep.subr.mxu0 %v981
    %1800 = vmatpush1.msra.mxu0 %v980
    %1801 = vmatprep.subr.mxu0 %v973
    %1802 = vmatpush1.msra.mxu0 %v972
    %1803 = vmatprep.subr.mxu0 %v965
    %1804 = vmatpush1.msra.mxu0 %v964
    %1805 = vmatprep.subr.mxu0 %v957
    %1806 = vmatpush1.msra.mxu0 %v956
    %1807 = vmatprep.subr.mxu0 %v949
    %1808 = vmatpush1.msra.mxu0 %v948
    %1809 = vmatprep.subr.mxu0 %v941
    %1810 = vmatpush1.msra.mxu0 %v940
    %1811 = vmatprep.subr.mxu0 %v933
    %1812 = vmatpush1.msra.mxu0 %v932
    %1813 = vmatprep.subr.mxu0 %v925
    %1814 = vmatpush1.msra.mxu0 %v924
    %1815 = vmatprep.subr.mxu0 %v917
    %1816 = vmatpush1.msra.mxu0 %v916
    %1817 = vmatprep.subr.mxu0 %v909
    %1818 = vmatpush1.msra.mxu0 %v908
    %1819 = vmatprep.subr.mxu0 %v901
    %1820 = vmatpush1.msra.mxu0 %v900
    %1821 = vmatprep.subr.mxu0 %v893
    %1822 = vmatpush1.msra.mxu0 %v892
    %1823 = vmatprep.subr.mxu0 %v885
    %1824 = vmatpush1.msra.mxu0 %v884
    %1825 = vmatprep.subr.mxu0 %v877
    %1826 = vmatpush1.msra.mxu0 %v876
    %1827 = vmatprep.subr.mxu0 %v869
    %1828 = vmatpush1.msra.mxu0 %v868
    %1829 = vmatprep.subr.mxu0 %v861
    %1830 = vmatpush1.msra.mxu0 %v860
    %1831 = vmatprep.subr.mxu0 %v1109
    %1832 = vmatpush2.msra.mxu0 %v1108
    %1833 = vmatprep.subr.mxu0 %v1101
    %1834 = vmatpush2.msra.mxu0 %v1100
    %1835 = vmatprep.subr.mxu0 %v1093
    %1836 = vmatpush2.msra.mxu0 %v1092
    %1837 = vmatprep.subr.mxu0 %v1085
    %1838 = vmatpush2.msra.mxu0 %v1084
    %1839 = vmatprep.subr.mxu0 %v1077
    %1840 = vmatpush2.msra.mxu0 %v1076
    %1841 = vmatprep.subr.mxu0 %v1069
    %1842 = vmatpush2.msra.mxu0 %v1068
    %1843 = vmatprep.subr.mxu0 %v1061
    %1844 = vmatpush2.msra.mxu0 %v1060
    %1845 = vmatprep.subr.mxu0 %v1053
    %1846 = vmatpush2.msra.mxu0 %v1052
    %1847 = vmatprep.subr.mxu0 %v1045
    %1848 = vmatpush2.msra.mxu0 %v1044
    %1849 = vmatprep.subr.mxu0 %v1037
    %1850 = vmatpush2.msra.mxu0 %v1036
    %1851 = vmatprep.subr.mxu0 %v1029
    %1852 = vmatpush2.msra.mxu0 %v1028
    %1853 = vmatprep.subr.mxu0 %v1021
    %1854 = vmatpush2.msra.mxu0 %v1020
    %1855 = vmatprep.subr.mxu0 %v1013
    %1856 = vmatpush2.msra.mxu0 %v1012
    %1857 = vmatprep.subr.mxu0 %v1005
    %1858 = vmatpush2.msra.mxu0 %v1004
    %1859 = vmatprep.subr.mxu0 %v997
    %1860 = vmatpush2.msra.mxu0 %v996
    %1861 = vmatprep.subr.mxu0 %v989
    %1862 = vmatpush2.msra.mxu0 %v988
    %1863 = vmatprep.mubr.f32.mxu0 %v1794
    %1864 = vmatmul.mubr.f32.gmra.mxu0 %v1792
    %v1865 = vpop.f32.mrf.mxu0
    %v1866 = vadd.f32 0.0, %v1865
    %v1867 = vpop.f32.mrf.mxu0
    %v1868 = vadd.f32 0.0, %v1867
    %1869 = vdwg.mxu0
    %1870 = vmatprep.subr.mxu0 %v983
    %1871 = vmatpush1.msra.mxu0 %v982
    %1872 = vmatprep.subr.mxu0 %v975
    %1873 = vmatpush1.msra.mxu0 %v974
    %1874 = vmatprep.subr.mxu0 %v967
    %1875 = vmatpush1.msra.mxu0 %v966
    %1876 = vmatprep.subr.mxu0 %v959
    %1877 = vmatpush1.msra.mxu0 %v958
    %1878 = vmatprep.subr.mxu0 %v951
    %1879 = vmatpush1.msra.mxu0 %v950
    %1880 = vmatprep.subr.mxu0 %v943
    %1881 = vmatpush1.msra.mxu0 %v942
    %1882 = vmatprep.subr.mxu0 %v935
    %1883 = vmatpush1.msra.mxu0 %v934
    %1884 = vmatprep.subr.mxu0 %v927
    %1885 = vmatpush1.msra.mxu0 %v926
    %1886 = vmatprep.subr.mxu0 %v919
    %1887 = vmatpush1.msra.mxu0 %v918
    %1888 = vmatprep.subr.mxu0 %v911
    %1889 = vmatpush1.msra.mxu0 %v910
    %1890 = vmatprep.subr.mxu0 %v903
    %1891 = vmatpush1.msra.mxu0 %v902
    %1892 = vmatprep.subr.mxu0 %v895
    %1893 = vmatpush1.msra.mxu0 %v894
    %1894 = vmatprep.subr.mxu0 %v887
    %1895 = vmatpush1.msra.mxu0 %v886
    %1896 = vmatprep.subr.mxu0 %v879
    %1897 = vmatpush1.msra.mxu0 %v878
    %1898 = vmatprep.subr.mxu0 %v871
    %1899 = vmatpush1.msra.mxu0 %v870
    %1900 = vmatprep.subr.mxu0 %v863
    %1901 = vmatpush1.msra.mxu0 %v862
    %1902 = vmatprep.subr.mxu0 %v1111
    %1903 = vmatpush2.msra.mxu0 %v1110
    %1904 = vmatprep.subr.mxu0 %v1103
    %1905 = vmatpush2.msra.mxu0 %v1102
    %1906 = vmatprep.subr.mxu0 %v1095
    %1907 = vmatpush2.msra.mxu0 %v1094
    %1908 = vmatprep.subr.mxu0 %v1087
    %1909 = vmatpush2.msra.mxu0 %v1086
    %1910 = vmatprep.subr.mxu0 %v1079
    %1911 = vmatpush2.msra.mxu0 %v1078
    %1912 = vmatprep.subr.mxu0 %v1071
    %1913 = vmatpush2.msra.mxu0 %v1070
    %1914 = vmatprep.subr.mxu0 %v1063
    %1915 = vmatpush2.msra.mxu0 %v1062
    %1916 = vmatprep.subr.mxu0 %v1055
    %1917 = vmatpush2.msra.mxu0 %v1054
    %1918 = vmatprep.subr.mxu0 %v1047
    %1919 = vmatpush2.msra.mxu0 %v1046
    %1920 = vmatprep.subr.mxu0 %v1039
    %1921 = vmatpush2.msra.mxu0 %v1038
    %1922 = vmatprep.subr.mxu0 %v1031
    %1923 = vmatpush2.msra.mxu0 %v1030
    %1924 = vmatprep.subr.mxu0 %v1023
    %1925 = vmatpush2.msra.mxu0 %v1022
    %1926 = vmatprep.subr.mxu0 %v1015
    %1927 = vmatpush2.msra.mxu0 %v1014
    %1928 = vmatprep.subr.mxu0 %v1007
    %1929 = vmatpush2.msra.mxu0 %v1006
    %1930 = vmatprep.subr.mxu0 %v999
    %1931 = vmatpush2.msra.mxu0 %v998
    %1932 = vmatprep.subr.mxu0 %v991
    %1933 = vmatpush2.msra.mxu0 %v990
    %1934 = vmatprep.mubr.f32.mxu0 %v1794
    %1935 = vmatmul.mubr.f32.gmra.mxu0 %v1792
    %v1936 = vpop.f32.mrf.mxu0
    %v1937 = vadd.f32 0.0, %v1936
    %v1938 = vpop.f32.mrf.mxu0
    %v1939 = vadd.f32 0.0, %v1938
    %1940 = vdwg.mxu0
    %1941 = vmatprep.subr.mxu0 %v985
    %1942 = vmatpush1.msra.mxu0 %v984
    %1943 = vmatprep.subr.mxu0 %v977
    %1944 = vmatpush1.msra.mxu0 %v976
    %1945 = vmatprep.subr.mxu0 %v969
    %1946 = vmatpush1.msra.mxu0 %v968
    %1947 = vmatprep.subr.mxu0 %v961
    %1948 = vmatpush1.msra.mxu0 %v960
    %1949 = vmatprep.subr.mxu0 %v953
    %1950 = vmatpush1.msra.mxu0 %v952
    %1951 = vmatprep.subr.mxu0 %v945
    %1952 = vmatpush1.msra.mxu0 %v944
    %1953 = vmatprep.subr.mxu0 %v937
    %1954 = vmatpush1.msra.mxu0 %v936
    %1955 = vmatprep.subr.mxu0 %v929
    %1956 = vmatpush1.msra.mxu0 %v928
    %1957 = vmatprep.subr.mxu0 %v921
    %1958 = vmatpush1.msra.mxu0 %v920
    %1959 = vmatprep.subr.mxu0 %v913
    %1960 = vmatpush1.msra.mxu0 %v912
    %1961 = vmatprep.subr.mxu0 %v905
    %1962 = vmatpush1.msra.mxu0 %v904
    %1963 = vmatprep.subr.mxu0 %v897
    %1964 = vmatpush1.msra.mxu0 %v896
    %1965 = vmatprep.subr.mxu0 %v889
    %1966 = vmatpush1.msra.mxu0 %v888
    %1967 = vmatprep.subr.mxu0 %v881
    %1968 = vmatpush1.msra.mxu0 %v880
    %1969 = vmatprep.subr.mxu0 %v873
    %1970 = vmatpush1.msra.mxu0 %v872
    %1971 = vmatprep.subr.mxu0 %v865
    %1972 = vmatpush1.msra.mxu0 %v864
    %1973 = vmatprep.subr.mxu0 %v1113
    %1974 = vmatpush2.msra.mxu0 %v1112
    %1975 = vmatprep.subr.mxu0 %v1105
    %1976 = vmatpush2.msra.mxu0 %v1104
    %1977 = vmatprep.subr.mxu0 %v1097
    %1978 = vmatpush2.msra.mxu0 %v1096
    %1979 = vmatprep.subr.mxu0 %v1089
    %1980 = vmatpush2.msra.mxu0 %v1088
    %1981 = vmatprep.subr.mxu0 %v1081
    %1982 = vmatpush2.msra.mxu0 %v1080
    %1983 = vmatprep.subr.mxu0 %v1073
    %1984 = vmatpush2.msra.mxu0 %v1072
    %1985 = vmatprep.subr.mxu0 %v1065
    %1986 = vmatpush2.msra.mxu0 %v1064
    %1987 = vmatprep.subr.mxu0 %v1057
    %1988 = vmatpush2.msra.mxu0 %v1056
    %1989 = vmatprep.subr.mxu0 %v1049
    %1990 = vmatpush2.msra.mxu0 %v1048
    %1991 = vmatprep.subr.mxu0 %v1041
    %1992 = vmatpush2.msra.mxu0 %v1040
    %1993 = vmatprep.subr.mxu0 %v1033
    %1994 = vmatpush2.msra.mxu0 %v1032
    %1995 = vmatprep.subr.mxu0 %v1025
    %1996 = vmatpush2.msra.mxu0 %v1024
    %1997 = vmatprep.subr.mxu0 %v1017
    %1998 = vmatpush2.msra.mxu0 %v1016
    %1999 = vmatprep.subr.mxu0 %v1009
    %2000 = vmatpush2.msra.mxu0 %v1008
    %2001 = vmatprep.subr.mxu0 %v1001
    %2002 = vmatpush2.msra.mxu0 %v1000
    %2003 = vmatprep.subr.mxu0 %v993
    %2004 = vmatpush2.msra.mxu0 %v992
    %2005 = vmatprep.mubr.f32.mxu0 %v1794
    %2006 = vmatmul.mubr.f32.gmra.mxu0 %v1792
    %v2007 = vpop.f32.mrf.mxu0
    %v2008 = vadd.f32 0.0, %v2007
    %v2009 = vpop.f32.mrf.mxu0
    %v2010 = vadd.f32 0.0, %v2009
    %2011 = vdwg.mxu0
    %2012 = vmatprep.subr.mxu0 %v987
    %2013 = vmatpush1.msra.mxu0 %v986
    %2014 = vmatprep.subr.mxu0 %v979
    %2015 = vmatpush1.msra.mxu0 %v978
    %2016 = vmatprep.subr.mxu0 %v971
    %2017 = vmatpush1.msra.mxu0 %v970
    %2018 = vmatprep.subr.mxu0 %v963
    %2019 = vmatpush1.msra.mxu0 %v962
    %2020 = vmatprep.subr.mxu0 %v955
    %2021 = vmatpush1.msra.mxu0 %v954
    %2022 = vmatprep.subr.mxu0 %v947
    %2023 = vmatpush1.msra.mxu0 %v946
    %2024 = vmatprep.subr.mxu0 %v939
    %2025 = vmatpush1.msra.mxu0 %v938
    %2026 = vmatprep.subr.mxu0 %v931
    %2027 = vmatpush1.msra.mxu0 %v930
    %2028 = vmatprep.subr.mxu0 %v923
    %2029 = vmatpush1.msra.mxu0 %v922
    %2030 = vmatprep.subr.mxu0 %v915
    %2031 = vmatpush1.msra.mxu0 %v914
    %2032 = vmatprep.subr.mxu0 %v907
    %2033 = vmatpush1.msra.mxu0 %v906
    %2034 = vmatprep.subr.mxu0 %v899
    %2035 = vmatpush1.msra.mxu0 %v898
    %2036 = vmatprep.subr.mxu0 %v891
    %2037 = vmatpush1.msra.mxu0 %v890
    %2038 = vmatprep.subr.mxu0 %v883
    %2039 = vmatpush1.msra.mxu0 %v882
    %2040 = vmatprep.subr.mxu0 %v875
    %2041 = vmatpush1.msra.mxu0 %v874
    %2042 = vmatprep.subr.mxu0 %v867
    %2043 = vmatpush1.msra.mxu0 %v866
    %2044 = vmatprep.subr.mxu0 %v1115
    %2045 = vmatpush2.msra.mxu0 %v1114
    %2046 = vmatprep.subr.mxu0 %v1107
    %2047 = vmatpush2.msra.mxu0 %v1106
    %2048 = vmatprep.subr.mxu0 %v1099
    %2049 = vmatpush2.msra.mxu0 %v1098
    %2050 = vmatprep.subr.mxu0 %v1091
    %2051 = vmatpush2.msra.mxu0 %v1090
    %2052 = vmatprep.subr.mxu0 %v1083
    %2053 = vmatpush2.msra.mxu0 %v1082
    %2054 = vmatprep.subr.mxu0 %v1075
    %2055 = vmatpush2.msra.mxu0 %v1074
    %2056 = vmatprep.subr.mxu0 %v1067
    %2057 = vmatpush2.msra.mxu0 %v1066
    %2058 = vmatprep.subr.mxu0 %v1059
    %2059 = vmatpush2.msra.mxu0 %v1058
    %2060 = vmatprep.subr.mxu0 %v1051
    %2061 = vmatpush2.msra.mxu0 %v1050
    %2062 = vmatprep.subr.mxu0 %v1043
    %2063 = vmatpush2.msra.mxu0 %v1042
    %2064 = vmatprep.subr.mxu0 %v1035
    %2065 = vmatpush2.msra.mxu0 %v1034
    %2066 = vmatprep.subr.mxu0 %v1027
    %2067 = vmatpush2.msra.mxu0 %v1026
    %2068 = vmatprep.subr.mxu0 %v1019
    %2069 = vmatpush2.msra.mxu0 %v1018
    %2070 = vmatprep.subr.mxu0 %v1011
    %2071 = vmatpush2.msra.mxu0 %v1010
    %2072 = vmatprep.subr.mxu0 %v1003
    %2073 = vmatpush2.msra.mxu0 %v1002
    %2074 = vmatprep.subr.mxu0 %v995
    %2075 = vmatpush2.msra.mxu0 %v994
    %2076 = vmatprep.mubr.f32.mxu0 %v1794
    %2077 = vmatmul.mubr.f32.gmra.mxu0 %v1792
    %v2078 = vpop.f32.mrf.mxu0
    %v2079 = vadd.f32 0.0, %v2078
    %v2080 = vpop.f32.mrf.mxu0
    %v2081 = vadd.f32 0.0, %v2080
    %2082 = vdwg.mxu0
    %s2083 = smul.u32 2, 4
    %s2084 = smul.addr %s2083, 8
    %s2085 = scalar_lea.vmem [#allocation2], %s2084
    %v2086 = vld [vmem:[%s2085] sm:$0xff]
    %v2087 = vld [vmem:[%s2085 + $0x8] sm:$0xff]
    %v2088 = vld [vmem:[%s2085 + $0x10] sm:$0xff]
    %v2089 = vld [vmem:[%s2085 + $0x18] sm:$0xff]
    %v2090 = vadd.f32 %v1866, %v2086
    %v2091 = vadd.f32 %v1868, %v2087
    %v2092 = vadd.f32 %v1937, %v2088
    %v2093 = vadd.f32 %v1939, %v2089
    %s2094 = smul.u32 5, 4
    %s2095 = smul.addr %s2094, 8
    %s2096 = scalar_lea.vmem [#allocation3], %s2095
    %v2097 = vld [vmem:[%s2096] sm:$0xff]
    %v2098 = vld [vmem:[%s2096 + $0x8] sm:$0xff]
    %v2099 = vld [vmem:[%s2096 + $0x10] sm:$0xff]
    %v2100 = vld [vmem:[%s2096 + $0x18] sm:$0xff]
    %v2101 = vadd.f32 %v2008, %v2097
    %v2102 = vadd.f32 %v2010, %v2098
    %v2103 = vadd.f32 %v2079, %v2099
    %v2104 = vadd.f32 %v2081, %v2100
    %v2105 = vtanh.pop %v2090
    %v2106 = vtanh.pop %v2091
    %v2107 = vtanh.pop %v2092
    %v2108 = vtanh.pop %v2093
    %v2109 = vtanh.pop %v2101
    %v2110 = vtanh.pop %v2102
    %v2111 = vtanh.pop %v2103
    %v2112 = vtanh.pop %v2104
    %v2113 = vmul.f32 %v2105, 0.5
    %v2114 = vadd.f32 %v2113, 0.5
    %v2115 = vmul.f32 %v2106, 0.5
    %v2116 = vadd.f32 %v2115, 0.5
    %v2117 = vmul.f32 %v2108, 0.5
    %v2118 = vadd.f32 %v2117, 0.5
    %v2119 = vmul.f32 %v2109, 0.5
    %v2120 = vadd.f32 %v2119, 0.5
    %v2121 = vmul.f32 %v2110, 0.5
    %v2122 = vadd.f32 %v2121, 0.5
    %v2123 = vmul.f32 %v2112, 0.5
    %v2124 = vadd.f32 %v2123, 0.5
    %v2125 = vmul.f32 %v2116, %v1787
    %v2126 = vmul.f32 %v2114, %v2107
    %v2127 = vadd.f32 %v2125, %v2126
    %v2128 = vmul.f32 %v2122, %v1790
    %v2129 = vmul.f32 %v2120, %v2111
    %v2130 = vadd.f32 %v2128, %v2129
    %v2131 = vtanh.pop %v2127
    %v2132 = vmul.f32 %v2118, %v2131
    %v2133 = vtanh.pop %v2130
    %v2134 = vmul.f32 %v2124, %v2133
    %s2135 = scalar_lea.vmem [#allocation18], 16
    %2136 = vst [vmem:[%s2135] sm:$0xff] %v2132
    %s2137 = scalar_lea.vmem [#allocation19], 40
    %2138 = vst [vmem:[%s2137] sm:$0xff] %v2134
    %2139 = vmatprep.subr.mxu0 %v981
    %2140 = vmatpush1.msra.mxu0 %v980
    %2141 = vmatprep.subr.mxu0 %v973
    %2142 = vmatpush1.msra.mxu0 %v972
    %2143 = vmatprep.subr.mxu0 %v965
    %2144 = vmatpush1.msra.mxu0 %v964
    %2145 = vmatprep.subr.mxu0 %v957
    %2146 = vmatpush1.msra.mxu0 %v956
    %2147 = vmatprep.subr.mxu0 %v949
    %2148 = vmatpush1.msra.mxu0 %v948
    %2149 = vmatprep.subr.mxu0 %v941
    %2150 = vmatpush1.msra.mxu0 %v940
    %2151 = vmatprep.subr.mxu0 %v933
    %2152 = vmatpush1.msra.mxu0 %v932
    %2153 = vmatprep.subr.mxu0 %v925
    %2154 = vmatpush1.msra.mxu0 %v924
    %2155 = vmatprep.subr.mxu0 %v917
    %2156 = vmatpush1.msra.mxu0 %v916
    %2157 = vmatprep.subr.mxu0 %v909
    %2158 = vmatpush1.msra.mxu0 %v908
    %2159 = vmatprep.subr.mxu0 %v901
    %2160 = vmatpush1.msra.mxu0 %v900
    %2161 = vmatprep.subr.mxu0 %v893
    %2162 = vmatpush1.msra.mxu0 %v892
    %2163 = vmatprep.subr.mxu0 %v885
    %2164 = vmatpush1.msra.mxu0 %v884
    %2165 = vmatprep.subr.mxu0 %v877
    %2166 = vmatpush1.msra.mxu0 %v876
    %2167 = vmatprep.subr.mxu0 %v869
    %2168 = vmatpush1.msra.mxu0 %v868
    %2169 = vmatprep.subr.mxu0 %v861
    %2170 = vmatpush1.msra.mxu0 %v860
    %2171 = vmatprep.subr.mxu0 %v1109
    %2172 = vmatpush2.msra.mxu0 %v1108
    %2173 = vmatprep.subr.mxu0 %v1101
    %2174 = vmatpush2.msra.mxu0 %v1100
    %2175 = vmatprep.subr.mxu0 %v1093
    %2176 = vmatpush2.msra.mxu0 %v1092
    %2177 = vmatprep.subr.mxu0 %v1085
    %2178 = vmatpush2.msra.mxu0 %v1084
    %2179 = vmatprep.subr.mxu0 %v1077
    %2180 = vmatpush2.msra.mxu0 %v1076
    %2181 = vmatprep.subr.mxu0 %v1069
    %2182 = vmatpush2.msra.mxu0 %v1068
    %2183 = vmatprep.subr.mxu0 %v1061
    %2184 = vmatpush2.msra.mxu0 %v1060
    %2185 = vmatprep.subr.mxu0 %v1053
    %2186 = vmatpush2.msra.mxu0 %v1052
    %2187 = vmatprep.subr.mxu0 %v1045
    %2188 = vmatpush2.msra.mxu0 %v1044
    %2189 = vmatprep.subr.mxu0 %v1037
    %2190 = vmatpush2.msra.mxu0 %v1036
    %2191 = vmatprep.subr.mxu0 %v1029
    %2192 = vmatpush2.msra.mxu0 %v1028
    %2193 = vmatprep.subr.mxu0 %v1021
    %2194 = vmatpush2.msra.mxu0 %v1020
    %2195 = vmatprep.subr.mxu0 %v1013
    %2196 = vmatpush2.msra.mxu0 %v1012
    %2197 = vmatprep.subr.mxu0 %v1005
    %2198 = vmatpush2.msra.mxu0 %v1004
    %2199 = vmatprep.subr.mxu0 %v997
    %2200 = vmatpush2.msra.mxu0 %v996
    %2201 = vmatprep.subr.mxu0 %v989
    %2202 = vmatpush2.msra.mxu0 %v988
    %2203 = vmatprep.mubr.f32.mxu0 %v2134
    %2204 = vmatmul.mubr.f32.gmra.mxu0 %v2132
    %v2205 = vpop.f32.mrf.mxu0
    %v2206 = vadd.f32 0.0, %v2205
    %v2207 = vpop.f32.mrf.mxu0
    %v2208 = vadd.f32 0.0, %v2207
    %2209 = vdwg.mxu0
    %2210 = vmatprep.subr.mxu0 %v983
    %2211 = vmatpush1.msra.mxu0 %v982
    %2212 = vmatprep.subr.mxu0 %v975
    %2213 = vmatpush1.msra.mxu0 %v974
    %2214 = vmatprep.subr.mxu0 %v967
    %2215 = vmatpush1.msra.mxu0 %v966
    %2216 = vmatprep.subr.mxu0 %v959
    %2217 = vmatpush1.msra.mxu0 %v958
    %2218 = vmatprep.subr.mxu0 %v951
    %2219 = vmatpush1.msra.mxu0 %v950
    %2220 = vmatprep.subr.mxu0 %v943
    %2221 = vmatpush1.msra.mxu0 %v942
    %2222 = vmatprep.subr.mxu0 %v935
    %2223 = vmatpush1.msra.mxu0 %v934
    %2224 = vmatprep.subr.mxu0 %v927
    %2225 = vmatpush1.msra.mxu0 %v926
    %2226 = vmatprep.subr.mxu0 %v919
    %2227 = vmatpush1.msra.mxu0 %v918
    %2228 = vmatprep.subr.mxu0 %v911
    %2229 = vmatpush1.msra.mxu0 %v910
    %2230 = vmatprep.subr.mxu0 %v903
    %2231 = vmatpush1.msra.mxu0 %v902
    %2232 = vmatprep.subr.mxu0 %v895
    %2233 = vmatpush1.msra.mxu0 %v894
    %2234 = vmatprep.subr.mxu0 %v887
    %2235 = vmatpush1.msra.mxu0 %v886
    %2236 = vmatprep.subr.mxu0 %v879
    %2237 = vmatpush1.msra.mxu0 %v878
    %2238 = vmatprep.subr.mxu0 %v871
    %2239 = vmatpush1.msra.mxu0 %v870
    %2240 = vmatprep.subr.mxu0 %v863
    %2241 = vmatpush1.msra.mxu0 %v862
    %2242 = vmatprep.subr.mxu0 %v1111
    %2243 = vmatpush2.msra.mxu0 %v1110
    %2244 = vmatprep.subr.mxu0 %v1103
    %2245 = vmatpush2.msra.mxu0 %v1102
    %2246 = vmatprep.subr.mxu0 %v1095
    %2247 = vmatpush2.msra.mxu0 %v1094
    %2248 = vmatprep.subr.mxu0 %v1087
    %2249 = vmatpush2.msra.mxu0 %v1086
    %2250 = vmatprep.subr.mxu0 %v1079
    %2251 = vmatpush2.msra.mxu0 %v1078
    %2252 = vmatprep.subr.mxu0 %v1071
    %2253 = vmatpush2.msra.mxu0 %v1070
    %2254 = vmatprep.subr.mxu0 %v1063
    %2255 = vmatpush2.msra.mxu0 %v1062
    %2256 = vmatprep.subr.mxu0 %v1055
    %2257 = vmatpush2.msra.mxu0 %v1054
    %2258 = vmatprep.subr.mxu0 %v1047
    %2259 = vmatpush2.msra.mxu0 %v1046
    %2260 = vmatprep.subr.mxu0 %v1039
    %2261 = vmatpush2.msra.mxu0 %v1038
    %2262 = vmatprep.subr.mxu0 %v1031
    %2263 = vmatpush2.msra.mxu0 %v1030
    %2264 = vmatprep.subr.mxu0 %v1023
    %2265 = vmatpush2.msra.mxu0 %v1022
    %2266 = vmatprep.subr.mxu0 %v1015
    %2267 = vmatpush2.msra.mxu0 %v1014
    %2268 = vmatprep.subr.mxu0 %v1007
    %2269 = vmatpush2.msra.mxu0 %v1006
    %2270 = vmatprep.subr.mxu0 %v999
    %2271 = vmatpush2.msra.mxu0 %v998
    %2272 = vmatprep.subr.mxu0 %v991
    %2273 = vmatpush2.msra.mxu0 %v990
    %2274 = vmatprep.mubr.f32.mxu0 %v2134
    %2275 = vmatmul.mubr.f32.gmra.mxu0 %v2132
    %v2276 = vpop.f32.mrf.mxu0
    %v2277 = vadd.f32 0.0, %v2276
    %v2278 = vpop.f32.mrf.mxu0
    %v2279 = vadd.f32 0.0, %v2278
    %2280 = vdwg.mxu0
    %2281 = vmatprep.subr.mxu0 %v985
    %2282 = vmatpush1.msra.mxu0 %v984
    %2283 = vmatprep.subr.mxu0 %v977
    %2284 = vmatpush1.msra.mxu0 %v976
    %2285 = vmatprep.subr.mxu0 %v969
    %2286 = vmatpush1.msra.mxu0 %v968
    %2287 = vmatprep.subr.mxu0 %v961
    %2288 = vmatpush1.msra.mxu0 %v960
    %2289 = vmatprep.subr.mxu0 %v953
    %2290 = vmatpush1.msra.mxu0 %v952
    %2291 = vmatprep.subr.mxu0 %v945
    %2292 = vmatpush1.msra.mxu0 %v944
    %2293 = vmatprep.subr.mxu0 %v937
    %2294 = vmatpush1.msra.mxu0 %v936
    %2295 = vmatprep.subr.mxu0 %v929
    %2296 = vmatpush1.msra.mxu0 %v928
    %2297 = vmatprep.subr.mxu0 %v921
    %2298 = vmatpush1.msra.mxu0 %v920
    %2299 = vmatprep.subr.mxu0 %v913
    %2300 = vmatpush1.msra.mxu0 %v912
    %2301 = vmatprep.subr.mxu0 %v905
    %2302 = vmatpush1.msra.mxu0 %v904
    %2303 = vmatprep.subr.mxu0 %v897
    %2304 = vmatpush1.msra.mxu0 %v896
    %2305 = vmatprep.subr.mxu0 %v889
    %2306 = vmatpush1.msra.mxu0 %v888
    %2307 = vmatprep.subr.mxu0 %v881
    %2308 = vmatpush1.msra.mxu0 %v880
    %2309 = vmatprep.subr.mxu0 %v873
    %2310 = vmatpush1.msra.mxu0 %v872
    %2311 = vmatprep.subr.mxu0 %v865
    %2312 = vmatpush1.msra.mxu0 %v864
    %2313 = vmatprep.subr.mxu0 %v1113
    %2314 = vmatpush2.msra.mxu0 %v1112
    %2315 = vmatprep.subr.mxu0 %v1105
    %2316 = vmatpush2.msra.mxu0 %v1104
    %2317 = vmatprep.subr.mxu0 %v1097
    %2318 = vmatpush2.msra.mxu0 %v1096
    %2319 = vmatprep.subr.mxu0 %v1089
    %2320 = vmatpush2.msra.mxu0 %v1088
    %2321 = vmatprep.subr.mxu0 %v1081
    %2322 = vmatpush2.msra.mxu0 %v1080
    %2323 = vmatprep.subr.mxu0 %v1073
    %2324 = vmatpush2.msra.mxu0 %v1072
    %2325 = vmatprep.subr.mxu0 %v1065
    %2326 = vmatpush2.msra.mxu0 %v1064
    %2327 = vmatprep.subr.mxu0 %v1057
    %2328 = vmatpush2.msra.mxu0 %v1056
    %2329 = vmatprep.subr.mxu0 %v1049
    %2330 = vmatpush2.msra.mxu0 %v1048
    %2331 = vmatprep.subr.mxu0 %v1041
    %2332 = vmatpush2.msra.mxu0 %v1040
    %2333 = vmatprep.subr.mxu0 %v1033
    %2334 = vmatpush2.msra.mxu0 %v1032
    %2335 = vmatprep.subr.mxu0 %v1025
    %2336 = vmatpush2.msra.mxu0 %v1024
    %2337 = vmatprep.subr.mxu0 %v1017
    %2338 = vmatpush2.msra.mxu0 %v1016
    %2339 = vmatprep.subr.mxu0 %v1009
    %2340 = vmatpush2.msra.mxu0 %v1008
    %2341 = vmatprep.subr.mxu0 %v1001
    %2342 = vmatpush2.msra.mxu0 %v1000
    %2343 = vmatprep.subr.mxu0 %v993
    %2344 = vmatpush2.msra.mxu0 %v992
    %2345 = vmatprep.mubr.f32.mxu0 %v2134
    %2346 = vmatmul.mubr.f32.gmra.mxu0 %v2132
    %v2347 = vpop.f32.mrf.mxu0
    %v2348 = vadd.f32 0.0, %v2347
    %v2349 = vpop.f32.mrf.mxu0
    %v2350 = vadd.f32 0.0, %v2349
    %2351 = vdwg.mxu0
    %2352 = vmatprep.subr.mxu0 %v987
    %2353 = vmatpush1.msra.mxu0 %v986
    %2354 = vmatprep.subr.mxu0 %v979
    %2355 = vmatpush1.msra.mxu0 %v978
    %2356 = vmatprep.subr.mxu0 %v971
    %2357 = vmatpush1.msra.mxu0 %v970
    %2358 = vmatprep.subr.mxu0 %v963
    %2359 = vmatpush1.msra.mxu0 %v962
    %2360 = vmatprep.subr.mxu0 %v955
    %2361 = vmatpush1.msra.mxu0 %v954
    %2362 = vmatprep.subr.mxu0 %v947
    %2363 = vmatpush1.msra.mxu0 %v946
    %2364 = vmatprep.subr.mxu0 %v939
    %2365 = vmatpush1.msra.mxu0 %v938
    %2366 = vmatprep.subr.mxu0 %v931
    %2367 = vmatpush1.msra.mxu0 %v930
    %2368 = vmatprep.subr.mxu0 %v923
    %2369 = vmatpush1.msra.mxu0 %v922
    %2370 = vmatprep.subr.mxu0 %v915
    %2371 = vmatpush1.msra.mxu0 %v914
    %2372 = vmatprep.subr.mxu0 %v907
    %2373 = vmatpush1.msra.mxu0 %v906
    %2374 = vmatprep.subr.mxu0 %v899
    %2375 = vmatpush1.msra.mxu0 %v898
    %2376 = vmatprep.subr.mxu0 %v891
    %2377 = vmatpush1.msra.mxu0 %v890
    %2378 = vmatprep.subr.mxu0 %v883
    %2379 = vmatpush1.msra.mxu0 %v882
    %2380 = vmatprep.subr.mxu0 %v875
    %2381 = vmatpush1.msra.mxu0 %v874
    %2382 = vmatprep.subr.mxu0 %v867
    %2383 = vmatpush1.msra.mxu0 %v866
    %2384 = vmatprep.subr.mxu0 %v1115
    %2385 = vmatpush2.msra.mxu0 %v1114
    %2386 = vmatprep.subr.mxu0 %v1107
    %2387 = vmatpush2.msra.mxu0 %v1106
    %2388 = vmatprep.subr.mxu0 %v1099
    %2389 = vmatpush2.msra.mxu0 %v1098
    %2390 = vmatprep.subr.mxu0 %v1091
    %2391 = vmatpush2.msra.mxu0 %v1090
    %2392 = vmatprep.subr.mxu0 %v1083
    %2393 = vmatpush2.msra.mxu0 %v1082
    %2394 = vmatprep.subr.mxu0 %v1075
    %2395 = vmatpush2.msra.mxu0 %v1074
    %2396 = vmatprep.subr.mxu0 %v1067
    %2397 = vmatpush2.msra.mxu0 %v1066
    %2398 = vmatprep.subr.mxu0 %v1059
    %2399 = vmatpush2.msra.mxu0 %v1058
    %2400 = vmatprep.subr.mxu0 %v1051
    %2401 = vmatpush2.msra.mxu0 %v1050
    %2402 = vmatprep.subr.mxu0 %v1043
    %2403 = vmatpush2.msra.mxu0 %v1042
    %2404 = vmatprep.subr.mxu0 %v1035
    %2405 = vmatpush2.msra.mxu0 %v1034
    %2406 = vmatprep.subr.mxu0 %v1027
    %2407 = vmatpush2.msra.mxu0 %v1026
    %2408 = vmatprep.subr.mxu0 %v1019
    %2409 = vmatpush2.msra.mxu0 %v1018
    %2410 = vmatprep.subr.mxu0 %v1011
    %2411 = vmatpush2.msra.mxu0 %v1010
    %2412 = vmatprep.subr.mxu0 %v1003
    %2413 = vmatpush2.msra.mxu0 %v1002
    %2414 = vmatprep.subr.mxu0 %v995
    %2415 = vmatpush2.msra.mxu0 %v994
    %2416 = vmatprep.mubr.f32.mxu0 %v2134
    %2417 = vmatmul.mubr.f32.gmra.mxu0 %v2132
    %v2418 = vpop.f32.mrf.mxu0
    %v2419 = vadd.f32 0.0, %v2418
    %v2420 = vpop.f32.mrf.mxu0
    %v2421 = vadd.f32 0.0, %v2420
    %2422 = vdwg.mxu0
    %s2423 = smul.u32 3, 4
    %s2424 = smul.addr %s2423, 8
    %s2425 = scalar_lea.vmem [#allocation2], %s2424
    %v2426 = vld [vmem:[%s2425] sm:$0xff]
    %v2427 = vld [vmem:[%s2425 + $0x8] sm:$0xff]
    %v2428 = vld [vmem:[%s2425 + $0x10] sm:$0xff]
    %v2429 = vld [vmem:[%s2425 + $0x18] sm:$0xff]
    %v2430 = vadd.f32 %v2206, %v2426
    %v2431 = vadd.f32 %v2208, %v2427
    %v2432 = vadd.f32 %v2277, %v2428
    %v2433 = vadd.f32 %v2279, %v2429
    %s2434 = smul.u32 4, 4
    %s2435 = smul.addr %s2434, 8
    %s2436 = scalar_lea.vmem [#allocation3], %s2435
    %v2437 = vld [vmem:[%s2436] sm:$0xff]
    %v2438 = vld [vmem:[%s2436 + $0x8] sm:$0xff]
    %v2439 = vld [vmem:[%s2436 + $0x10] sm:$0xff]
    %v2440 = vld [vmem:[%s2436 + $0x18] sm:$0xff]
    %v2441 = vadd.f32 %v2348, %v2437
    %v2442 = vadd.f32 %v2350, %v2438
    %v2443 = vadd.f32 %v2419, %v2439
    %v2444 = vadd.f32 %v2421, %v2440
    %v2445 = vtanh.pop %v2430
    %v2446 = vtanh.pop %v2431
    %v2447 = vtanh.pop %v2432
    %v2448 = vtanh.pop %v2433
    %v2449 = vtanh.pop %v2441
    %v2450 = vtanh.pop %v2442
    %v2451 = vtanh.pop %v2443
    %v2452 = vtanh.pop %v2444
    %v2453 = vmul.f32 %v2445, 0.5
    %v2454 = vadd.f32 %v2453, 0.5
    %v2455 = vmul.f32 %v2446, 0.5
    %v2456 = vadd.f32 %v2455, 0.5
    %v2457 = vmul.f32 %v2448, 0.5
    %v2458 = vadd.f32 %v2457, 0.5
    %v2459 = vmul.f32 %v2449, 0.5
    %v2460 = vadd.f32 %v2459, 0.5
    %v2461 = vmul.f32 %v2450, 0.5
    %v2462 = vadd.f32 %v2461, 0.5
    %v2463 = vmul.f32 %v2452, 0.5
    %v2464 = vadd.f32 %v2463, 0.5
    %v2465 = vmul.f32 %v2456, %v2127
    %v2466 = vmul.f32 %v2454, %v2447
    %v2467 = vadd.f32 %v2465, %v2466
    %v2468 = vmul.f32 %v2462, %v2130
    %v2469 = vmul.f32 %v2460, %v2451
    %v2470 = vadd.f32 %v2468, %v2469
    %v2471 = vtanh.pop %v2467
    %v2472 = vmul.f32 %v2458, %v2471
    %v2473 = vtanh.pop %v2470
    %v2474 = vmul.f32 %v2464, %v2473
    %s2475 = scalar_lea.vmem [#allocation18], 24
    %2476 = vst [vmem:[%s2475] sm:$0xff] %v2472
    %s2477 = scalar_lea.vmem [#allocation19], 32
    %2478 = vst [vmem:[%s2477] sm:$0xff] %v2474
    %2479 = vmatprep.subr.mxu0 %v981
    %2480 = vmatpush1.msra.mxu0 %v980
    %2481 = vmatprep.subr.mxu0 %v973
    %2482 = vmatpush1.msra.mxu0 %v972
    %2483 = vmatprep.subr.mxu0 %v965
    %2484 = vmatpush1.msra.mxu0 %v964
    %2485 = vmatprep.subr.mxu0 %v957
    %2486 = vmatpush1.msra.mxu0 %v956
    %2487 = vmatprep.subr.mxu0 %v949
    %2488 = vmatpush1.msra.mxu0 %v948
    %2489 = vmatprep.subr.mxu0 %v941
    %2490 = vmatpush1.msra.mxu0 %v940
    %2491 = vmatprep.subr.mxu0 %v933
    %2492 = vmatpush1.msra.mxu0 %v932
    %2493 = vmatprep.subr.mxu0 %v925
    %2494 = vmatpush1.msra.mxu0 %v924
    %2495 = vmatprep.subr.mxu0 %v917
    %2496 = vmatpush1.msra.mxu0 %v916
    %2497 = vmatprep.subr.mxu0 %v909
    %2498 = vmatpush1.msra.mxu0 %v908
    %2499 = vmatprep.subr.mxu0 %v901
    %2500 = vmatpush1.msra.mxu0 %v900
    %2501 = vmatprep.subr.mxu0 %v893
    %2502 = vmatpush1.msra.mxu0 %v892
    %2503 = vmatprep.subr.mxu0 %v885
    %2504 = vmatpush1.msra.mxu0 %v884
    %2505 = vmatprep.subr.mxu0 %v877
    %2506 = vmatpush1.msra.mxu0 %v876
    %2507 = vmatprep.subr.mxu0 %v869
    %2508 = vmatpush1.msra.mxu0 %v868
    %2509 = vmatprep.subr.mxu0 %v861
    %2510 = vmatpush1.msra.mxu0 %v860
    %2511 = vmatprep.subr.mxu0 %v1109
    %2512 = vmatpush2.msra.mxu0 %v1108
    %2513 = vmatprep.subr.mxu0 %v1101
    %2514 = vmatpush2.msra.mxu0 %v1100
    %2515 = vmatprep.subr.mxu0 %v1093
    %2516 = vmatpush2.msra.mxu0 %v1092
    %2517 = vmatprep.subr.mxu0 %v1085
    %2518 = vmatpush2.msra.mxu0 %v1084
    %2519 = vmatprep.subr.mxu0 %v1077
    %2520 = vmatpush2.msra.mxu0 %v1076
    %2521 = vmatprep.subr.mxu0 %v1069
    %2522 = vmatpush2.msra.mxu0 %v1068
    %2523 = vmatprep.subr.mxu0 %v1061
    %2524 = vmatpush2.msra.mxu0 %v1060
    %2525 = vmatprep.subr.mxu0 %v1053
    %2526 = vmatpush2.msra.mxu0 %v1052
    %2527 = vmatprep.subr.mxu0 %v1045
    %2528 = vmatpush2.msra.mxu0 %v1044
    %2529 = vmatprep.subr.mxu0 %v1037
    %2530 = vmatpush2.msra.mxu0 %v1036
    %2531 = vmatprep.subr.mxu0 %v1029
    %2532 = vmatpush2.msra.mxu0 %v1028
    %2533 = vmatprep.subr.mxu0 %v1021
    %2534 = vmatpush2.msra.mxu0 %v1020
    %2535 = vmatprep.subr.mxu0 %v1013
    %2536 = vmatpush2.msra.mxu0 %v1012
    %2537 = vmatprep.subr.mxu0 %v1005
    %2538 = vmatpush2.msra.mxu0 %v1004
    %2539 = vmatprep.subr.mxu0 %v997
    %2540 = vmatpush2.msra.mxu0 %v996
    %2541 = vmatprep.subr.mxu0 %v989
    %2542 = vmatpush2.msra.mxu0 %v988
    %2543 = vmatprep.mubr.f32.mxu0 %v2474
    %2544 = vmatmul.mubr.f32.gmra.mxu0 %v2472
    %v2545 = vpop.f32.mrf.mxu0
    %v2546 = vadd.f32 0.0, %v2545
    %v2547 = vpop.f32.mrf.mxu0
    %v2548 = vadd.f32 0.0, %v2547
    %2549 = vdwg.mxu0
    %2550 = vmatprep.subr.mxu0 %v983
    %2551 = vmatpush1.msra.mxu0 %v982
    %2552 = vmatprep.subr.mxu0 %v975
    %2553 = vmatpush1.msra.mxu0 %v974
    %2554 = vmatprep.subr.mxu0 %v967
    %2555 = vmatpush1.msra.mxu0 %v966
    %2556 = vmatprep.subr.mxu0 %v959
    %2557 = vmatpush1.msra.mxu0 %v958
    %2558 = vmatprep.subr.mxu0 %v951
    %2559 = vmatpush1.msra.mxu0 %v950
    %2560 = vmatprep.subr.mxu0 %v943
    %2561 = vmatpush1.msra.mxu0 %v942
    %2562 = vmatprep.subr.mxu0 %v935
    %2563 = vmatpush1.msra.mxu0 %v934
    %2564 = vmatprep.subr.mxu0 %v927
    %2565 = vmatpush1.msra.mxu0 %v926
    %2566 = vmatprep.subr.mxu0 %v919
    %2567 = vmatpush1.msra.mxu0 %v918
    %2568 = vmatprep.subr.mxu0 %v911
    %2569 = vmatpush1.msra.mxu0 %v910
    %2570 = vmatprep.subr.mxu0 %v903
    %2571 = vmatpush1.msra.mxu0 %v902
    %2572 = vmatprep.subr.mxu0 %v895
    %2573 = vmatpush1.msra.mxu0 %v894
    %2574 = vmatprep.subr.mxu0 %v887
    %2575 = vmatpush1.msra.mxu0 %v886
    %2576 = vmatprep.subr.mxu0 %v879
    %2577 = vmatpush1.msra.mxu0 %v878
    %2578 = vmatprep.subr.mxu0 %v871
    %2579 = vmatpush1.msra.mxu0 %v870
    %2580 = vmatprep.subr.mxu0 %v863
    %2581 = vmatpush1.msra.mxu0 %v862
    %2582 = vmatprep.subr.mxu0 %v1111
    %2583 = vmatpush2.msra.mxu0 %v1110
    %2584 = vmatprep.subr.mxu0 %v1103
    %2585 = vmatpush2.msra.mxu0 %v1102
    %2586 = vmatprep.subr.mxu0 %v1095
    %2587 = vmatpush2.msra.mxu0 %v1094
    %2588 = vmatprep.subr.mxu0 %v1087
    %2589 = vmatpush2.msra.mxu0 %v1086
    %2590 = vmatprep.subr.mxu0 %v1079
    %2591 = vmatpush2.msra.mxu0 %v1078
    %2592 = vmatprep.subr.mxu0 %v1071
    %2593 = vmatpush2.msra.mxu0 %v1070
    %2594 = vmatprep.subr.mxu0 %v1063
    %2595 = vmatpush2.msra.mxu0 %v1062
    %2596 = vmatprep.subr.mxu0 %v1055
    %2597 = vmatpush2.msra.mxu0 %v1054
    %2598 = vmatprep.subr.mxu0 %v1047
    %2599 = vmatpush2.msra.mxu0 %v1046
    %2600 = vmatprep.subr.mxu0 %v1039
    %2601 = vmatpush2.msra.mxu0 %v1038
    %2602 = vmatprep.subr.mxu0 %v1031
    %2603 = vmatpush2.msra.mxu0 %v1030
    %2604 = vmatprep.subr.mxu0 %v1023
    %2605 = vmatpush2.msra.mxu0 %v1022
    %2606 = vmatprep.subr.mxu0 %v1015
    %2607 = vmatpush2.msra.mxu0 %v1014
    %2608 = vmatprep.subr.mxu0 %v1007
    %2609 = vmatpush2.msra.mxu0 %v1006
    %2610 = vmatprep.subr.mxu0 %v999
    %2611 = vmatpush2.msra.mxu0 %v998
    %2612 = vmatprep.subr.mxu0 %v991
    %2613 = vmatpush2.msra.mxu0 %v990
    %2614 = vmatprep.mubr.f32.mxu0 %v2474
    %2615 = vmatmul.mubr.f32.gmra.mxu0 %v2472
    %v2616 = vpop.f32.mrf.mxu0
    %v2617 = vadd.f32 0.0, %v2616
    %v2618 = vpop.f32.mrf.mxu0
    %v2619 = vadd.f32 0.0, %v2618
    %2620 = vdwg.mxu0
    %2621 = vmatprep.subr.mxu0 %v985
    %2622 = vmatpush1.msra.mxu0 %v984
    %2623 = vmatprep.subr.mxu0 %v977
    %2624 = vmatpush1.msra.mxu0 %v976
    %2625 = vmatprep.subr.mxu0 %v969
    %2626 = vmatpush1.msra.mxu0 %v968
    %2627 = vmatprep.subr.mxu0 %v961
    %2628 = vmatpush1.msra.mxu0 %v960
    %2629 = vmatprep.subr.mxu0 %v953
    %2630 = vmatpush1.msra.mxu0 %v952
    %2631 = vmatprep.subr.mxu0 %v945
    %2632 = vmatpush1.msra.mxu0 %v944
    %2633 = vmatprep.subr.mxu0 %v937
    %2634 = vmatpush1.msra.mxu0 %v936
    %2635 = vmatprep.subr.mxu0 %v929
    %2636 = vmatpush1.msra.mxu0 %v928
    %2637 = vmatprep.subr.mxu0 %v921
    %2638 = vmatpush1.msra.mxu0 %v920
    %2639 = vmatprep.subr.mxu0 %v913
    %2640 = vmatpush1.msra.mxu0 %v912
    %2641 = vmatprep.subr.mxu0 %v905
    %2642 = vmatpush1.msra.mxu0 %v904
    %2643 = vmatprep.subr.mxu0 %v897
    %2644 = vmatpush1.msra.mxu0 %v896
    %2645 = vmatprep.subr.mxu0 %v889
    %2646 = vmatpush1.msra.mxu0 %v888
    %2647 = vmatprep.subr.mxu0 %v881
    %2648 = vmatpush1.msra.mxu0 %v880
    %2649 = vmatprep.subr.mxu0 %v873
    %2650 = vmatpush1.msra.mxu0 %v872
    %2651 = vmatprep.subr.mxu0 %v865
    %2652 = vmatpush1.msra.mxu0 %v864
    %2653 = vmatprep.subr.mxu0 %v1113
    %2654 = vmatpush2.msra.mxu0 %v1112
    %2655 = vmatprep.subr.mxu0 %v1105
    %2656 = vmatpush2.msra.mxu0 %v1104
    %2657 = vmatprep.subr.mxu0 %v1097
    %2658 = vmatpush2.msra.mxu0 %v1096
    %2659 = vmatprep.subr.mxu0 %v1089
    %2660 = vmatpush2.msra.mxu0 %v1088
    %2661 = vmatprep.subr.mxu0 %v1081
    %2662 = vmatpush2.msra.mxu0 %v1080
    %2663 = vmatprep.subr.mxu0 %v1073
    %2664 = vmatpush2.msra.mxu0 %v1072
    %2665 = vmatprep.subr.mxu0 %v1065
    %2666 = vmatpush2.msra.mxu0 %v1064
    %2667 = vmatprep.subr.mxu0 %v1057
    %2668 = vmatpush2.msra.mxu0 %v1056
    %2669 = vmatprep.subr.mxu0 %v1049
    %2670 = vmatpush2.msra.mxu0 %v1048
    %2671 = vmatprep.subr.mxu0 %v1041
    %2672 = vmatpush2.msra.mxu0 %v1040
    %2673 = vmatprep.subr.mxu0 %v1033
    %2674 = vmatpush2.msra.mxu0 %v1032
    %2675 = vmatprep.subr.mxu0 %v1025
    %2676 = vmatpush2.msra.mxu0 %v1024
    %2677 = vmatprep.subr.mxu0 %v1017
    %2678 = vmatpush2.msra.mxu0 %v1016
    %2679 = vmatprep.subr.mxu0 %v1009
    %2680 = vmatpush2.msra.mxu0 %v1008
    %2681 = vmatprep.subr.mxu0 %v1001
    %2682 = vmatpush2.msra.mxu0 %v1000
    %2683 = vmatprep.subr.mxu0 %v993
    %2684 = vmatpush2.msra.mxu0 %v992
    %2685 = vmatprep.mubr.f32.mxu0 %v2474
    %2686 = vmatmul.mubr.f32.gmra.mxu0 %v2472
    %v2687 = vpop.f32.mrf.mxu0
    %v2688 = vadd.f32 0.0, %v2687
    %v2689 = vpop.f32.mrf.mxu0
    %v2690 = vadd.f32 0.0, %v2689
    %2691 = vdwg.mxu0
    %2692 = vmatprep.subr.mxu0 %v987
    %2693 = vmatpush1.msra.mxu0 %v986
    %2694 = vmatprep.subr.mxu0 %v979
    %2695 = vmatpush1.msra.mxu0 %v978
    %2696 = vmatprep.subr.mxu0 %v971
    %2697 = vmatpush1.msra.mxu0 %v970
    %2698 = vmatprep.subr.mxu0 %v963
    %2699 = vmatpush1.msra.mxu0 %v962
    %2700 = vmatprep.subr.mxu0 %v955
    %2701 = vmatpush1.msra.mxu0 %v954
    %2702 = vmatprep.subr.mxu0 %v947
    %2703 = vmatpush1.msra.mxu0 %v946
    %2704 = vmatprep.subr.mxu0 %v939
    %2705 = vmatpush1.msra.mxu0 %v938
    %2706 = vmatprep.subr.mxu0 %v931
    %2707 = vmatpush1.msra.mxu0 %v930
    %2708 = vmatprep.subr.mxu0 %v923
    %2709 = vmatpush1.msra.mxu0 %v922
    %2710 = vmatprep.subr.mxu0 %v915
    %2711 = vmatpush1.msra.mxu0 %v914
    %2712 = vmatprep.subr.mxu0 %v907
    %2713 = vmatpush1.msra.mxu0 %v906
    %2714 = vmatprep.subr.mxu0 %v899
    %2715 = vmatpush1.msra.mxu0 %v898
    %2716 = vmatprep.subr.mxu0 %v891
    %2717 = vmatpush1.msra.mxu0 %v890
    %2718 = vmatprep.subr.mxu0 %v883
    %2719 = vmatpush1.msra.mxu0 %v882
    %2720 = vmatprep.subr.mxu0 %v875
    %2721 = vmatpush1.msra.mxu0 %v874
    %2722 = vmatprep.subr.mxu0 %v867
    %2723 = vmatpush1.msra.mxu0 %v866
    %2724 = vmatprep.subr.mxu0 %v1115
    %2725 = vmatpush2.msra.mxu0 %v1114
    %2726 = vmatprep.subr.mxu0 %v1107
    %2727 = vmatpush2.msra.mxu0 %v1106
    %2728 = vmatprep.subr.mxu0 %v1099
    %2729 = vmatpush2.msra.mxu0 %v1098
    %2730 = vmatprep.subr.mxu0 %v1091
    %2731 = vmatpush2.msra.mxu0 %v1090
    %2732 = vmatprep.subr.mxu0 %v1083
    %2733 = vmatpush2.msra.mxu0 %v1082
    %2734 = vmatprep.subr.mxu0 %v1075
    %2735 = vmatpush2.msra.mxu0 %v1074
    %2736 = vmatprep.subr.mxu0 %v1067
    %2737 = vmatpush2.msra.mxu0 %v1066
    %2738 = vmatprep.subr.mxu0 %v1059
    %2739 = vmatpush2.msra.mxu0 %v1058
    %2740 = vmatprep.subr.mxu0 %v1051
    %2741 = vmatpush2.msra.mxu0 %v1050
    %2742 = vmatprep.subr.mxu0 %v1043
    %2743 = vmatpush2.msra.mxu0 %v1042
    %2744 = vmatprep.subr.mxu0 %v1035
    %2745 = vmatpush2.msra.mxu0 %v1034
    %2746 = vmatprep.subr.mxu0 %v1027
    %2747 = vmatpush2.msra.mxu0 %v1026
    %2748 = vmatprep.subr.mxu0 %v1019
    %2749 = vmatpush2.msra.mxu0 %v1018
    %2750 = vmatprep.subr.mxu0 %v1011
    %2751 = vmatpush2.msra.mxu0 %v1010
    %2752 = vmatprep.subr.mxu0 %v1003
    %2753 = vmatpush2.msra.mxu0 %v1002
    %2754 = vmatprep.subr.mxu0 %v995
    %2755 = vmatpush2.msra.mxu0 %v994
    %2756 = vmatprep.mubr.f32.mxu0 %v2474
    %2757 = vmatmul.mubr.f32.gmra.mxu0 %v2472
    %v2758 = vpop.f32.mrf.mxu0
    %v2759 = vadd.f32 0.0, %v2758
    %v2760 = vpop.f32.mrf.mxu0
    %v2761 = vadd.f32 0.0, %v2760
    %2762 = vdwg.mxu0
    %s2763 = smul.addr %s2434, 8
    %s2764 = scalar_lea.vmem [#allocation2], %s2763
    %v2765 = vld [vmem:[%s2764] sm:$0xff]
    %v2766 = vld [vmem:[%s2764 + $0x8] sm:$0xff]
    %v2767 = vld [vmem:[%s2764 + $0x10] sm:$0xff]
    %v2768 = vld [vmem:[%s2764 + $0x18] sm:$0xff]
    %v2769 = vadd.f32 %v2546, %v2765
    %v2770 = vadd.f32 %v2548, %v2766
    %v2771 = vadd.f32 %v2617, %v2767
    %v2772 = vadd.f32 %v2619, %v2768
    %s2773 = smul.addr %s2423, 8
    %s2774 = scalar_lea.vmem [#allocation3], %s2773
    %v2775 = vld [vmem:[%s2774] sm:$0xff]
    %v2776 = vld [vmem:[%s2774 + $0x8] sm:$0xff]
    %v2777 = vld [vmem:[%s2774 + $0x10] sm:$0xff]
    %v2778 = vld [vmem:[%s2774 + $0x18] sm:$0xff]
    %v2779 = vadd.f32 %v2688, %v2775
    %v2780 = vadd.f32 %v2690, %v2776
    %v2781 = vadd.f32 %v2759, %v2777
    %v2782 = vadd.f32 %v2761, %v2778
    %v2783 = vtanh.pop %v2769
    %v2784 = vtanh.pop %v2770
    %v2785 = vtanh.pop %v2771
    %v2786 = vtanh.pop %v2772
    %v2787 = vtanh.pop %v2779
    %v2788 = vtanh.pop %v2780
    %v2789 = vtanh.pop %v2781
    %v2790 = vtanh.pop %v2782
    %v2791 = vmul.f32 %v2783, 0.5
    %v2792 = vadd.f32 %v2791, 0.5
    %v2793 = vmul.f32 %v2784, 0.5
    %v2794 = vadd.f32 %v2793, 0.5
    %v2795 = vmul.f32 %v2786, 0.5
    %v2796 = vadd.f32 %v2795, 0.5
    %v2797 = vmul.f32 %v2787, 0.5
    %v2798 = vadd.f32 %v2797, 0.5
    %v2799 = vmul.f32 %v2788, 0.5
    %v2800 = vadd.f32 %v2799, 0.5
    %v2801 = vmul.f32 %v2790, 0.5
    %v2802 = vadd.f32 %v2801, 0.5
    %v2803 = vmul.f32 %v2794, %v2467
    %v2804 = vmul.f32 %v2792, %v2785
    %v2805 = vadd.f32 %v2803, %v2804
    %v2806 = vmul.f32 %v2800, %v2470
    %v2807 = vmul.f32 %v2798, %v2789
    %v2808 = vadd.f32 %v2806, %v2807
    %v2809 = vtanh.pop %v2805
    %v2810 = vmul.f32 %v2796, %v2809
    %v2811 = vtanh.pop %v2808
    %v2812 = vmul.f32 %v2802, %v2811
    %s2813 = scalar_lea.vmem [#allocation18], 32
    %2814 = vst [vmem:[%s2813] sm:$0xff] %v2810
    %s2815 = scalar_lea.vmem [#allocation19], 24
    %2816 = vst [vmem:[%s2815] sm:$0xff] %v2812
    %2817 = vmatprep.subr.mxu0 %v981
    %2818 = vmatpush1.msra.mxu0 %v980
    %2819 = vmatprep.subr.mxu0 %v973
    %2820 = vmatpush1.msra.mxu0 %v972
    %2821 = vmatprep.subr.mxu0 %v965
    %2822 = vmatpush1.msra.mxu0 %v964
    %2823 = vmatprep.subr.mxu0 %v957
    %2824 = vmatpush1.msra.mxu0 %v956
    %2825 = vmatprep.subr.mxu0 %v949
    %2826 = vmatpush1.msra.mxu0 %v948
    %2827 = vmatprep.subr.mxu0 %v941
    %2828 = vmatpush1.msra.mxu0 %v940
    %2829 = vmatprep.subr.mxu0 %v933
    %2830 = vmatpush1.msra.mxu0 %v932
    %2831 = vmatprep.subr.mxu0 %v925
    %2832 = vmatpush1.msra.mxu0 %v924
    %2833 = vmatprep.subr.mxu0 %v917
    %2834 = vmatpush1.msra.mxu0 %v916
    %2835 = vmatprep.subr.mxu0 %v909
    %2836 = vmatpush1.msra.mxu0 %v908
    %2837 = vmatprep.subr.mxu0 %v901
    %2838 = vmatpush1.msra.mxu0 %v900
    %2839 = vmatprep.subr.mxu0 %v893
    %2840 = vmatpush1.msra.mxu0 %v892
    %2841 = vmatprep.subr.mxu0 %v885
    %2842 = vmatpush1.msra.mxu0 %v884
    %2843 = vmatprep.subr.mxu0 %v877
    %2844 = vmatpush1.msra.mxu0 %v876
    %2845 = vmatprep.subr.mxu0 %v869
    %2846 = vmatpush1.msra.mxu0 %v868
    %2847 = vmatprep.subr.mxu0 %v861
    %2848 = vmatpush1.msra.mxu0 %v860
    %2849 = vmatprep.subr.mxu0 %v1109
    %2850 = vmatpush2.msra.mxu0 %v1108
    %2851 = vmatprep.subr.mxu0 %v1101
    %2852 = vmatpush2.msra.mxu0 %v1100
    %2853 = vmatprep.subr.mxu0 %v1093
    %2854 = vmatpush2.msra.mxu0 %v1092
    %2855 = vmatprep.subr.mxu0 %v1085
    %2856 = vmatpush2.msra.mxu0 %v1084
    %2857 = vmatprep.subr.mxu0 %v1077
    %2858 = vmatpush2.msra.mxu0 %v1076
    %2859 = vmatprep.subr.mxu0 %v1069
    %2860 = vmatpush2.msra.mxu0 %v1068
    %2861 = vmatprep.subr.mxu0 %v1061
    %2862 = vmatpush2.msra.mxu0 %v1060
    %2863 = vmatprep.subr.mxu0 %v1053
    %2864 = vmatpush2.msra.mxu0 %v1052
    %2865 = vmatprep.subr.mxu0 %v1045
    %2866 = vmatpush2.msra.mxu0 %v1044
    %2867 = vmatprep.subr.mxu0 %v1037
    %2868 = vmatpush2.msra.mxu0 %v1036
    %2869 = vmatprep.subr.mxu0 %v1029
    %2870 = vmatpush2.msra.mxu0 %v1028
    %2871 = vmatprep.subr.mxu0 %v1021
    %2872 = vmatpush2.msra.mxu0 %v1020
    %2873 = vmatprep.subr.mxu0 %v1013
    %2874 = vmatpush2.msra.mxu0 %v1012
    %2875 = vmatprep.subr.mxu0 %v1005
    %2876 = vmatpush2.msra.mxu0 %v1004
    %2877 = vmatprep.subr.mxu0 %v997
    %2878 = vmatpush2.msra.mxu0 %v996
    %2879 = vmatprep.subr.mxu0 %v989
    %2880 = vmatpush2.msra.mxu0 %v988
    %2881 = vmatprep.mubr.f32.mxu0 %v2812
    %2882 = vmatmul.mubr.f32.gmra.mxu0 %v2810
    %v2883 = vpop.f32.mrf.mxu0
    %v2884 = vadd.f32 0.0, %v2883
    %v2885 = vpop.f32.mrf.mxu0
    %v2886 = vadd.f32 0.0, %v2885
    %2887 = vdwg.mxu0
    %2888 = vmatprep.subr.mxu0 %v983
    %2889 = vmatpush1.msra.mxu0 %v982
    %2890 = vmatprep.subr.mxu0 %v975
    %2891 = vmatpush1.msra.mxu0 %v974
    %2892 = vmatprep.subr.mxu0 %v967
    %2893 = vmatpush1.msra.mxu0 %v966
    %2894 = vmatprep.subr.mxu0 %v959
    %2895 = vmatpush1.msra.mxu0 %v958
    %2896 = vmatprep.subr.mxu0 %v951
    %2897 = vmatpush1.msra.mxu0 %v950
    %2898 = vmatprep.subr.mxu0 %v943
    %2899 = vmatpush1.msra.mxu0 %v942
    %2900 = vmatprep.subr.mxu0 %v935
    %2901 = vmatpush1.msra.mxu0 %v934
    %2902 = vmatprep.subr.mxu0 %v927
    %2903 = vmatpush1.msra.mxu0 %v926
    %2904 = vmatprep.subr.mxu0 %v919
    %2905 = vmatpush1.msra.mxu0 %v918
    %2906 = vmatprep.subr.mxu0 %v911
    %2907 = vmatpush1.msra.mxu0 %v910
    %2908 = vmatprep.subr.mxu0 %v903
    %2909 = vmatpush1.msra.mxu0 %v902
    %2910 = vmatprep.subr.mxu0 %v895
    %2911 = vmatpush1.msra.mxu0 %v894
    %2912 = vmatprep.subr.mxu0 %v887
    %2913 = vmatpush1.msra.mxu0 %v886
    %2914 = vmatprep.subr.mxu0 %v879
    %2915 = vmatpush1.msra.mxu0 %v878
    %2916 = vmatprep.subr.mxu0 %v871
    %2917 = vmatpush1.msra.mxu0 %v870
    %2918 = vmatprep.subr.mxu0 %v863
    %2919 = vmatpush1.msra.mxu0 %v862
    %2920 = vmatprep.subr.mxu0 %v1111
    %2921 = vmatpush2.msra.mxu0 %v1110
    %2922 = vmatprep.subr.mxu0 %v1103
    %2923 = vmatpush2.msra.mxu0 %v1102
    %2924 = vmatprep.subr.mxu0 %v1095
    %2925 = vmatpush2.msra.mxu0 %v1094
    %2926 = vmatprep.subr.mxu0 %v1087
    %2927 = vmatpush2.msra.mxu0 %v1086
    %2928 = vmatprep.subr.mxu0 %v1079
    %2929 = vmatpush2.msra.mxu0 %v1078
    %2930 = vmatprep.subr.mxu0 %v1071
    %2931 = vmatpush2.msra.mxu0 %v1070
    %2932 = vmatprep.subr.mxu0 %v1063
    %2933 = vmatpush2.msra.mxu0 %v1062
    %2934 = vmatprep.subr.mxu0 %v1055
    %2935 = vmatpush2.msra.mxu0 %v1054
    %2936 = vmatprep.subr.mxu0 %v1047
    %2937 = vmatpush2.msra.mxu0 %v1046
    %2938 = vmatprep.subr.mxu0 %v1039
    %2939 = vmatpush2.msra.mxu0 %v1038
    %2940 = vmatprep.subr.mxu0 %v1031
    %2941 = vmatpush2.msra.mxu0 %v1030
    %2942 = vmatprep.subr.mxu0 %v1023
    %2943 = vmatpush2.msra.mxu0 %v1022
    %2944 = vmatprep.subr.mxu0 %v1015
    %2945 = vmatpush2.msra.mxu0 %v1014
    %2946 = vmatprep.subr.mxu0 %v1007
    %2947 = vmatpush2.msra.mxu0 %v1006
    %2948 = vmatprep.subr.mxu0 %v999
    %2949 = vmatpush2.msra.mxu0 %v998
    %2950 = vmatprep.subr.mxu0 %v991
    %2951 = vmatpush2.msra.mxu0 %v990
    %2952 = vmatprep.mubr.f32.mxu0 %v2812
    %2953 = vmatmul.mubr.f32.gmra.mxu0 %v2810
    %v2954 = vpop.f32.mrf.mxu0
    %v2955 = vadd.f32 0.0, %v2954
    %v2956 = vpop.f32.mrf.mxu0
    %v2957 = vadd.f32 0.0, %v2956
    %2958 = vdwg.mxu0
    %2959 = vmatprep.subr.mxu0 %v985
    %2960 = vmatpush1.msra.mxu0 %v984
    %2961 = vmatprep.subr.mxu0 %v977
    %2962 = vmatpush1.msra.mxu0 %v976
    %2963 = vmatprep.subr.mxu0 %v969
    %2964 = vmatpush1.msra.mxu0 %v968
    %2965 = vmatprep.subr.mxu0 %v961
    %2966 = vmatpush1.msra.mxu0 %v960
    %2967 = vmatprep.subr.mxu0 %v953
    %2968 = vmatpush1.msra.mxu0 %v952
    %2969 = vmatprep.subr.mxu0 %v945
    %2970 = vmatpush1.msra.mxu0 %v944
    %2971 = vmatprep.subr.mxu0 %v937
    %2972 = vmatpush1.msra.mxu0 %v936
    %2973 = vmatprep.subr.mxu0 %v929
    %2974 = vmatpush1.msra.mxu0 %v928
    %2975 = vmatprep.subr.mxu0 %v921
    %2976 = vmatpush1.msra.mxu0 %v920
    %2977 = vmatprep.subr.mxu0 %v913
    %2978 = vmatpush1.msra.mxu0 %v912
    %2979 = vmatprep.subr.mxu0 %v905
    %2980 = vmatpush1.msra.mxu0 %v904
    %2981 = vmatprep.subr.mxu0 %v897
    %2982 = vmatpush1.msra.mxu0 %v896
    %2983 = vmatprep.subr.mxu0 %v889
    %2984 = vmatpush1.msra.mxu0 %v888
    %2985 = vmatprep.subr.mxu0 %v881
    %2986 = vmatpush1.msra.mxu0 %v880
    %2987 = vmatprep.subr.mxu0 %v873
    %2988 = vmatpush1.msra.mxu0 %v872
    %2989 = vmatprep.subr.mxu0 %v865
    %2990 = vmatpush1.msra.mxu0 %v864
    %2991 = vmatprep.subr.mxu0 %v1113
    %2992 = vmatpush2.msra.mxu0 %v1112
    %2993 = vmatprep.subr.mxu0 %v1105
    %2994 = vmatpush2.msra.mxu0 %v1104
    %2995 = vmatprep.subr.mxu0 %v1097
    %2996 = vmatpush2.msra.mxu0 %v1096
    %2997 = vmatprep.subr.mxu0 %v1089
    %2998 = vmatpush2.msra.mxu0 %v1088
    %2999 = vmatprep.subr.mxu0 %v1081
    %3000 = vmatpush2.msra.mxu0 %v1080
    %3001 = vmatprep.subr.mxu0 %v1073
    %3002 = vmatpush2.msra.mxu0 %v1072
    %3003 = vmatprep.subr.mxu0 %v1065
    %3004 = vmatpush2.msra.mxu0 %v1064
    %3005 = vmatprep.subr.mxu0 %v1057
    %3006 = vmatpush2.msra.mxu0 %v1056
    %3007 = vmatprep.subr.mxu0 %v1049
    %3008 = vmatpush2.msra.mxu0 %v1048
    %3009 = vmatprep.subr.mxu0 %v1041
    %3010 = vmatpush2.msra.mxu0 %v1040
    %3011 = vmatprep.subr.mxu0 %v1033
    %3012 = vmatpush2.msra.mxu0 %v1032
    %3013 = vmatprep.subr.mxu0 %v1025
    %3014 = vmatpush2.msra.mxu0 %v1024
    %3015 = vmatprep.subr.mxu0 %v1017
    %3016 = vmatpush2.msra.mxu0 %v1016
    %3017 = vmatprep.subr.mxu0 %v1009
    %3018 = vmatpush2.msra.mxu0 %v1008
    %3019 = vmatprep.subr.mxu0 %v1001
    %3020 = vmatpush2.msra.mxu0 %v1000
    %3021 = vmatprep.subr.mxu0 %v993
    %3022 = vmatpush2.msra.mxu0 %v992
    %3023 = vmatprep.mubr.f32.mxu0 %v2812
    %3024 = vmatmul.mubr.f32.gmra.mxu0 %v2810
    %v3025 = vpop.f32.mrf.mxu0
    %v3026 = vadd.f32 0.0, %v3025
    %v3027 = vpop.f32.mrf.mxu0
    %v3028 = vadd.f32 0.0, %v3027
    %3029 = vdwg.mxu0
    %3030 = vmatprep.subr.mxu0 %v987
    %3031 = vmatpush1.msra.mxu0 %v986
    %3032 = vmatprep.subr.mxu0 %v979
    %3033 = vmatpush1.msra.mxu0 %v978
    %3034 = vmatprep.subr.mxu0 %v971
    %3035 = vmatpush1.msra.mxu0 %v970
    %3036 = vmatprep.subr.mxu0 %v963
    %3037 = vmatpush1.msra.mxu0 %v962
    %3038 = vmatprep.subr.mxu0 %v955
    %3039 = vmatpush1.msra.mxu0 %v954
    %3040 = vmatprep.subr.mxu0 %v947
    %3041 = vmatpush1.msra.mxu0 %v946
    %3042 = vmatprep.subr.mxu0 %v939
    %3043 = vmatpush1.msra.mxu0 %v938
    %3044 = vmatprep.subr.mxu0 %v931
    %3045 = vmatpush1.msra.mxu0 %v930
    %3046 = vmatprep.subr.mxu0 %v923
    %3047 = vmatpush1.msra.mxu0 %v922
    %3048 = vmatprep.subr.mxu0 %v915
    %3049 = vmatpush1.msra.mxu0 %v914
    %3050 = vmatprep.subr.mxu0 %v907
    %3051 = vmatpush1.msra.mxu0 %v906
    %3052 = vmatprep.subr.mxu0 %v899
    %3053 = vmatpush1.msra.mxu0 %v898
    %3054 = vmatprep.subr.mxu0 %v891
    %3055 = vmatpush1.msra.mxu0 %v890
    %3056 = vmatprep.subr.mxu0 %v883
    %3057 = vmatpush1.msra.mxu0 %v882
    %3058 = vmatprep.subr.mxu0 %v875
    %3059 = vmatpush1.msra.mxu0 %v874
    %3060 = vmatprep.subr.mxu0 %v867
    %3061 = vmatpush1.msra.mxu0 %v866
    %3062 = vmatprep.subr.mxu0 %v1115
    %3063 = vmatpush2.msra.mxu0 %v1114
    %3064 = vmatprep.subr.mxu0 %v1107
    %3065 = vmatpush2.msra.mxu0 %v1106
    %3066 = vmatprep.subr.mxu0 %v1099
    %3067 = vmatpush2.msra.mxu0 %v1098
    %3068 = vmatprep.subr.mxu0 %v1091
    %3069 = vmatpush2.msra.mxu0 %v1090
    %3070 = vmatprep.subr.mxu0 %v1083
    %3071 = vmatpush2.msra.mxu0 %v1082
    %3072 = vmatprep.subr.mxu0 %v1075
    %3073 = vmatpush2.msra.mxu0 %v1074
    %3074 = vmatprep.subr.mxu0 %v1067
    %3075 = vmatpush2.msra.mxu0 %v1066
    %3076 = vmatprep.subr.mxu0 %v1059
    %3077 = vmatpush2.msra.mxu0 %v1058
    %3078 = vmatprep.subr.mxu0 %v1051
    %3079 = vmatpush2.msra.mxu0 %v1050
    %3080 = vmatprep.subr.mxu0 %v1043
    %3081 = vmatpush2.msra.mxu0 %v1042
    %3082 = vmatprep.subr.mxu0 %v1035
    %3083 = vmatpush2.msra.mxu0 %v1034
    %3084 = vmatprep.subr.mxu0 %v1027
    %3085 = vmatpush2.msra.mxu0 %v1026
    %3086 = vmatprep.subr.mxu0 %v1019
    %3087 = vmatpush2.msra.mxu0 %v1018
    %3088 = vmatprep.subr.mxu0 %v1011
    %3089 = vmatpush2.msra.mxu0 %v1010
    %3090 = vmatprep.subr.mxu0 %v1003
    %3091 = vmatpush2.msra.mxu0 %v1002
    %3092 = vmatprep.subr.mxu0 %v995
    %3093 = vmatpush2.msra.mxu0 %v994
    %3094 = vmatprep.mubr.f32.mxu0 %v2812
    %3095 = vmatmul.mubr.f32.gmra.mxu0 %v2810
    %v3096 = vpop.f32.mrf.mxu0
    %v3097 = vadd.f32 0.0, %v3096
    %v3098 = vpop.f32.mrf.mxu0
    %v3099 = vadd.f32 0.0, %v3098
    %3100 = vdwg.mxu0
    %s3101 = smul.addr %s2094, 8
    %s3102 = scalar_lea.vmem [#allocation2], %s3101
    %v3103 = vld [vmem:[%s3102] sm:$0xff]
    %v3104 = vld [vmem:[%s3102 + $0x8] sm:$0xff]
    %v3105 = vld [vmem:[%s3102 + $0x10] sm:$0xff]
    %v3106 = vld [vmem:[%s3102 + $0x18] sm:$0xff]
    %v3107 = vadd.f32 %v2884, %v3103
    %v3108 = vadd.f32 %v2886, %v3104
    %v3109 = vadd.f32 %v2955, %v3105
    %v3110 = vadd.f32 %v2957, %v3106
    %s3111 = smul.addr %s2083, 8
    %s3112 = scalar_lea.vmem [#allocation3], %s3111
    %v3113 = vld [vmem:[%s3112] sm:$0xff]
    %v3114 = vld [vmem:[%s3112 + $0x8] sm:$0xff]
    %v3115 = vld [vmem:[%s3112 + $0x10] sm:$0xff]
    %v3116 = vld [vmem:[%s3112 + $0x18] sm:$0xff]
    %v3117 = vadd.f32 %v3026, %v3113
    %v3118 = vadd.f32 %v3028, %v3114
    %v3119 = vadd.f32 %v3097, %v3115
    %v3120 = vadd.f32 %v3099, %v3116
    %v3121 = vtanh.pop %v3107
    %v3122 = vtanh.pop %v3108
    %v3123 = vtanh.pop %v3109
    %v3124 = vtanh.pop %v3110
    %v3125 = vtanh.pop %v3117
    %v3126 = vtanh.pop %v3118
    %v3127 = vtanh.pop %v3119
    %v3128 = vtanh.pop %v3120
    %v3129 = vmul.f32 %v3121, 0.5
    %v3130 = vadd.f32 %v3129, 0.5
    %v3131 = vmul.f32 %v3122, 0.5
    %v3132 = vadd.f32 %v3131, 0.5
    %v3133 = vmul.f32 %v3124, 0.5
    %v3134 = vadd.f32 %v3133, 0.5
    %v3135 = vmul.f32 %v3125, 0.5
    %v3136 = vadd.f32 %v3135, 0.5
    %v3137 = vmul.f32 %v3126, 0.5
    %v3138 = vadd.f32 %v3137, 0.5
    %v3139 = vmul.f32 %v3128, 0.5
    %v3140 = vadd.f32 %v3139, 0.5
    %v3141 = vmul.f32 %v3132, %v2805
    %v3142 = vmul.f32 %v3130, %v3123
    %v3143 = vadd.f32 %v3141, %v3142
    %v3144 = vmul.f32 %v3138, %v2808
    %v3145 = vmul.f32 %v3136, %v3127
    %v3146 = vadd.f32 %v3144, %v3145
    %v3147 = vtanh.pop %v3143
    %v3148 = vmul.f32 %v3134, %v3147
    %v3149 = vtanh.pop %v3146
    %v3150 = vmul.f32 %v3140, %v3149
    %s3151 = scalar_lea.vmem [#allocation18], 40
    %3152 = vst [vmem:[%s3151] sm:$0xff] %v3148
    %s3153 = scalar_lea.vmem [#allocation19], 16
    %3154 = vst [vmem:[%s3153] sm:$0xff] %v3150
    %3155 = vmatprep.subr.mxu0 %v981
    %3156 = vmatpush1.msra.mxu0 %v980
    %3157 = vmatprep.subr.mxu0 %v973
    %3158 = vmatpush1.msra.mxu0 %v972
    %3159 = vmatprep.subr.mxu0 %v965
    %3160 = vmatpush1.msra.mxu0 %v964
    %3161 = vmatprep.subr.mxu0 %v957
    %3162 = vmatpush1.msra.mxu0 %v956
    %3163 = vmatprep.subr.mxu0 %v949
    %3164 = vmatpush1.msra.mxu0 %v948
    %3165 = vmatprep.subr.mxu0 %v941
    %3166 = vmatpush1.msra.mxu0 %v940
    %3167 = vmatprep.subr.mxu0 %v933
    %3168 = vmatpush1.msra.mxu0 %v932
    %3169 = vmatprep.subr.mxu0 %v925
    %3170 = vmatpush1.msra.mxu0 %v924
    %3171 = vmatprep.subr.mxu0 %v917
    %3172 = vmatpush1.msra.mxu0 %v916
    %3173 = vmatprep.subr.mxu0 %v909
    %3174 = vmatpush1.msra.mxu0 %v908
    %3175 = vmatprep.subr.mxu0 %v901
    %3176 = vmatpush1.msra.mxu0 %v900
    %3177 = vmatprep.subr.mxu0 %v893
    %3178 = vmatpush1.msra.mxu0 %v892
    %3179 = vmatprep.subr.mxu0 %v885
    %3180 = vmatpush1.msra.mxu0 %v884
    %3181 = vmatprep.subr.mxu0 %v877
    %3182 = vmatpush1.msra.mxu0 %v876
    %3183 = vmatprep.subr.mxu0 %v869
    %3184 = vmatpush1.msra.mxu0 %v868
    %3185 = vmatprep.subr.mxu0 %v861
    %3186 = vmatpush1.msra.mxu0 %v860
    %3187 = vmatprep.subr.mxu0 %v1109
    %3188 = vmatpush2.msra.mxu0 %v1108
    %3189 = vmatprep.subr.mxu0 %v1101
    %3190 = vmatpush2.msra.mxu0 %v1100
    %3191 = vmatprep.subr.mxu0 %v1093
    %3192 = vmatpush2.msra.mxu0 %v1092
    %3193 = vmatprep.subr.mxu0 %v1085
    %3194 = vmatpush2.msra.mxu0 %v1084
    %3195 = vmatprep.subr.mxu0 %v1077
    %3196 = vmatpush2.msra.mxu0 %v1076
    %3197 = vmatprep.subr.mxu0 %v1069
    %3198 = vmatpush2.msra.mxu0 %v1068
    %3199 = vmatprep.subr.mxu0 %v1061
    %3200 = vmatpush2.msra.mxu0 %v1060
    %3201 = vmatprep.subr.mxu0 %v1053
    %3202 = vmatpush2.msra.mxu0 %v1052
    %3203 = vmatprep.subr.mxu0 %v1045
    %3204 = vmatpush2.msra.mxu0 %v1044
    %3205 = vmatprep.subr.mxu0 %v1037
    %3206 = vmatpush2.msra.mxu0 %v1036
    %3207 = vmatprep.subr.mxu0 %v1029
    %3208 = vmatpush2.msra.mxu0 %v1028
    %3209 = vmatprep.subr.mxu0 %v1021
    %3210 = vmatpush2.msra.mxu0 %v1020
    %3211 = vmatprep.subr.mxu0 %v1013
    %3212 = vmatpush2.msra.mxu0 %v1012
    %3213 = vmatprep.subr.mxu0 %v1005
    %3214 = vmatpush2.msra.mxu0 %v1004
    %3215 = vmatprep.subr.mxu0 %v997
    %3216 = vmatpush2.msra.mxu0 %v996
    %3217 = vmatprep.subr.mxu0 %v989
    %3218 = vmatpush2.msra.mxu0 %v988
    %3219 = vmatprep.mubr.f32.mxu0 %v3150
    %3220 = vmatmul.mubr.f32.gmra.mxu0 %v3148
    %v3221 = vpop.f32.mrf.mxu0
    %v3222 = vadd.f32 0.0, %v3221
    %v3223 = vpop.f32.mrf.mxu0
    %v3224 = vadd.f32 0.0, %v3223
    %3225 = vdwg.mxu0
    %3226 = vmatprep.subr.mxu0 %v983
    %3227 = vmatpush1.msra.mxu0 %v982
    %3228 = vmatprep.subr.mxu0 %v975
    %3229 = vmatpush1.msra.mxu0 %v974
    %3230 = vmatprep.subr.mxu0 %v967
    %3231 = vmatpush1.msra.mxu0 %v966
    %3232 = vmatprep.subr.mxu0 %v959
    %3233 = vmatpush1.msra.mxu0 %v958
    %3234 = vmatprep.subr.mxu0 %v951
    %3235 = vmatpush1.msra.mxu0 %v950
    %3236 = vmatprep.subr.mxu0 %v943
    %3237 = vmatpush1.msra.mxu0 %v942
    %3238 = vmatprep.subr.mxu0 %v935
    %3239 = vmatpush1.msra.mxu0 %v934
    %3240 = vmatprep.subr.mxu0 %v927
    %3241 = vmatpush1.msra.mxu0 %v926
    %3242 = vmatprep.subr.mxu0 %v919
    %3243 = vmatpush1.msra.mxu0 %v918
    %3244 = vmatprep.subr.mxu0 %v911
    %3245 = vmatpush1.msra.mxu0 %v910
    %3246 = vmatprep.subr.mxu0 %v903
    %3247 = vmatpush1.msra.mxu0 %v902
    %3248 = vmatprep.subr.mxu0 %v895
    %3249 = vmatpush1.msra.mxu0 %v894
    %3250 = vmatprep.subr.mxu0 %v887
    %3251 = vmatpush1.msra.mxu0 %v886
    %3252 = vmatprep.subr.mxu0 %v879
    %3253 = vmatpush1.msra.mxu0 %v878
    %3254 = vmatprep.subr.mxu0 %v871
    %3255 = vmatpush1.msra.mxu0 %v870
    %3256 = vmatprep.subr.mxu0 %v863
    %3257 = vmatpush1.msra.mxu0 %v862
    %3258 = vmatprep.subr.mxu0 %v1111
    %3259 = vmatpush2.msra.mxu0 %v1110
    %3260 = vmatprep.subr.mxu0 %v1103
    %3261 = vmatpush2.msra.mxu0 %v1102
    %3262 = vmatprep.subr.mxu0 %v1095
    %3263 = vmatpush2.msra.mxu0 %v1094
    %3264 = vmatprep.subr.mxu0 %v1087
    %3265 = vmatpush2.msra.mxu0 %v1086
    %3266 = vmatprep.subr.mxu0 %v1079
    %3267 = vmatpush2.msra.mxu0 %v1078
    %3268 = vmatprep.subr.mxu0 %v1071
    %3269 = vmatpush2.msra.mxu0 %v1070
    %3270 = vmatprep.subr.mxu0 %v1063
    %3271 = vmatpush2.msra.mxu0 %v1062
    %3272 = vmatprep.subr.mxu0 %v1055
    %3273 = vmatpush2.msra.mxu0 %v1054
    %3274 = vmatprep.subr.mxu0 %v1047
    %3275 = vmatpush2.msra.mxu0 %v1046
    %3276 = vmatprep.subr.mxu0 %v1039
    %3277 = vmatpush2.msra.mxu0 %v1038
    %3278 = vmatprep.subr.mxu0 %v1031
    %3279 = vmatpush2.msra.mxu0 %v1030
    %3280 = vmatprep.subr.mxu0 %v1023
    %3281 = vmatpush2.msra.mxu0 %v1022
    %3282 = vmatprep.subr.mxu0 %v1015
    %3283 = vmatpush2.msra.mxu0 %v1014
    %3284 = vmatprep.subr.mxu0 %v1007
    %3285 = vmatpush2.msra.mxu0 %v1006
    %3286 = vmatprep.subr.mxu0 %v999
    %3287 = vmatpush2.msra.mxu0 %v998
    %3288 = vmatprep.subr.mxu0 %v991
    %3289 = vmatpush2.msra.mxu0 %v990
    %3290 = vmatprep.mubr.f32.mxu0 %v3150
    %3291 = vmatmul.mubr.f32.gmra.mxu0 %v3148
    %v3292 = vpop.f32.mrf.mxu0
    %v3293 = vadd.f32 0.0, %v3292
    %v3294 = vpop.f32.mrf.mxu0
    %v3295 = vadd.f32 0.0, %v3294
    %3296 = vdwg.mxu0
    %3297 = vmatprep.subr.mxu0 %v985
    %3298 = vmatpush1.msra.mxu0 %v984
    %3299 = vmatprep.subr.mxu0 %v977
    %3300 = vmatpush1.msra.mxu0 %v976
    %3301 = vmatprep.subr.mxu0 %v969
    %3302 = vmatpush1.msra.mxu0 %v968
    %3303 = vmatprep.subr.mxu0 %v961
    %3304 = vmatpush1.msra.mxu0 %v960
    %3305 = vmatprep.subr.mxu0 %v953
    %3306 = vmatpush1.msra.mxu0 %v952
    %3307 = vmatprep.subr.mxu0 %v945
    %3308 = vmatpush1.msra.mxu0 %v944
    %3309 = vmatprep.subr.mxu0 %v937
    %3310 = vmatpush1.msra.mxu0 %v936
    %3311 = vmatprep.subr.mxu0 %v929
    %3312 = vmatpush1.msra.mxu0 %v928
    %3313 = vmatprep.subr.mxu0 %v921
    %3314 = vmatpush1.msra.mxu0 %v920
    %3315 = vmatprep.subr.mxu0 %v913
    %3316 = vmatpush1.msra.mxu0 %v912
    %3317 = vmatprep.subr.mxu0 %v905
    %3318 = vmatpush1.msra.mxu0 %v904
    %3319 = vmatprep.subr.mxu0 %v897
    %3320 = vmatpush1.msra.mxu0 %v896
    %3321 = vmatprep.subr.mxu0 %v889
    %3322 = vmatpush1.msra.mxu0 %v888
    %3323 = vmatprep.subr.mxu0 %v881
    %3324 = vmatpush1.msra.mxu0 %v880
    %3325 = vmatprep.subr.mxu0 %v873
    %3326 = vmatpush1.msra.mxu0 %v872
    %3327 = vmatprep.subr.mxu0 %v865
    %3328 = vmatpush1.msra.mxu0 %v864
    %3329 = vmatprep.subr.mxu0 %v1113
    %3330 = vmatpush2.msra.mxu0 %v1112
    %3331 = vmatprep.subr.mxu0 %v1105
    %3332 = vmatpush2.msra.mxu0 %v1104
    %3333 = vmatprep.subr.mxu0 %v1097
    %3334 = vmatpush2.msra.mxu0 %v1096
    %3335 = vmatprep.subr.mxu0 %v1089
    %3336 = vmatpush2.msra.mxu0 %v1088
    %3337 = vmatprep.subr.mxu0 %v1081
    %3338 = vmatpush2.msra.mxu0 %v1080
    %3339 = vmatprep.subr.mxu0 %v1073
    %3340 = vmatpush2.msra.mxu0 %v1072
    %3341 = vmatprep.subr.mxu0 %v1065
    %3342 = vmatpush2.msra.mxu0 %v1064
    %3343 = vmatprep.subr.mxu0 %v1057
    %3344 = vmatpush2.msra.mxu0 %v1056
    %3345 = vmatprep.subr.mxu0 %v1049
    %3346 = vmatpush2.msra.mxu0 %v1048
    %3347 = vmatprep.subr.mxu0 %v1041
    %3348 = vmatpush2.msra.mxu0 %v1040
    %3349 = vmatprep.subr.mxu0 %v1033
    %3350 = vmatpush2.msra.mxu0 %v1032
    %3351 = vmatprep.subr.mxu0 %v1025
    %3352 = vmatpush2.msra.mxu0 %v1024
    %3353 = vmatprep.subr.mxu0 %v1017
    %3354 = vmatpush2.msra.mxu0 %v1016
    %3355 = vmatprep.subr.mxu0 %v1009
    %3356 = vmatpush2.msra.mxu0 %v1008
    %3357 = vmatprep.subr.mxu0 %v1001
    %3358 = vmatpush2.msra.mxu0 %v1000
    %3359 = vmatprep.subr.mxu0 %v993
    %3360 = vmatpush2.msra.mxu0 %v992
    %3361 = vmatprep.mubr.f32.mxu0 %v3150
    %3362 = vmatmul.mubr.f32.gmra.mxu0 %v3148
    %v3363 = vpop.f32.mrf.mxu0
    %v3364 = vadd.f32 0.0, %v3363
    %v3365 = vpop.f32.mrf.mxu0
    %v3366 = vadd.f32 0.0, %v3365
    %3367 = vdwg.mxu0
    %3368 = vmatprep.subr.mxu0 %v987
    %3369 = vmatpush1.msra.mxu0 %v986
    %3370 = vmatprep.subr.mxu0 %v979
    %3371 = vmatpush1.msra.mxu0 %v978
    %3372 = vmatprep.subr.mxu0 %v971
    %3373 = vmatpush1.msra.mxu0 %v970
    %3374 = vmatprep.subr.mxu0 %v963
    %3375 = vmatpush1.msra.mxu0 %v962
    %3376 = vmatprep.subr.mxu0 %v955
    %3377 = vmatpush1.msra.mxu0 %v954
    %3378 = vmatprep.subr.mxu0 %v947
    %3379 = vmatpush1.msra.mxu0 %v946
    %3380 = vmatprep.subr.mxu0 %v939
    %3381 = vmatpush1.msra.mxu0 %v938
    %3382 = vmatprep.subr.mxu0 %v931
    %3383 = vmatpush1.msra.mxu0 %v930
    %3384 = vmatprep.subr.mxu0 %v923
    %3385 = vmatpush1.msra.mxu0 %v922
    %3386 = vmatprep.subr.mxu0 %v915
    %3387 = vmatpush1.msra.mxu0 %v914
    %3388 = vmatprep.subr.mxu0 %v907
    %3389 = vmatpush1.msra.mxu0 %v906
    %3390 = vmatprep.subr.mxu0 %v899
    %3391 = vmatpush1.msra.mxu0 %v898
    %3392 = vmatprep.subr.mxu0 %v891
    %3393 = vmatpush1.msra.mxu0 %v890
    %3394 = vmatprep.subr.mxu0 %v883
    %3395 = vmatpush1.msra.mxu0 %v882
    %3396 = vmatprep.subr.mxu0 %v875
    %3397 = vmatpush1.msra.mxu0 %v874
    %3398 = vmatprep.subr.mxu0 %v867
    %3399 = vmatpush1.msra.mxu0 %v866
    %3400 = vmatprep.subr.mxu0 %v1115
    %3401 = vmatpush2.msra.mxu0 %v1114
    %3402 = vmatprep.subr.mxu0 %v1107
    %3403 = vmatpush2.msra.mxu0 %v1106
    %3404 = vmatprep.subr.mxu0 %v1099
    %3405 = vmatpush2.msra.mxu0 %v1098
    %3406 = vmatprep.subr.mxu0 %v1091
    %3407 = vmatpush2.msra.mxu0 %v1090
    %3408 = vmatprep.subr.mxu0 %v1083
    %3409 = vmatpush2.msra.mxu0 %v1082
    %3410 = vmatprep.subr.mxu0 %v1075
    %3411 = vmatpush2.msra.mxu0 %v1074
    %3412 = vmatprep.subr.mxu0 %v1067
    %3413 = vmatpush2.msra.mxu0 %v1066
    %3414 = vmatprep.subr.mxu0 %v1059
    %3415 = vmatpush2.msra.mxu0 %v1058
    %3416 = vmatprep.subr.mxu0 %v1051
    %3417 = vmatpush2.msra.mxu0 %v1050
    %3418 = vmatprep.subr.mxu0 %v1043
    %3419 = vmatpush2.msra.mxu0 %v1042
    %3420 = vmatprep.subr.mxu0 %v1035
    %3421 = vmatpush2.msra.mxu0 %v1034
    %3422 = vmatprep.subr.mxu0 %v1027
    %3423 = vmatpush2.msra.mxu0 %v1026
    %3424 = vmatprep.subr.mxu0 %v1019
    %3425 = vmatpush2.msra.mxu0 %v1018
    %3426 = vmatprep.subr.mxu0 %v1011
    %3427 = vmatpush2.msra.mxu0 %v1010
    %3428 = vmatprep.subr.mxu0 %v1003
    %3429 = vmatpush2.msra.mxu0 %v1002
    %3430 = vmatprep.subr.mxu0 %v995
    %3431 = vmatpush2.msra.mxu0 %v994
    %3432 = vmatprep.mubr.f32.mxu0 %v3150
    %3433 = vmatmul.mubr.f32.gmra.mxu0 %v3148
    %v3434 = vpop.f32.mrf.mxu0
    %v3435 = vadd.f32 0.0, %v3434
    %v3436 = vpop.f32.mrf.mxu0
    %v3437 = vadd.f32 0.0, %v3436
    %3438 = vdwg.mxu0
    %s3439 = smul.addr %s1754, 8
    %s3440 = scalar_lea.vmem [#allocation2], %s3439
    %v3441 = vld [vmem:[%s3440] sm:$0xff]
    %v3442 = vld [vmem:[%s3440 + $0x8] sm:$0xff]
    %v3443 = vld [vmem:[%s3440 + $0x10] sm:$0xff]
    %v3444 = vld [vmem:[%s3440 + $0x18] sm:$0xff]
    %v3445 = vadd.f32 %v3222, %v3441
    %v3446 = vadd.f32 %v3224, %v3442
    %v3447 = vadd.f32 %v3293, %v3443
    %v3448 = vadd.f32 %v3295, %v3444
    %s3449 = smul.addr %s1743, 8
    %s3450 = scalar_lea.vmem [#allocation3], %s3449
    %v3451 = vld [vmem:[%s3450] sm:$0xff]
    %v3452 = vld [vmem:[%s3450 + $0x8] sm:$0xff]
    %v3453 = vld [vmem:[%s3450 + $0x10] sm:$0xff]
    %v3454 = vld [vmem:[%s3450 + $0x18] sm:$0xff]
    %v3455 = vadd.f32 %v3364, %v3451
    %v3456 = vadd.f32 %v3366, %v3452
    %v3457 = vadd.f32 %v3435, %v3453
    %v3458 = vadd.f32 %v3437, %v3454
    %v3459 = vtanh.pop %v3445
    %v3460 = vtanh.pop %v3446
    %v3461 = vtanh.pop %v3447
    %v3462 = vtanh.pop %v3448
    %v3463 = vtanh.pop %v3455
    %v3464 = vtanh.pop %v3456
    %v3465 = vtanh.pop %v3457
    %v3466 = vtanh.pop %v3458
    %v3467 = vmul.f32 %v3459, 0.5
    %v3468 = vadd.f32 %v3467, 0.5
    %v3469 = vmul.f32 %v3460, 0.5
    %v3470 = vadd.f32 %v3469, 0.5
    %v3471 = vmul.f32 %v3462, 0.5
    %v3472 = vadd.f32 %v3471, 0.5
    %v3473 = vmul.f32 %v3463, 0.5
    %v3474 = vadd.f32 %v3473, 0.5
    %v3475 = vmul.f32 %v3464, 0.5
    %v3476 = vadd.f32 %v3475, 0.5
    %v3477 = vmul.f32 %v3466, 0.5
    %v3478 = vadd.f32 %v3477, 0.5
    %v3479 = vmul.f32 %v3470, %v3143
    %v3480 = vmul.f32 %v3468, %v3461
    %v3481 = vadd.f32 %v3479, %v3480
    %v3482 = vmul.f32 %v3476, %v3146
    %v3483 = vmul.f32 %v3474, %v3465
    %v3484 = vadd.f32 %v3482, %v3483
    %v3485 = vtanh.pop %v3481
    %v3486 = vmul.f32 %v3472, %v3485
    %v3487 = vtanh.pop %v3484
    %v3488 = vmul.f32 %v3478, %v3487
    %s3489 = scalar_lea.vmem [#allocation18], 48
    %3490 = vst [vmem:[%s3489] sm:$0xff] %v3486
    %s3491 = scalar_lea.vmem [#allocation19], 8
    %3492 = vst [vmem:[%s3491] sm:$0xff] %v3488
    %3493 = vmatprep.subr.mxu0 %v981
    %3494 = vmatpush1.msra.mxu0 %v980
    %3495 = vmatprep.subr.mxu0 %v973
    %3496 = vmatpush1.msra.mxu0 %v972
    %3497 = vmatprep.subr.mxu0 %v965
    %3498 = vmatpush1.msra.mxu0 %v964
    %3499 = vmatprep.subr.mxu0 %v957
    %3500 = vmatpush1.msra.mxu0 %v956
    %3501 = vmatprep.subr.mxu0 %v949
    %3502 = vmatpush1.msra.mxu0 %v948
    %3503 = vmatprep.subr.mxu0 %v941
    %3504 = vmatpush1.msra.mxu0 %v940
    %3505 = vmatprep.subr.mxu0 %v933
    %3506 = vmatpush1.msra.mxu0 %v932
    %3507 = vmatprep.subr.mxu0 %v925
    %3508 = vmatpush1.msra.mxu0 %v924
    %3509 = vmatprep.subr.mxu0 %v917
    %3510 = vmatpush1.msra.mxu0 %v916
    %3511 = vmatprep.subr.mxu0 %v909
    %3512 = vmatpush1.msra.mxu0 %v908
    %3513 = vmatprep.subr.mxu0 %v901
    %3514 = vmatpush1.msra.mxu0 %v900
    %3515 = vmatprep.subr.mxu0 %v893
    %3516 = vmatpush1.msra.mxu0 %v892
    %3517 = vmatprep.subr.mxu0 %v885
    %3518 = vmatpush1.msra.mxu0 %v884
    %3519 = vmatprep.subr.mxu0 %v877
    %3520 = vmatpush1.msra.mxu0 %v876
    %3521 = vmatprep.subr.mxu0 %v869
    %3522 = vmatpush1.msra.mxu0 %v868
    %3523 = vmatprep.subr.mxu0 %v861
    %3524 = vmatpush1.msra.mxu0 %v860
    %3525 = vmatprep.subr.mxu0 %v1109
    %3526 = vmatpush2.msra.mxu0 %v1108
    %3527 = vmatprep.subr.mxu0 %v1101
    %3528 = vmatpush2.msra.mxu0 %v1100
    %3529 = vmatprep.subr.mxu0 %v1093
    %3530 = vmatpush2.msra.mxu0 %v1092
    %3531 = vmatprep.subr.mxu0 %v1085
    %3532 = vmatpush2.msra.mxu0 %v1084
    %3533 = vmatprep.subr.mxu0 %v1077
    %3534 = vmatpush2.msra.mxu0 %v1076
    %3535 = vmatprep.subr.mxu0 %v1069
    %3536 = vmatpush2.msra.mxu0 %v1068
    %3537 = vmatprep.subr.mxu0 %v1061
    %3538 = vmatpush2.msra.mxu0 %v1060
    %3539 = vmatprep.subr.mxu0 %v1053
    %3540 = vmatpush2.msra.mxu0 %v1052
    %3541 = vmatprep.subr.mxu0 %v1045
    %3542 = vmatpush2.msra.mxu0 %v1044
    %3543 = vmatprep.subr.mxu0 %v1037
    %3544 = vmatpush2.msra.mxu0 %v1036
    %3545 = vmatprep.subr.mxu0 %v1029
    %3546 = vmatpush2.msra.mxu0 %v1028
    %3547 = vmatprep.subr.mxu0 %v1021
    %3548 = vmatpush2.msra.mxu0 %v1020
    %3549 = vmatprep.subr.mxu0 %v1013
    %3550 = vmatpush2.msra.mxu0 %v1012
    %3551 = vmatprep.subr.mxu0 %v1005
    %3552 = vmatpush2.msra.mxu0 %v1004
    %3553 = vmatprep.subr.mxu0 %v997
    %3554 = vmatpush2.msra.mxu0 %v996
    %3555 = vmatprep.subr.mxu0 %v989
    %3556 = vmatpush2.msra.mxu0 %v988
    %3557 = vmatprep.mubr.f32.mxu0 %v3488
    %3558 = vmatmul.mubr.f32.gmra.mxu0 %v3486
    %v3559 = vpop.f32.mrf.mxu0
    %v3560 = vadd.f32 0.0, %v3559
    %v3561 = vpop.f32.mrf.mxu0
    %v3562 = vadd.f32 0.0, %v3561
    %3563 = vdwg.mxu0
    %3564 = vmatprep.subr.mxu0 %v983
    %3565 = vmatpush1.msra.mxu0 %v982
    %3566 = vmatprep.subr.mxu0 %v975
    %3567 = vmatpush1.msra.mxu0 %v974
    %3568 = vmatprep.subr.mxu0 %v967
    %3569 = vmatpush1.msra.mxu0 %v966
    %3570 = vmatprep.subr.mxu0 %v959
    %3571 = vmatpush1.msra.mxu0 %v958
    %3572 = vmatprep.subr.mxu0 %v951
    %3573 = vmatpush1.msra.mxu0 %v950
    %3574 = vmatprep.subr.mxu0 %v943
    %3575 = vmatpush1.msra.mxu0 %v942
    %3576 = vmatprep.subr.mxu0 %v935
    %3577 = vmatpush1.msra.mxu0 %v934
    %3578 = vmatprep.subr.mxu0 %v927
    %3579 = vmatpush1.msra.mxu0 %v926
    %3580 = vmatprep.subr.mxu0 %v919
    %3581 = vmatpush1.msra.mxu0 %v918
    %3582 = vmatprep.subr.mxu0 %v911
    %3583 = vmatpush1.msra.mxu0 %v910
    %3584 = vmatprep.subr.mxu0 %v903
    %3585 = vmatpush1.msra.mxu0 %v902
    %3586 = vmatprep.subr.mxu0 %v895
    %3587 = vmatpush1.msra.mxu0 %v894
    %3588 = vmatprep.subr.mxu0 %v887
    %3589 = vmatpush1.msra.mxu0 %v886
    %3590 = vmatprep.subr.mxu0 %v879
    %3591 = vmatpush1.msra.mxu0 %v878
    %3592 = vmatprep.subr.mxu0 %v871
    %3593 = vmatpush1.msra.mxu0 %v870
    %3594 = vmatprep.subr.mxu0 %v863
    %3595 = vmatpush1.msra.mxu0 %v862
    %3596 = vmatprep.subr.mxu0 %v1111
    %3597 = vmatpush2.msra.mxu0 %v1110
    %3598 = vmatprep.subr.mxu0 %v1103
    %3599 = vmatpush2.msra.mxu0 %v1102
    %3600 = vmatprep.subr.mxu0 %v1095
    %3601 = vmatpush2.msra.mxu0 %v1094
    %3602 = vmatprep.subr.mxu0 %v1087
    %3603 = vmatpush2.msra.mxu0 %v1086
    %3604 = vmatprep.subr.mxu0 %v1079
    %3605 = vmatpush2.msra.mxu0 %v1078
    %3606 = vmatprep.subr.mxu0 %v1071
    %3607 = vmatpush2.msra.mxu0 %v1070
    %3608 = vmatprep.subr.mxu0 %v1063
    %3609 = vmatpush2.msra.mxu0 %v1062
    %3610 = vmatprep.subr.mxu0 %v1055
    %3611 = vmatpush2.msra.mxu0 %v1054
    %3612 = vmatprep.subr.mxu0 %v1047
    %3613 = vmatpush2.msra.mxu0 %v1046
    %3614 = vmatprep.subr.mxu0 %v1039
    %3615 = vmatpush2.msra.mxu0 %v1038
    %3616 = vmatprep.subr.mxu0 %v1031
    %3617 = vmatpush2.msra.mxu0 %v1030
    %3618 = vmatprep.subr.mxu0 %v1023
    %3619 = vmatpush2.msra.mxu0 %v1022
    %3620 = vmatprep.subr.mxu0 %v1015
    %3621 = vmatpush2.msra.mxu0 %v1014
    %3622 = vmatprep.subr.mxu0 %v1007
    %3623 = vmatpush2.msra.mxu0 %v1006
    %3624 = vmatprep.subr.mxu0 %v999
    %3625 = vmatpush2.msra.mxu0 %v998
    %3626 = vmatprep.subr.mxu0 %v991
    %3627 = vmatpush2.msra.mxu0 %v990
    %3628 = vmatprep.mubr.f32.mxu0 %v3488
    %3629 = vmatmul.mubr.f32.gmra.mxu0 %v3486
    %v3630 = vpop.f32.mrf.mxu0
    %v3631 = vadd.f32 0.0, %v3630
    %v3632 = vpop.f32.mrf.mxu0
    %v3633 = vadd.f32 0.0, %v3632
    %3634 = vdwg.mxu0
    %3635 = vmatprep.subr.mxu0 %v985
    %3636 = vmatpush1.msra.mxu0 %v984
    %3637 = vmatprep.subr.mxu0 %v977
    %3638 = vmatpush1.msra.mxu0 %v976
    %3639 = vmatprep.subr.mxu0 %v969
    %3640 = vmatpush1.msra.mxu0 %v968
    %3641 = vmatprep.subr.mxu0 %v961
    %3642 = vmatpush1.msra.mxu0 %v960
    %3643 = vmatprep.subr.mxu0 %v953
    %3644 = vmatpush1.msra.mxu0 %v952
    %3645 = vmatprep.subr.mxu0 %v945
    %3646 = vmatpush1.msra.mxu0 %v944
    %3647 = vmatprep.subr.mxu0 %v937
    %3648 = vmatpush1.msra.mxu0 %v936
    %3649 = vmatprep.subr.mxu0 %v929
    %3650 = vmatpush1.msra.mxu0 %v928
    %3651 = vmatprep.subr.mxu0 %v921
    %3652 = vmatpush1.msra.mxu0 %v920
    %3653 = vmatprep.subr.mxu0 %v913
    %3654 = vmatpush1.msra.mxu0 %v912
    %3655 = vmatprep.subr.mxu0 %v905
    %3656 = vmatpush1.msra.mxu0 %v904
    %3657 = vmatprep.subr.mxu0 %v897
    %3658 = vmatpush1.msra.mxu0 %v896
    %3659 = vmatprep.subr.mxu0 %v889
    %3660 = vmatpush1.msra.mxu0 %v888
    %3661 = vmatprep.subr.mxu0 %v881
    %3662 = vmatpush1.msra.mxu0 %v880
    %3663 = vmatprep.subr.mxu0 %v873
    %3664 = vmatpush1.msra.mxu0 %v872
    %3665 = vmatprep.subr.mxu0 %v865
    %3666 = vmatpush1.msra.mxu0 %v864
    %3667 = vmatprep.subr.mxu0 %v1113
    %3668 = vmatpush2.msra.mxu0 %v1112
    %3669 = vmatprep.subr.mxu0 %v1105
    %3670 = vmatpush2.msra.mxu0 %v1104
    %3671 = vmatprep.subr.mxu0 %v1097
    %3672 = vmatpush2.msra.mxu0 %v1096
    %3673 = vmatprep.subr.mxu0 %v1089
    %3674 = vmatpush2.msra.mxu0 %v1088
    %3675 = vmatprep.subr.mxu0 %v1081
    %3676 = vmatpush2.msra.mxu0 %v1080
    %3677 = vmatprep.subr.mxu0 %v1073
    %3678 = vmatpush2.msra.mxu0 %v1072
    %3679 = vmatprep.subr.mxu0 %v1065
    %3680 = vmatpush2.msra.mxu0 %v1064
    %3681 = vmatprep.subr.mxu0 %v1057
    %3682 = vmatpush2.msra.mxu0 %v1056
    %3683 = vmatprep.subr.mxu0 %v1049
    %3684 = vmatpush2.msra.mxu0 %v1048
    %3685 = vmatprep.subr.mxu0 %v1041
    %3686 = vmatpush2.msra.mxu0 %v1040
    %3687 = vmatprep.subr.mxu0 %v1033
    %3688 = vmatpush2.msra.mxu0 %v1032
    %3689 = vmatprep.subr.mxu0 %v1025
    %3690 = vmatpush2.msra.mxu0 %v1024
    %3691 = vmatprep.subr.mxu0 %v1017
    %3692 = vmatpush2.msra.mxu0 %v1016
    %3693 = vmatprep.subr.mxu0 %v1009
    %3694 = vmatpush2.msra.mxu0 %v1008
    %3695 = vmatprep.subr.mxu0 %v1001
    %3696 = vmatpush2.msra.mxu0 %v1000
    %3697 = vmatprep.subr.mxu0 %v993
    %3698 = vmatpush2.msra.mxu0 %v992
    %3699 = vmatprep.mubr.f32.mxu0 %v3488
    %3700 = vmatmul.mubr.f32.gmra.mxu0 %v3486
    %v3701 = vpop.f32.mrf.mxu0
    %v3702 = vadd.f32 0.0, %v3701
    %v3703 = vpop.f32.mrf.mxu0
    %v3704 = vadd.f32 0.0, %v3703
    %3705 = vdwg.mxu0
    %3706 = vmatprep.subr.mxu0 %v987
    %3707 = vmatpush1.msra.mxu0 %v986
    %3708 = vmatprep.subr.mxu0 %v979
    %3709 = vmatpush1.msra.mxu0 %v978
    %3710 = vmatprep.subr.mxu0 %v971
    %3711 = vmatpush1.msra.mxu0 %v970
    %3712 = vmatprep.subr.mxu0 %v963
    %3713 = vmatpush1.msra.mxu0 %v962
    %3714 = vmatprep.subr.mxu0 %v955
    %3715 = vmatpush1.msra.mxu0 %v954
    %3716 = vmatprep.subr.mxu0 %v947
    %3717 = vmatpush1.msra.mxu0 %v946
    %3718 = vmatprep.subr.mxu0 %v939
    %3719 = vmatpush1.msra.mxu0 %v938
    %3720 = vmatprep.subr.mxu0 %v931
    %3721 = vmatpush1.msra.mxu0 %v930
    %3722 = vmatprep.subr.mxu0 %v923
    %3723 = vmatpush1.msra.mxu0 %v922
    %3724 = vmatprep.subr.mxu0 %v915
    %3725 = vmatpush1.msra.mxu0 %v914
    %3726 = vmatprep.subr.mxu0 %v907
    %3727 = vmatpush1.msra.mxu0 %v906
    %3728 = vmatprep.subr.mxu0 %v899
    %3729 = vmatpush1.msra.mxu0 %v898
    %3730 = vmatprep.subr.mxu0 %v891
    %3731 = vmatpush1.msra.mxu0 %v890
    %3732 = vmatprep.subr.mxu0 %v883
    %3733 = vmatpush1.msra.mxu0 %v882
    %3734 = vmatprep.subr.mxu0 %v875
    %3735 = vmatpush1.msra.mxu0 %v874
    %3736 = vmatprep.subr.mxu0 %v867
    %3737 = vmatpush1.msra.mxu0 %v866
    %3738 = vmatprep.subr.mxu0 %v1115
    %3739 = vmatpush2.msra.mxu0 %v1114
    %3740 = vmatprep.subr.mxu0 %v1107
    %3741 = vmatpush2.msra.mxu0 %v1106
    %3742 = vmatprep.subr.mxu0 %v1099
    %3743 = vmatpush2.msra.mxu0 %v1098
    %3744 = vmatprep.subr.mxu0 %v1091
    %3745 = vmatpush2.msra.mxu0 %v1090
    %3746 = vmatprep.subr.mxu0 %v1083
    %3747 = vmatpush2.msra.mxu0 %v1082
    %3748 = vmatprep.subr.mxu0 %v1075
    %3749 = vmatpush2.msra.mxu0 %v1074
    %3750 = vmatprep.subr.mxu0 %v1067
    %3751 = vmatpush2.msra.mxu0 %v1066
    %3752 = vmatprep.subr.mxu0 %v1059
    %3753 = vmatpush2.msra.mxu0 %v1058
    %3754 = vmatprep.subr.mxu0 %v1051
    %3755 = vmatpush2.msra.mxu0 %v1050
    %3756 = vmatprep.subr.mxu0 %v1043
    %3757 = vmatpush2.msra.mxu0 %v1042
    %3758 = vmatprep.subr.mxu0 %v1035
    %3759 = vmatpush2.msra.mxu0 %v1034
    %3760 = vmatprep.subr.mxu0 %v1027
    %3761 = vmatpush2.msra.mxu0 %v1026
    %3762 = vmatprep.subr.mxu0 %v1019
    %3763 = vmatpush2.msra.mxu0 %v1018
    %3764 = vmatprep.subr.mxu0 %v1011
    %3765 = vmatpush2.msra.mxu0 %v1010
    %3766 = vmatprep.subr.mxu0 %v1003
    %3767 = vmatpush2.msra.mxu0 %v1002
    %3768 = vmatprep.subr.mxu0 %v995
    %3769 = vmatpush2.msra.mxu0 %v994
    %3770 = vmatprep.mubr.f32.mxu0 %v3488
    %3771 = vmatmul.mubr.f32.gmra.mxu0 %v3486
    %v3772 = vpop.f32.mrf.mxu0
    %v3773 = vadd.f32 0.0, %v3772
    %v3774 = vpop.f32.mrf.mxu0
    %v3775 = vadd.f32 0.0, %v3774
    %3776 = vdwg.mxu0
    %s3777 = smul.addr %s1415, 8
    %s3778 = scalar_lea.vmem [#allocation2], %s3777
    %v3779 = vld [vmem:[%s3778] sm:$0xff]
    %v3780 = vld [vmem:[%s3778 + $0x8] sm:$0xff]
    %v3781 = vld [vmem:[%s3778 + $0x10] sm:$0xff]
    %v3782 = vld [vmem:[%s3778 + $0x18] sm:$0xff]
    %v3783 = vadd.f32 %v3560, %v3779
    %v3784 = vadd.f32 %v3562, %v3780
    %v3785 = vadd.f32 %v3631, %v3781
    %v3786 = vadd.f32 %v3633, %v3782
    %s3787 = smul.addr %s1404, 8
    %s3788 = scalar_lea.vmem [#allocation3], %s3787
    %v3789 = vld [vmem:[%s3788] sm:$0xff]
    %v3790 = vld [vmem:[%s3788 + $0x8] sm:$0xff]
    %v3791 = vld [vmem:[%s3788 + $0x10] sm:$0xff]
    %v3792 = vld [vmem:[%s3788 + $0x18] sm:$0xff]
    %v3793 = vadd.f32 %v3702, %v3789
    %v3794 = vadd.f32 %v3704, %v3790
    %v3795 = vadd.f32 %v3773, %v3791
    %v3796 = vadd.f32 %v3775, %v3792
    %v3797 = vtanh.pop %v3783
    %v3798 = vtanh.pop %v3784
    %v3799 = vtanh.pop %v3785
    %v3800 = vtanh.pop %v3786
    %v3801 = vtanh.pop %v3793
    %v3802 = vtanh.pop %v3794
    %v3803 = vtanh.pop %v3795
    %v3804 = vtanh.pop %v3796
    %v3805 = vmul.f32 %v3797, 0.5
    %v3806 = vadd.f32 %v3805, 0.5
    %v3807 = vmul.f32 %v3798, 0.5
    %v3808 = vadd.f32 %v3807, 0.5
    %v3809 = vmul.f32 %v3800, 0.5
    %v3810 = vadd.f32 %v3809, 0.5
    %v3811 = vmul.f32 %v3801, 0.5
    %v3812 = vadd.f32 %v3811, 0.5
    %v3813 = vmul.f32 %v3802, 0.5
    %v3814 = vadd.f32 %v3813, 0.5
    %v3815 = vmul.f32 %v3804, 0.5
    %v3816 = vadd.f32 %v3815, 0.5
    %v3817 = vmul.f32 %v3808, %v3481
    %v3818 = vmul.f32 %v3806, %v3799
    %v3819 = vadd.f32 %v3817, %v3818
    %v3820 = vmul.f32 %v3814, %v3484
    %v3821 = vmul.f32 %v3812, %v3803
    %v3822 = vadd.f32 %v3820, %v3821
    %v3823 = vtanh.pop %v3819
    %v3824 = vmul.f32 %v3810, %v3823
    %v3825 = vtanh.pop %v3822
    %v3826 = vmul.f32 %v3816, %v3825
    %s3827 = scalar_lea.vmem [#allocation18], 56
    %3828 = vst [vmem:[%s3827] sm:$0xff] %v3824
    %3829 = vst [vmem:[#allocation19] sm:$0xff] %v3826
    %3830 = vst [vmem:[#allocation4] sm:$0xff] %v3824
    %3831 = vst [vmem:[#allocation4 + $0x8] sm:$0xff] %v3826
    %3832 = vst [vmem:[#allocation5] sm:$0xff] %v3819
    %3833 = vst [vmem:[#allocation5 + $0x8] sm:$0xff] %v3822
    // Predicated region
    $region70: #{tpu_custom_call.1} parent=1 // pred_check
      %p3834 = pneg %p142
    $region71: #{tpu_custom_call.1} parent=1 // pred_check_branch
      %3836 = sbr.rel (%p3834) target = $region73
    $region72: #{tpu_custom_call.1} parent=1 // pred_region
      %v3837 = vld [vmem:[#allocation4] sm:$0xff]
      %3838 = vst [vmem:[#allocation21] sm:$0xff] %v3837
      %v3839 = vld [vmem:[#allocation4 + $0x8] sm:$0xff]
      %s3840 = scalar_lea.vmem [#allocation21], 8
      %3841 = vst [vmem:[%s3840] sm:$0xff] %v3839
      %v3842 = vld [vmem:[#allocation5] sm:$0xff]
      %3843 = vst [vmem:[#allocation22] sm:$0xff] %v3842
      %v3844 = vld [vmem:[#allocation5 + $0x8] sm:$0xff]
      %s3845 = scalar_lea.vmem [#allocation22], 8
      %3846 = vst [vmem:[%s3845] sm:$0xff] %v3844
    $region73: #{tpu_custom_call.1} parent=1 // pred_fallthru
      _
    // Predicated region
    $region74: #{tpu_custom_call.1} parent=1 // pred_check
      _
    $region75: #{tpu_custom_call.1} parent=1 // pred_check_branch
      %3848 = sbr.rel (0) target = $region77
    $region76: #{tpu_custom_call.1} parent=1 // pred_region
      %s3850 = ssub.s32 1024, 1024
      %3851 = vsyncadd [#allocation8], %s3850
      %s3852 = sshll.u32 [#allocation18], 4
      %s3853 = int_to_ptr.vmem [resolvable:$true] %s3852
      %3858 = dma.vmem_to_hbm [thread:$0]  %s3853, 1024, %s9, [#allocation8], 128, 128, 8
    $region77: #{tpu_custom_call.1} parent=1 // pred_fallthru
      _
    // Predicated region
    $region78: #{tpu_custom_call.1} parent=1 // pred_check
      _
    $region79: #{tpu_custom_call.1} parent=1 // pred_check_branch
      %3860 = sbr.rel (0) target = $region81
    $region80: #{tpu_custom_call.1} parent=1 // pred_region
      %s3861 = ssub.s32 0, 0
      %s3862 = smul.u32 8, %s3861
      %s3864 = ssub.s32 1024, 1024
      %3865 = vsyncadd [#allocation20], %s3864
      %s3866 = smul.addr %s3862, 128
      %s3867 = scalar_lea.hbm %s10, %s3866
      %s3868 = sshll.u32 [#allocation19], 4
      %s3869 = int_to_ptr.vmem [resolvable:$true] %s3868
      %3874 = dma.vmem_to_hbm [thread:$0]  %s3869, 1024, %s3867, [#allocation20], 128, 128, 8
    $region81: #{tpu_custom_call.1} parent=1 // pred_fallthru
      _
    // Predicated region
    $region82: #{tpu_custom_call.1} parent=1 // pred_check
      _
    $region83: #{tpu_custom_call.1} parent=1 // pred_check_branch
      %3876 = sbr.rel (0) target = $region85
    $region84: #{tpu_custom_call.1} parent=1 // pred_region
      %s3878 = ssub.s32 256, 256
      %3879 = vsyncadd [#allocation20], %s3878
      %s3880 = sshll.u32 [#allocation21], 4
      %s3881 = int_to_ptr.vmem [resolvable:$true] %s3880
      %3886 = dma.vmem_to_hbm [thread:$0]  %s3881, 256, %s11, [#allocation20], 128, 128, 8
    $region85: #{tpu_custom_call.1} parent=1 // pred_fallthru
      _
    // Predicated region
    $region86: #{tpu_custom_call.1} parent=1 // pred_check
      _
    $region87: #{tpu_custom_call.1} parent=1 // pred_check_branch
      %3888 = sbr.rel (0) target = $region89
    $region88: #{tpu_custom_call.1} parent=1 // pred_region
      %s3890 = ssub.s32 256, 256
      %3891 = vsyncadd [#allocation23], %s3890
      %s3892 = sshll.u32 [#allocation22], 4
      %s3893 = int_to_ptr.vmem [resolvable:$true] %s3892
      %3898 = dma.vmem_to_hbm [thread:$0]  %s3893, 256, %s12, [#allocation23], 128, 128, 8
    $region89: #{tpu_custom_call.1} parent=1 // pred_fallthru
      _
    // Predicated region
    $region90: #{tpu_custom_call.1} parent=1 // pred_check
      _
    $region91: #{tpu_custom_call.1} parent=1 // pred_check_branch
      %3900 = sbr.rel (0) target = $region93
    $region92: #{tpu_custom_call.1} parent=1 // pred_region
      %3901 = dma.done [#allocation8], 1024
    $region93: #{tpu_custom_call.1} parent=1 // pred_fallthru
      _
    // Predicated region
    $region94: #{tpu_custom_call.1} parent=1 // pred_check
      _
    $region95: #{tpu_custom_call.1} parent=1 // pred_check_branch
      %3903 = sbr.rel (0) target = $region97
    $region96: #{tpu_custom_call.1} parent=1 // pred_region
      %3904 = dma.done [#allocation20], 1024
    $region97: #{tpu_custom_call.1} parent=1 // pred_fallthru
      _
    // Predicated region
    $region98: #{tpu_custom_call.1} parent=1 // pred_check
      _
    $region99: #{tpu_custom_call.1} parent=1 // pred_check_branch
      %3906 = sbr.rel (0) target = $region101
    $region100: #{tpu_custom_call.1} parent=1 // pred_region
      %3907 = dma.done [#allocation20], 256
    $region101: #{tpu_custom_call.1} parent=1 // pred_fallthru
      _
    // Predicated region
    $region102: #{tpu_custom_call.1} parent=1 // pred_check
      _
    $region103: #{tpu_custom_call.1} parent=1 // pred_check_branch
      %3909 = sbr.rel (0) target = $region105
    $region104: #{tpu_custom_call.1} parent=1 // pred_region
      %3910 = dma.done [#allocation23], 256
    $region105: #{tpu_custom_call.1} parent=1 // pred_fallthru
      _
    %3911 = vsyncpa [#allocation7], 1
    %3912 = vsyncpa [#allocation10], 1
    %3913 = vsyncpa [#allocation13], 1
    %3914 = vsyncpa [#allocation16], 1
    %3915 = vsyncpa [#allocation8], 1
    %3916 = vsyncpa [#allocation20], 1
    %3917 = vsyncpa [#allocation23], 1

</llo_original>
